<compile_context>
chip_gen: v7x
topology: tpu7x:2x2x1
jax: 0.10.0
libtpu: 0.0.40
codegen_flags: <defaults>
</compile_context>

<pallas_src>
import functools

import jax
import jax.numpy as jnp
from jax import lax
from jax.experimental import pallas as pl
from jax.experimental.pallas import tpu as pltpu

KSIZE = 7
PAD = 3        # "same" padding for kernel_size=7
C_CHUNK = 8    # channels processed per pass (bounds vreg live ranges)
N_ACC = 4      # independent conv accumulators (breaks the serial VALU chain)


def spatial_attention_kernel(w_ref, x_ref, o_ref, pad_ref, gate_ref, *, C, H, W):
    """One batch element per grid step.

    w_ref:    (2*KSIZE*KSIZE,) f32 in SMEM  (conv weights, scalar reads)
    x_ref:    (1, C, H*W)  input block, lane-dense
    o_ref:    (1, C, H*W)  output block, lane-dense
    pad_ref:  (2, H+2*PAD, W+2*PAD) f32 VMEM scratch (zero-padded avg/max maps)
    gate_ref: (1, H*W) f32 VMEM scratch (sigmoid gate in the flat layout)
    """
    HW = H * W

    # ---- 1. fused channel sum + max, chunked over C (lane-dense reads) ----
    c_first = min(C_CHUNK, C)
    x0 = x_ref[0, 0:c_first, :].astype(jnp.float32)            # (c_first, HW)
    s = jnp.sum(x0, axis=0, keepdims=True)                     # (1, HW)
    m = jnp.max(x0, axis=0, keepdims=True)                     # (1, HW)
    for c0 in range(C_CHUNK, C, C_CHUNK):
        cs = min(C_CHUNK, C - c0)
        xc = x_ref[0, c0:c0 + cs, :].astype(jnp.float32)
        s = s + jnp.sum(xc, axis=0, keepdims=True)
        m = jnp.maximum(m, jnp.max(xc, axis=0, keepdims=True))
    avg = s * (1.0 / C)                                        # (1, HW)

    # ---- 2. write avg/max into the zero-padded 2-D scratch (row by row) ---
    pad_ref[...] = jnp.zeros_like(pad_ref)
    for i in range(H):
        pad_ref[0, PAD + i:PAD + i + 1, PAD:PAD + W] = avg[:, i * W:(i + 1) * W]
        pad_ref[1, PAD + i:PAD + i + 1, PAD:PAD + W] = m[:, i * W:(i + 1) * W]

    # ---- 3. 7x7 conv: 98 shifted MACs, scalar weights from SMEM, ----------
    # ----    round-robin over 4 accumulators to expose VALU parallelism ----
    accs = [jnp.zeros((H, W), jnp.float32) for _ in range(N_ACC)]
    t = 0
    for c in range(2):
        base = c * KSIZE * KSIZE
        for di in range(KSIZE):
            for dj in range(KSIZE):
                wv = w_ref[base + di * KSIZE + dj]             # SMEM scalar
                tap = pad_ref[c, di:di + H, dj:dj + W]         # (H, W) static view
                accs[t % N_ACC] = accs[t % N_ACC] + tap * wv
                t += 1
    conv = (accs[0] + accs[1]) + (accs[2] + accs[3])
    gate2d = jax.nn.sigmoid(conv)                              # (H, W)

    # ---- 4. relayout gate (H, W) -> (1, H*W) through a tiny VMEM scratch ---
    for i in range(H):
        gate_ref[:, i * W:(i + 1) * W] = gate2d[i:i + 1, :]
    gate = gate_ref[...]                                       # (1, HW)

    # ---- 5. gating multiply + lane-dense store, chunked over C -------------
    for c0 in range(0, C, C_CHUNK):
        cs = min(C_CHUNK, C - c0)
        xc = x_ref[0, c0:c0 + cs, :].astype(jnp.float32)
        o_ref[0, c0:c0 + cs, :] = (xc * gate).astype(o_ref.dtype)


@jax.jit
def spatial_attention(x, w):
    """x: (B, C, H, W) float32; w: (1, 2, 7, 7) conv weight (PyTorch OIHW)."""
    B, C, H, W = x.shape
    HW = H * W
    x_flat = x.reshape(B, C, HW)            # lane-dense view of the heavy traffic
    w_flat = w.reshape(2 * KSIZE * KSIZE)   # (98,) scalars -> SMEM

    kernel = functools.partial(spatial_attention_kernel, C=C, H=H, W=W)

    out_flat = pl.pallas_call(
        kernel,
        out_shape=jax.ShapeDtypeStruct((B, C, HW), x.dtype),
        grid_spec=pltpu.PrefetchScalarGridSpec(
            num_scalar_prefetch=0,
            grid=(B,),
            in_specs=[
                pl.BlockSpec(memory_space=pltpu.MemorySpace.SMEM),   # weights
                pl.BlockSpec((1, C, HW), lambda b: (b, 0, 0)),       # x (lane-dense)
            ],
            out_specs=pl.BlockSpec((1, C, HW), lambda b: (b, 0, 0)),
            scratch_shapes=[
                pltpu.VMEM((2, H + 2 * PAD, W + 2 * PAD), jnp.float32),
                pltpu.VMEM((1, HW), jnp.float32),
            ],
        ),
        compiler_params=pltpu.CompilerParams(
            dimension_semantics=("parallel",)),
    )(w_flat, x_flat)

    return out_flat.reshape(B, C, H, W)


def spatial_attention_ref(x, w):
    """Pure-JAX reference matching the PyTorch module."""
    avg_out = jnp.mean(x, axis=1, keepdims=True)
    max_out = jnp.max(x, axis=1, keepdims=True)
    cat = jnp.concatenate([avg_out, max_out], axis=1)  # (B, 2, H, W)
    conv = lax.conv_general_dilated(
        cat, w, window_strides=(1, 1), padding=((PAD, PAD), (PAD, PAD)),
        dimension_numbers=("NCHW", "OIHW", "NCHW"))
    return x * jax.nn.sigmoid(conv)


if __name__ == "__main__":
    key = jax.random.PRNGKey(0)
    kx, kw = jax.random.split(key)

    B, C, H, W = 2, 4, 16, 16
    x = jax.random.normal(kx, (B, C, H, W), dtype=jnp.float32)
    # Deterministic conv weight, same shape/init-style scale as nn.Conv2d(2,1,7).
    fan_in = 2 * KSIZE * KSIZE
    bound = 1.0 / (fan_in ** 0.5)
    w = jax.random.uniform(kw, (1, 2, KSIZE, KSIZE),
                           minval=-bound, maxval=bound, dtype=jnp.float32)

    out = spatial_attention(x, w)
    out = jax.block_until_ready(out)

    ref = spatial_attention_ref(x, w)
    assert out.shape == (B, C, H, W)
    assert jnp.allclose(out, ref, atol=1e-5, rtol=1e-5), "mismatch vs reference"

    print("KERNEL_OK")
</pallas_src>

<mosaic_0001>
module attributes {stable_mosaic.version = 11 : i64} {
  func.func @spatial_attention_kernel(%arg0: i32, %arg1: memref<98xf32, #tpu.memory_space<smem>>, %arg2: memref<1x4x256xf32, #tpu.memory_space<vmem>>, %arg3: memref<1x4x256xf32, #tpu.memory_space<vmem>>, %arg4: memref<2x22x22xf32, #tpu.memory_space<vmem>>, %arg5: memref<1x256xf32, #tpu.memory_space<vmem>>) attributes {dimension_semantics = [#tpu.dimension_semantics<parallel>], iteration_bounds = array<i64: 2>, scalar_prefetch = 0 : i64, scratch_operands = 2 : i64, tpu.core_type = #tpu.core_type<tc>, window_params = [{transform_indices = @transform_0, window_bounds = array<i64: 98>}, {transform_indices = @transform_1, window_bounds = array<i64: 1, 4, 256>}, {transform_indices = @transform_2, window_bounds = array<i64: 1, 4, 256>}]} {
    %c0 = arith.constant 0 : index
    %c0_0 = arith.constant 0 : index
    %c0_1 = arith.constant 0 : index
    %0 = vector.load %arg2[%c0, %c0_0, %c0_1] : memref<1x4x256xf32, #tpu.memory_space<vmem>>, vector<1x4x256xf32>
    %1 = vector.shape_cast %0 : vector<1x4x256xf32> to vector<4x256xf32>
    %cst = arith.constant dense<0.000000e+00> : vector<256xf32>
    %2 = vector.multi_reduction <add>, %1, %cst [0] : vector<4x256xf32> to vector<256xf32>
    %3 = vector.shape_cast %2 : vector<256xf32> to vector<1x256xf32>
    %cst_2 = arith.constant dense<0xFF800000> : vector<256xf32>
    %4 = vector.multi_reduction <maximumf>, %1, %cst_2 [0] : vector<4x256xf32> to vector<256xf32>
    %5 = vector.shape_cast %4 : vector<256xf32> to vector<1x256xf32>
    %cst_3 = arith.constant 2.500000e-01 : f32
    %6 = vector.broadcast %cst_3 : f32 to vector<1x256xf32>
    %7 = arith.mulf %3, %6 : vector<1x256xf32>
    %cst_4 = arith.constant 0.000000e+00 : f32
    %8 = vector.broadcast %cst_4 : f32 to vector<2x22x22xf32>
    %c0_5 = arith.constant 0 : index
    %c0_6 = arith.constant 0 : index
    %c0_7 = arith.constant 0 : index
    %9 = vector.load %arg4[%c0_5, %c0_6, %c0_7] : memref<2x22x22xf32, #tpu.memory_space<vmem>>, vector<2x22x22xf32>
    tpu.vector_store %arg4[%c0_5, %c0_6, %c0_7], %8 {strides = array<i32>} : memref<2x22x22xf32, #tpu.memory_space<vmem>>, vector<2x22x22xf32>,
    %10 = vector.extract_strided_slice %7 {offsets = [0, 0], sizes = [1, 16], strides = [1, 1]} : vector<1x256xf32> to vector<1x16xf32>
    %c0_8 = arith.constant 0 : index
    %c3 = arith.constant 3 : index
    %c3_9 = arith.constant 3 : index
    %11 = vector.load %arg4[%c0_8, %c3, %c3_9] : memref<2x22x22xf32, #tpu.memory_space<vmem>>, vector<1x1x16xf32>
    %12 = vector.shape_cast %11 : vector<1x1x16xf32> to vector<1x16xf32>
    %13 = vector.shape_cast %10 : vector<1x16xf32> to vector<1x1x16xf32>
    tpu.vector_store %arg4[%c0_8, %c3, %c3_9], %13 {strides = array<i32>} : memref<2x22x22xf32, #tpu.memory_space<vmem>>, vector<1x1x16xf32>,
    %14 = vector.extract_strided_slice %5 {offsets = [0, 0], sizes = [1, 16], strides = [1, 1]} : vector<1x256xf32> to vector<1x16xf32>
    %c1 = arith.constant 1 : index
    %c3_10 = arith.constant 3 : index
    %c3_11 = arith.constant 3 : index
    %15 = vector.load %arg4[%c1, %c3_10, %c3_11] : memref<2x22x22xf32, #tpu.memory_space<vmem>>, vector<1x1x16xf32>
    %16 = vector.shape_cast %15 : vector<1x1x16xf32> to vector<1x16xf32>
    %17 = vector.shape_cast %14 : vector<1x16xf32> to vector<1x1x16xf32>
    tpu.vector_store %arg4[%c1, %c3_10, %c3_11], %17 {strides = array<i32>} : memref<2x22x22xf32, #tpu.memory_space<vmem>>, vector<1x1x16xf32>,
    %18 = vector.extract_strided_slice %7 {offsets = [0, 16], sizes = [1, 16], strides = [1, 1]} : vector<1x256xf32> to vector<1x16xf32>
    %c0_12 = arith.constant 0 : index
    %c4 = arith.constant 4 : index
    %c3_13 = arith.constant 3 : index
    %19 = vector.load %arg4[%c0_12, %c4, %c3_13] : memref<2x22x22xf32, #tpu.memory_space<vmem>>, vector<1x1x16xf32>
    %20 = vector.shape_cast %19 : vector<1x1x16xf32> to vector<1x16xf32>
    %21 = vector.shape_cast %18 : vector<1x16xf32> to vector<1x1x16xf32>
    tpu.vector_store %arg4[%c0_12, %c4, %c3_13], %21 {strides = array<i32>} : memref<2x22x22xf32, #tpu.memory_space<vmem>>, vector<1x1x16xf32>,
    %22 = vector.extract_strided_slice %5 {offsets = [0, 16], sizes = [1, 16], strides = [1, 1]} : vector<1x256xf32> to vector<1x16xf32>
    %c1_14 = arith.constant 1 : index
    %c4_15 = arith.constant 4 : index
    %c3_16 = arith.constant 3 : index
    %23 = vector.load %arg4[%c1_14, %c4_15, %c3_16] : memref<2x22x22xf32, #tpu.memory_space<vmem>>, vector<1x1x16xf32>
    %24 = vector.shape_cast %23 : vector<1x1x16xf32> to vector<1x16xf32>
    %25 = vector.shape_cast %22 : vector<1x16xf32> to vector<1x1x16xf32>
    tpu.vector_store %arg4[%c1_14, %c4_15, %c3_16], %25 {strides = array<i32>} : memref<2x22x22xf32, #tpu.memory_space<vmem>>, vector<1x1x16xf32>,
    %26 = vector.extract_strided_slice %7 {offsets = [0, 32], sizes = [1, 16], strides = [1, 1]} : vector<1x256xf32> to vector<1x16xf32>
    %c0_17 = arith.constant 0 : index
    %c5 = arith.constant 5 : index
    %c3_18 = arith.constant 3 : index
    %27 = vector.load %arg4[%c0_17, %c5, %c3_18] : memref<2x22x22xf32, #tpu.memory_space<vmem>>, vector<1x1x16xf32>
    %28 = vector.shape_cast %27 : vector<1x1x16xf32> to vector<1x16xf32>
    %29 = vector.shape_cast %26 : vector<1x16xf32> to vector<1x1x16xf32>
    tpu.vector_store %arg4[%c0_17, %c5, %c3_18], %29 {strides = array<i32>} : memref<2x22x22xf32, #tpu.memory_space<vmem>>, vector<1x1x16xf32>,
    %30 = vector.extract_strided_slice %5 {offsets = [0, 32], sizes = [1, 16], strides = [1, 1]} : vector<1x256xf32> to vector<1x16xf32>
    %c1_19 = arith.constant 1 : index
    %c5_20 = arith.constant 5 : index
    %c3_21 = arith.constant 3 : index
    %31 = vector.load %arg4[%c1_19, %c5_20, %c3_21] : memref<2x22x22xf32, #tpu.memory_space<vmem>>, vector<1x1x16xf32>
    %32 = vector.shape_cast %31 : vector<1x1x16xf32> to vector<1x16xf32>
    %33 = vector.shape_cast %30 : vector<1x16xf32> to vector<1x1x16xf32>
    tpu.vector_store %arg4[%c1_19, %c5_20, %c3_21], %33 {strides = array<i32>} : memref<2x22x22xf32, #tpu.memory_space<vmem>>, vector<1x1x16xf32>,
    %34 = vector.extract_strided_slice %7 {offsets = [0, 48], sizes = [1, 16], strides = [1, 1]} : vector<1x256xf32> to vector<1x16xf32>
    %c0_22 = arith.constant 0 : index
    %c6 = arith.constant 6 : index
    %c3_23 = arith.constant 3 : index
    %35 = vector.load %arg4[%c0_22, %c6, %c3_23] : memref<2x22x22xf32, #tpu.memory_space<vmem>>, vector<1x1x16xf32>
    %36 = vector.shape_cast %35 : vector<1x1x16xf32> to vector<1x16xf32>
    %37 = vector.shape_cast %34 : vector<1x16xf32> to vector<1x1x16xf32>
    tpu.vector_store %arg4[%c0_22, %c6, %c3_23], %37 {strides = array<i32>} : memref<2x22x22xf32, #tpu.memory_space<vmem>>, vector<1x1x16xf32>,
    %38 = vector.extract_strided_slice %5 {offsets = [0, 48], sizes = [1, 16], strides = [1, 1]} : vector<1x256xf32> to vector<1x16xf32>
    %c1_24 = arith.constant 1 : index
    %c6_25 = arith.constant 6 : index
    %c3_26 = arith.constant 3 : index
    %39 = vector.load %arg4[%c1_24, %c6_25, %c3_26] : memref<2x22x22xf32, #tpu.memory_space<vmem>>, vector<1x1x16xf32>
    %40 = vector.shape_cast %39 : vector<1x1x16xf32> to vector<1x16xf32>
    %41 = vector.shape_cast %38 : vector<1x16xf32> to vector<1x1x16xf32>
    tpu.vector_store %arg4[%c1_24, %c6_25, %c3_26], %41 {strides = array<i32>} : memref<2x22x22xf32, #tpu.memory_space<vmem>>, vector<1x1x16xf32>,
    %42 = vector.extract_strided_slice %7 {offsets = [0, 64], sizes = [1, 16], strides = [1, 1]} : vector<1x256xf32> to vector<1x16xf32>
    %c0_27 = arith.constant 0 : index
    %c7 = arith.constant 7 : index
    %c3_28 = arith.constant 3 : index
    %43 = vector.load %arg4[%c0_27, %c7, %c3_28] : memref<2x22x22xf32, #tpu.memory_space<vmem>>, vector<1x1x16xf32>
    %44 = vector.shape_cast %43 : vector<1x1x16xf32> to vector<1x16xf32>
    %45 = vector.shape_cast %42 : vector<1x16xf32> to vector<1x1x16xf32>
    tpu.vector_store %arg4[%c0_27, %c7, %c3_28], %45 {strides = array<i32>} : memref<2x22x22xf32, #tpu.memory_space<vmem>>, vector<1x1x16xf32>,
    %46 = vector.extract_strided_slice %5 {offsets = [0, 64], sizes = [1, 16], strides = [1, 1]} : vector<1x256xf32> to vector<1x16xf32>
    %c1_29 = arith.constant 1 : index
    %c7_30 = arith.constant 7 : index
    %c3_31 = arith.constant 3 : index
    %47 = vector.load %arg4[%c1_29, %c7_30, %c3_31] : memref<2x22x22xf32, #tpu.memory_space<vmem>>, vector<1x1x16xf32>
    %48 = vector.shape_cast %47 : vector<1x1x16xf32> to vector<1x16xf32>
    %49 = vector.shape_cast %46 : vector<1x16xf32> to vector<1x1x16xf32>
    tpu.vector_store %arg4[%c1_29, %c7_30, %c3_31], %49 {strides = array<i32>} : memref<2x22x22xf32, #tpu.memory_space<vmem>>, vector<1x1x16xf32>,
    %50 = vector.extract_strided_slice %7 {offsets = [0, 80], sizes = [1, 16], strides = [1, 1]} : vector<1x256xf32> to vector<1x16xf32>
    %c0_32 = arith.constant 0 : index
    %c8 = arith.constant 8 : index
    %c3_33 = arith.constant 3 : index
    %51 = vector.load %arg4[%c0_32, %c8, %c3_33] : memref<2x22x22xf32, #tpu.memory_space<vmem>>, vector<1x1x16xf32>
    %52 = vector.shape_cast %51 : vector<1x1x16xf32> to vector<1x16xf32>
    %53 = vector.shape_cast %50 : vector<1x16xf32> to vector<1x1x16xf32>
    tpu.vector_store %arg4[%c0_32, %c8, %c3_33], %53 {strides = array<i32>} : memref<2x22x22xf32, #tpu.memory_space<vmem>>, vector<1x1x16xf32>,
    %54 = vector.extract_strided_slice %5 {offsets = [0, 80], sizes = [1, 16], strides = [1, 1]} : vector<1x256xf32> to vector<1x16xf32>
    %c1_34 = arith.constant 1 : index
    %c8_35 = arith.constant 8 : index
    %c3_36 = arith.constant 3 : index
    %55 = vector.load %arg4[%c1_34, %c8_35, %c3_36] : memref<2x22x22xf32, #tpu.memory_space<vmem>>, vector<1x1x16xf32>
    %56 = vector.shape_cast %55 : vector<1x1x16xf32> to vector<1x16xf32>
    %57 = vector.shape_cast %54 : vector<1x16xf32> to vector<1x1x16xf32>
    tpu.vector_store %arg4[%c1_34, %c8_35, %c3_36], %57 {strides = array<i32>} : memref<2x22x22xf32, #tpu.memory_space<vmem>>, vector<1x1x16xf32>,
    %58 = vector.extract_strided_slice %7 {offsets = [0, 96], sizes = [1, 16], strides = [1, 1]} : vector<1x256xf32> to vector<1x16xf32>
    %c0_37 = arith.constant 0 : index
    %c9 = arith.constant 9 : index
    %c3_38 = arith.constant 3 : index
    %59 = vector.load %arg4[%c0_37, %c9, %c3_38] : memref<2x22x22xf32, #tpu.memory_space<vmem>>, vector<1x1x16xf32>
    %60 = vector.shape_cast %59 : vector<1x1x16xf32> to vector<1x16xf32>
    %61 = vector.shape_cast %58 : vector<1x16xf32> to vector<1x1x16xf32>
    tpu.vector_store %arg4[%c0_37, %c9, %c3_38], %61 {strides = array<i32>} : memref<2x22x22xf32, #tpu.memory_space<vmem>>, vector<1x1x16xf32>,
    %62 = vector.extract_strided_slice %5 {offsets = [0, 96], sizes = [1, 16], strides = [1, 1]} : vector<1x256xf32> to vector<1x16xf32>
    %c1_39 = arith.constant 1 : index
    %c9_40 = arith.constant 9 : index
    %c3_41 = arith.constant 3 : index
    %63 = vector.load %arg4[%c1_39, %c9_40, %c3_41] : memref<2x22x22xf32, #tpu.memory_space<vmem>>, vector<1x1x16xf32>
    %64 = vector.shape_cast %63 : vector<1x1x16xf32> to vector<1x16xf32>
    %65 = vector.shape_cast %62 : vector<1x16xf32> to vector<1x1x16xf32>
    tpu.vector_store %arg4[%c1_39, %c9_40, %c3_41], %65 {strides = array<i32>} : memref<2x22x22xf32, #tpu.memory_space<vmem>>, vector<1x1x16xf32>,
    %66 = vector.extract_strided_slice %7 {offsets = [0, 112], sizes = [1, 16], strides = [1, 1]} : vector<1x256xf32> to vector<1x16xf32>
    %c0_42 = arith.constant 0 : index
    %c10 = arith.constant 10 : index
    %c3_43 = arith.constant 3 : index
    %67 = vector.load %arg4[%c0_42, %c10, %c3_43] : memref<2x22x22xf32, #tpu.memory_space<vmem>>, vector<1x1x16xf32>
    %68 = vector.shape_cast %67 : vector<1x1x16xf32> to vector<1x16xf32>
    %69 = vector.shape_cast %66 : vector<1x16xf32> to vector<1x1x16xf32>
    tpu.vector_store %arg4[%c0_42, %c10, %c3_43], %69 {strides = array<i32>} : memref<2x22x22xf32, #tpu.memory_space<vmem>>, vector<1x1x16xf32>,
    %70 = vector.extract_strided_slice %5 {offsets = [0, 112], sizes = [1, 16], strides = [1, 1]} : vector<1x256xf32> to vector<1x16xf32>
    %c1_44 = arith.constant 1 : index
    %c10_45 = arith.constant 10 : index
    %c3_46 = arith.constant 3 : index
    %71 = vector.load %arg4[%c1_44, %c10_45, %c3_46] : memref<2x22x22xf32, #tpu.memory_space<vmem>>, vector<1x1x16xf32>
    %72 = vector.shape_cast %71 : vector<1x1x16xf32> to vector<1x16xf32>
    %73 = vector.shape_cast %70 : vector<1x16xf32> to vector<1x1x16xf32>
    tpu.vector_store %arg4[%c1_44, %c10_45, %c3_46], %73 {strides = array<i32>} : memref<2x22x22xf32, #tpu.memory_space<vmem>>, vector<1x1x16xf32>,
    %74 = vector.extract_strided_slice %7 {offsets = [0, 128], sizes = [1, 16], strides = [1, 1]} : vector<1x256xf32> to vector<1x16xf32>
    %c0_47 = arith.constant 0 : index
    %c11 = arith.constant 11 : index
    %c3_48 = arith.constant 3 : index
    %75 = vector.load %arg4[%c0_47, %c11, %c3_48] : memref<2x22x22xf32, #tpu.memory_space<vmem>>, vector<1x1x16xf32>
    %76 = vector.shape_cast %75 : vector<1x1x16xf32> to vector<1x16xf32>
    %77 = vector.shape_cast %74 : vector<1x16xf32> to vector<1x1x16xf32>
    tpu.vector_store %arg4[%c0_47, %c11, %c3_48], %77 {strides = array<i32>} : memref<2x22x22xf32, #tpu.memory_space<vmem>>, vector<1x1x16xf32>,
    %78 = vector.extract_strided_slice %5 {offsets = [0, 128], sizes = [1, 16], strides = [1, 1]} : vector<1x256xf32> to vector<1x16xf32>
    %c1_49 = arith.constant 1 : index
    %c11_50 = arith.constant 11 : index
    %c3_51 = arith.constant 3 : index
    %79 = vector.load %arg4[%c1_49, %c11_50, %c3_51] : memref<2x22x22xf32, #tpu.memory_space<vmem>>, vector<1x1x16xf32>
    %80 = vector.shape_cast %79 : vector<1x1x16xf32> to vector<1x16xf32>
    %81 = vector.shape_cast %78 : vector<1x16xf32> to vector<1x1x16xf32>
    tpu.vector_store %arg4[%c1_49, %c11_50, %c3_51], %81 {strides = array<i32>} : memref<2x22x22xf32, #tpu.memory_space<vmem>>, vector<1x1x16xf32>,
    %82 = vector.extract_strided_slice %7 {offsets = [0, 144], sizes = [1, 16], strides = [1, 1]} : vector<1x256xf32> to vector<1x16xf32>
    %c0_52 = arith.constant 0 : index
    %c12 = arith.constant 12 : index
    %c3_53 = arith.constant 3 : index
    %83 = vector.load %arg4[%c0_52, %c12, %c3_53] : memref<2x22x22xf32, #tpu.memory_space<vmem>>, vector<1x1x16xf32>
    %84 = vector.shape_cast %83 : vector<1x1x16xf32> to vector<1x16xf32>
    %85 = vector.shape_cast %82 : vector<1x16xf32> to vector<1x1x16xf32>
    tpu.vector_store %arg4[%c0_52, %c12, %c3_53], %85 {strides = array<i32>} : memref<2x22x22xf32, #tpu.memory_space<vmem>>, vector<1x1x16xf32>,
    %86 = vector.extract_strided_slice %5 {offsets = [0, 144], sizes = [1, 16], strides = [1, 1]} : vector<1x256xf32> to vector<1x16xf32>
    %c1_54 = arith.constant 1 : index
    %c12_55 = arith.constant 12 : index
    %c3_56 = arith.constant 3 : index
    %87 = vector.load %arg4[%c1_54, %c12_55, %c3_56] : memref<2x22x22xf32, #tpu.memory_space<vmem>>, vector<1x1x16xf32>
    %88 = vector.shape_cast %87 : vector<1x1x16xf32> to vector<1x16xf32>
    %89 = vector.shape_cast %86 : vector<1x16xf32> to vector<1x1x16xf32>
    tpu.vector_store %arg4[%c1_54, %c12_55, %c3_56], %89 {strides = array<i32>} : memref<2x22x22xf32, #tpu.memory_space<vmem>>, vector<1x1x16xf32>,
    %90 = vector.extract_strided_slice %7 {offsets = [0, 160], sizes = [1, 16], strides = [1, 1]} : vector<1x256xf32> to vector<1x16xf32>
    %c0_57 = arith.constant 0 : index
    %c13 = arith.constant 13 : index
    %c3_58 = arith.constant 3 : index
    %91 = vector.load %arg4[%c0_57, %c13, %c3_58] : memref<2x22x22xf32, #tpu.memory_space<vmem>>, vector<1x1x16xf32>
    %92 = vector.shape_cast %91 : vector<1x1x16xf32> to vector<1x16xf32>
    %93 = vector.shape_cast %90 : vector<1x16xf32> to vector<1x1x16xf32>
    tpu.vector_store %arg4[%c0_57, %c13, %c3_58], %93 {strides = array<i32>} : memref<2x22x22xf32, #tpu.memory_space<vmem>>, vector<1x1x16xf32>,
    %94 = vector.extract_strided_slice %5 {offsets = [0, 160], sizes = [1, 16], strides = [1, 1]} : vector<1x256xf32> to vector<1x16xf32>
    %c1_59 = arith.constant 1 : index
    %c13_60 = arith.constant 13 : index
    %c3_61 = arith.constant 3 : index
    %95 = vector.load %arg4[%c1_59, %c13_60, %c3_61] : memref<2x22x22xf32, #tpu.memory_space<vmem>>, vector<1x1x16xf32>
    %96 = vector.shape_cast %95 : vector<1x1x16xf32> to vector<1x16xf32>
    %97 = vector.shape_cast %94 : vector<1x16xf32> to vector<1x1x16xf32>
    tpu.vector_store %arg4[%c1_59, %c13_60, %c3_61], %97 {strides = array<i32>} : memref<2x22x22xf32, #tpu.memory_space<vmem>>, vector<1x1x16xf32>,
    %98 = vector.extract_strided_slice %7 {offsets = [0, 176], sizes = [1, 16], strides = [1, 1]} : vector<1x256xf32> to vector<1x16xf32>
    %c0_62 = arith.constant 0 : index
    %c14 = arith.constant 14 : index
    %c3_63 = arith.constant 3 : index
    %99 = vector.load %arg4[%c0_62, %c14, %c3_63] : memref<2x22x22xf32, #tpu.memory_space<vmem>>, vector<1x1x16xf32>
    %100 = vector.shape_cast %99 : vector<1x1x16xf32> to vector<1x16xf32>
    %101 = vector.shape_cast %98 : vector<1x16xf32> to vector<1x1x16xf32>
    tpu.vector_store %arg4[%c0_62, %c14, %c3_63], %101 {strides = array<i32>} : memref<2x22x22xf32, #tpu.memory_space<vmem>>, vector<1x1x16xf32>,
    %102 = vector.extract_strided_slice %5 {offsets = [0, 176], sizes = [1, 16], strides = [1, 1]} : vector<1x256xf32> to vector<1x16xf32>
    %c1_64 = arith.constant 1 : index
    %c14_65 = arith.constant 14 : index
    %c3_66 = arith.constant 3 : index
    %103 = vector.load %arg4[%c1_64, %c14_65, %c3_66] : memref<2x22x22xf32, #tpu.memory_space<vmem>>, vector<1x1x16xf32>
    %104 = vector.shape_cast %103 : vector<1x1x16xf32> to vector<1x16xf32>
    %105 = vector.shape_cast %102 : vector<1x16xf32> to vector<1x1x16xf32>
    tpu.vector_store %arg4[%c1_64, %c14_65, %c3_66], %105 {strides = array<i32>} : memref<2x22x22xf32, #tpu.memory_space<vmem>>, vector<1x1x16xf32>,
    %106 = vector.extract_strided_slice %7 {offsets = [0, 192], sizes = [1, 16], strides = [1, 1]} : vector<1x256xf32> to vector<1x16xf32>
    %c0_67 = arith.constant 0 : index
    %c15 = arith.constant 15 : index
    %c3_68 = arith.constant 3 : index
    %107 = vector.load %arg4[%c0_67, %c15, %c3_68] : memref<2x22x22xf32, #tpu.memory_space<vmem>>, vector<1x1x16xf32>
    %108 = vector.shape_cast %107 : vector<1x1x16xf32> to vector<1x16xf32>
    %109 = vector.shape_cast %106 : vector<1x16xf32> to vector<1x1x16xf32>
    tpu.vector_store %arg4[%c0_67, %c15, %c3_68], %109 {strides = array<i32>} : memref<2x22x22xf32, #tpu.memory_space<vmem>>, vector<1x1x16xf32>,
    %110 = vector.extract_strided_slice %5 {offsets = [0, 192], sizes = [1, 16], strides = [1, 1]} : vector<1x256xf32> to vector<1x16xf32>
    %c1_69 = arith.constant 1 : index
    %c15_70 = arith.constant 15 : index
    %c3_71 = arith.constant 3 : index
    %111 = vector.load %arg4[%c1_69, %c15_70, %c3_71] : memref<2x22x22xf32, #tpu.memory_space<vmem>>, vector<1x1x16xf32>
    %112 = vector.shape_cast %111 : vector<1x1x16xf32> to vector<1x16xf32>
    %113 = vector.shape_cast %110 : vector<1x16xf32> to vector<1x1x16xf32>
    tpu.vector_store %arg4[%c1_69, %c15_70, %c3_71], %113 {strides = array<i32>} : memref<2x22x22xf32, #tpu.memory_space<vmem>>, vector<1x1x16xf32>,
    %114 = vector.extract_strided_slice %7 {offsets = [0, 208], sizes = [1, 16], strides = [1, 1]} : vector<1x256xf32> to vector<1x16xf32>
    %c0_72 = arith.constant 0 : index
    %c16 = arith.constant 16 : index
    %c3_73 = arith.constant 3 : index
    %115 = vector.load %arg4[%c0_72, %c16, %c3_73] : memref<2x22x22xf32, #tpu.memory_space<vmem>>, vector<1x1x16xf32>
    %116 = vector.shape_cast %115 : vector<1x1x16xf32> to vector<1x16xf32>
    %117 = vector.shape_cast %114 : vector<1x16xf32> to vector<1x1x16xf32>
    tpu.vector_store %arg4[%c0_72, %c16, %c3_73], %117 {strides = array<i32>} : memref<2x22x22xf32, #tpu.memory_space<vmem>>, vector<1x1x16xf32>,
    %118 = vector.extract_strided_slice %5 {offsets = [0, 208], sizes = [1, 16], strides = [1, 1]} : vector<1x256xf32> to vector<1x16xf32>
    %c1_74 = arith.constant 1 : index
    %c16_75 = arith.constant 16 : index
    %c3_76 = arith.constant 3 : index
    %119 = vector.load %arg4[%c1_74, %c16_75, %c3_76] : memref<2x22x22xf32, #tpu.memory_space<vmem>>, vector<1x1x16xf32>
    %120 = vector.shape_cast %119 : vector<1x1x16xf32> to vector<1x16xf32>
    %121 = vector.shape_cast %118 : vector<1x16xf32> to vector<1x1x16xf32>
    tpu.vector_store %arg4[%c1_74, %c16_75, %c3_76], %121 {strides = array<i32>} : memref<2x22x22xf32, #tpu.memory_space<vmem>>, vector<1x1x16xf32>,
    %122 = vector.extract_strided_slice %7 {offsets = [0, 224], sizes = [1, 16], strides = [1, 1]} : vector<1x256xf32> to vector<1x16xf32>
    %c0_77 = arith.constant 0 : index
    %c17 = arith.constant 17 : index
    %c3_78 = arith.constant 3 : index
    %123 = vector.load %arg4[%c0_77, %c17, %c3_78] : memref<2x22x22xf32, #tpu.memory_space<vmem>>, vector<1x1x16xf32>
    %124 = vector.shape_cast %123 : vector<1x1x16xf32> to vector<1x16xf32>
    %125 = vector.shape_cast %122 : vector<1x16xf32> to vector<1x1x16xf32>
    tpu.vector_store %arg4[%c0_77, %c17, %c3_78], %125 {strides = array<i32>} : memref<2x22x22xf32, #tpu.memory_space<vmem>>, vector<1x1x16xf32>,
    %126 = vector.extract_strided_slice %5 {offsets = [0, 224], sizes = [1, 16], strides = [1, 1]} : vector<1x256xf32> to vector<1x16xf32>
    %c1_79 = arith.constant 1 : index
    %c17_80 = arith.constant 17 : index
    %c3_81 = arith.constant 3 : index
    %127 = vector.load %arg4[%c1_79, %c17_80, %c3_81] : memref<2x22x22xf32, #tpu.memory_space<vmem>>, vector<1x1x16xf32>
    %128 = vector.shape_cast %127 : vector<1x1x16xf32> to vector<1x16xf32>
    %129 = vector.shape_cast %126 : vector<1x16xf32> to vector<1x1x16xf32>
    tpu.vector_store %arg4[%c1_79, %c17_80, %c3_81], %129 {strides = array<i32>} : memref<2x22x22xf32, #tpu.memory_space<vmem>>, vector<1x1x16xf32>,
    %130 = vector.extract_strided_slice %7 {offsets = [0, 240], sizes = [1, 16], strides = [1, 1]} : vector<1x256xf32> to vector<1x16xf32>
    %c0_82 = arith.constant 0 : index
    %c18 = arith.constant 18 : index
    %c3_83 = arith.constant 3 : index
    %131 = vector.load %arg4[%c0_82, %c18, %c3_83] : memref<2x22x22xf32, #tpu.memory_space<vmem>>, vector<1x1x16xf32>
    %132 = vector.shape_cast %131 : vector<1x1x16xf32> to vector<1x16xf32>
    %133 = vector.shape_cast %130 : vector<1x16xf32> to vector<1x1x16xf32>
    tpu.vector_store %arg4[%c0_82, %c18, %c3_83], %133 {strides = array<i32>} : memref<2x22x22xf32, #tpu.memory_space<vmem>>, vector<1x1x16xf32>,
    %134 = vector.extract_strided_slice %5 {offsets = [0, 240], sizes = [1, 16], strides = [1, 1]} : vector<1x256xf32> to vector<1x16xf32>
    %c1_84 = arith.constant 1 : index
    %c18_85 = arith.constant 18 : index
    %c3_86 = arith.constant 3 : index
    %135 = vector.load %arg4[%c1_84, %c18_85, %c3_86] : memref<2x22x22xf32, #tpu.memory_space<vmem>>, vector<1x1x16xf32>
    %136 = vector.shape_cast %135 : vector<1x1x16xf32> to vector<1x16xf32>
    %137 = vector.shape_cast %134 : vector<1x16xf32> to vector<1x1x16xf32>
    tpu.vector_store %arg4[%c1_84, %c18_85, %c3_86], %137 {strides = array<i32>} : memref<2x22x22xf32, #tpu.memory_space<vmem>>, vector<1x1x16xf32>,
    %cst_87 = arith.constant 0.000000e+00 : f32
    %138 = vector.broadcast %cst_87 : f32 to vector<16x16xf32>
    %cst_88 = arith.constant 0.000000e+00 : f32
    %139 = vector.broadcast %cst_88 : f32 to vector<16x16xf32>
    %cst_89 = arith.constant 0.000000e+00 : f32
    %140 = vector.broadcast %cst_89 : f32 to vector<16x16xf32>
    %cst_90 = arith.constant 0.000000e+00 : f32
    %141 = vector.broadcast %cst_90 : f32 to vector<16x16xf32>
    %c0_91 = arith.constant 0 : index
    %142 = memref.load %arg1[%c0_91] : memref<98xf32, #tpu.memory_space<smem>>
    %c0_92 = arith.constant 0 : index
    %c0_93 = arith.constant 0 : index
    %c0_94 = arith.constant 0 : index
    %143 = vector.load %arg4[%c0_92, %c0_93, %c0_94] : memref<2x22x22xf32, #tpu.memory_space<vmem>>, vector<1x16x16xf32>
    %144 = vector.shape_cast %143 : vector<1x16x16xf32> to vector<16x16xf32>
    %145 = vector.broadcast %142 : f32 to vector<16x16xf32>
    %146 = arith.mulf %144, %145 : vector<16x16xf32>
    %147 = arith.addf %138, %146 : vector<16x16xf32>
    %c1_95 = arith.constant 1 : index
    %148 = memref.load %arg1[%c1_95] : memref<98xf32, #tpu.memory_space<smem>>
    %c0_96 = arith.constant 0 : index
    %c0_97 = arith.constant 0 : index
    %c1_98 = arith.constant 1 : index
    %149 = vector.load %arg4[%c0_96, %c0_97, %c1_98] : memref<2x22x22xf32, #tpu.memory_space<vmem>>, vector<1x16x16xf32>
    %150 = vector.shape_cast %149 : vector<1x16x16xf32> to vector<16x16xf32>
    %151 = vector.broadcast %148 : f32 to vector<16x16xf32>
    %152 = arith.mulf %150, %151 : vector<16x16xf32>
    %153 = arith.addf %139, %152 : vector<16x16xf32>
    %c2 = arith.constant 2 : index
    %154 = memref.load %arg1[%c2] : memref<98xf32, #tpu.memory_space<smem>>
    %c0_99 = arith.constant 0 : index
    %c0_100 = arith.constant 0 : index
    %c2_101 = arith.constant 2 : index
    %155 = vector.load %arg4[%c0_99, %c0_100, %c2_101] : memref<2x22x22xf32, #tpu.memory_space<vmem>>, vector<1x16x16xf32>
    %156 = vector.shape_cast %155 : vector<1x16x16xf32> to vector<16x16xf32>
    %157 = vector.broadcast %154 : f32 to vector<16x16xf32>
    %158 = arith.mulf %156, %157 : vector<16x16xf32>
    %159 = arith.addf %140, %158 : vector<16x16xf32>
    %c3_102 = arith.constant 3 : index
    %160 = memref.load %arg1[%c3_102] : memref<98xf32, #tpu.memory_space<smem>>
    %c0_103 = arith.constant 0 : index
    %c0_104 = arith.constant 0 : index
    %c3_105 = arith.constant 3 : index
    %161 = vector.load %arg4[%c0_103, %c0_104, %c3_105] : memref<2x22x22xf32, #tpu.memory_space<vmem>>, vector<1x16x16xf32>
    %162 = vector.shape_cast %161 : vector<1x16x16xf32> to vector<16x16xf32>
    %163 = vector.broadcast %160 : f32 to vector<16x16xf32>
    %164 = arith.mulf %162, %163 : vector<16x16xf32>
    %165 = arith.addf %141, %164 : vector<16x16xf32>
    %c4_106 = arith.constant 4 : index
    %166 = memref.load %arg1[%c4_106] : memref<98xf32, #tpu.memory_space<smem>>
    %c0_107 = arith.constant 0 : index
    %c0_108 = arith.constant 0 : index
    %c4_109 = arith.constant 4 : index
    %167 = vector.load %arg4[%c0_107, %c0_108, %c4_109] : memref<2x22x22xf32, #tpu.memory_space<vmem>>, vector<1x16x16xf32>
    %168 = vector.shape_cast %167 : vector<1x16x16xf32> to vector<16x16xf32>
    %169 = vector.broadcast %166 : f32 to vector<16x16xf32>
    %170 = arith.mulf %168, %169 : vector<16x16xf32>
    %171 = arith.addf %147, %170 : vector<16x16xf32>
    %c5_110 = arith.constant 5 : index
    %172 = memref.load %arg1[%c5_110] : memref<98xf32, #tpu.memory_space<smem>>
    %c0_111 = arith.constant 0 : index
    %c0_112 = arith.constant 0 : index
    %c5_113 = arith.constant 5 : index
    %173 = vector.load %arg4[%c0_111, %c0_112, %c5_113] : memref<2x22x22xf32, #tpu.memory_space<vmem>>, vector<1x16x16xf32>
    %174 = vector.shape_cast %173 : vector<1x16x16xf32> to vector<16x16xf32>
    %175 = vector.broadcast %172 : f32 to vector<16x16xf32>
    %176 = arith.mulf %174, %175 : vector<16x16xf32>
    %177 = arith.addf %153, %176 : vector<16x16xf32>
    %c6_114 = arith.constant 6 : index
    %178 = memref.load %arg1[%c6_114] : memref<98xf32, #tpu.memory_space<smem>>
    %c0_115 = arith.constant 0 : index
    %c0_116 = arith.constant 0 : index
    %c6_117 = arith.constant 6 : index
    %179 = vector.load %arg4[%c0_115, %c0_116, %c6_117] : memref<2x22x22xf32, #tpu.memory_space<vmem>>, vector<1x16x16xf32>
    %180 = vector.shape_cast %179 : vector<1x16x16xf32> to vector<16x16xf32>
    %181 = vector.broadcast %178 : f32 to vector<16x16xf32>
    %182 = arith.mulf %180, %181 : vector<16x16xf32>
    %183 = arith.addf %159, %182 : vector<16x16xf32>
    %c7_118 = arith.constant 7 : index
    %184 = memref.load %arg1[%c7_118] : memref<98xf32, #tpu.memory_space<smem>>
    %c0_119 = arith.constant 0 : index
    %c1_120 = arith.constant 1 : index
    %c0_121 = arith.constant 0 : index
    %185 = vector.load %arg4[%c0_119, %c1_120, %c0_121] : memref<2x22x22xf32, #tpu.memory_space<vmem>>, vector<1x16x16xf32>
    %186 = vector.shape_cast %185 : vector<1x16x16xf32> to vector<16x16xf32>
    %187 = vector.broadcast %184 : f32 to vector<16x16xf32>
    %188 = arith.mulf %186, %187 : vector<16x16xf32>
    %189 = arith.addf %165, %188 : vector<16x16xf32>
    %c8_122 = arith.constant 8 : index
    %190 = memref.load %arg1[%c8_122] : memref<98xf32, #tpu.memory_space<smem>>
    %c0_123 = arith.constant 0 : index
    %c1_124 = arith.constant 1 : index
    %c1_125 = arith.constant 1 : index
    %191 = vector.load %arg4[%c0_123, %c1_124, %c1_125] : memref<2x22x22xf32, #tpu.memory_space<vmem>>, vector<1x16x16xf32>
    %192 = vector.shape_cast %191 : vector<1x16x16xf32> to vector<16x16xf32>
    %193 = vector.broadcast %190 : f32 to vector<16x16xf32>
    %194 = arith.mulf %192, %193 : vector<16x16xf32>
    %195 = arith.addf %171, %194 : vector<16x16xf32>
    %c9_126 = arith.constant 9 : index
    %196 = memref.load %arg1[%c9_126] : memref<98xf32, #tpu.memory_space<smem>>
    %c0_127 = arith.constant 0 : index
    %c1_128 = arith.constant 1 : index
    %c2_129 = arith.constant 2 : index
    %197 = vector.load %arg4[%c0_127, %c1_128, %c2_129] : memref<2x22x22xf32, #tpu.memory_space<vmem>>, vector<1x16x16xf32>
    %198 = vector.shape_cast %197 : vector<1x16x16xf32> to vector<16x16xf32>
    %199 = vector.broadcast %196 : f32 to vector<16x16xf32>
    %200 = arith.mulf %198, %199 : vector<16x16xf32>
    %201 = arith.addf %177, %200 : vector<16x16xf32>
    %c10_130 = arith.constant 10 : index
    %202 = memref.load %arg1[%c10_130] : memref<98xf32, #tpu.memory_space<smem>>
    %c0_131 = arith.constant 0 : index
    %c1_132 = arith.constant 1 : index
    %c3_133 = arith.constant 3 : index
    %203 = vector.load %arg4[%c0_131, %c1_132, %c3_133] : memref<2x22x22xf32, #tpu.memory_space<vmem>>, vector<1x16x16xf32>
    %204 = vector.shape_cast %203 : vector<1x16x16xf32> to vector<16x16xf32>
    %205 = vector.broadcast %202 : f32 to vector<16x16xf32>
    %206 = arith.mulf %204, %205 : vector<16x16xf32>
    %207 = arith.addf %183, %206 : vector<16x16xf32>
    %c11_134 = arith.constant 11 : index
    %208 = memref.load %arg1[%c11_134] : memref<98xf32, #tpu.memory_space<smem>>
    %c0_135 = arith.constant 0 : index
    %c1_136 = arith.constant 1 : index
    %c4_137 = arith.constant 4 : index
    %209 = vector.load %arg4[%c0_135, %c1_136, %c4_137] : memref<2x22x22xf32, #tpu.memory_space<vmem>>, vector<1x16x16xf32>
    %210 = vector.shape_cast %209 : vector<1x16x16xf32> to vector<16x16xf32>
    %211 = vector.broadcast %208 : f32 to vector<16x16xf32>
    %212 = arith.mulf %210, %211 : vector<16x16xf32>
    %213 = arith.addf %189, %212 : vector<16x16xf32>
    %c12_138 = arith.constant 12 : index
    %214 = memref.load %arg1[%c12_138] : memref<98xf32, #tpu.memory_space<smem>>
    %c0_139 = arith.constant 0 : index
    %c1_140 = arith.constant 1 : index
    %c5_141 = arith.constant 5 : index
    %215 = vector.load %arg4[%c0_139, %c1_140, %c5_141] : memref<2x22x22xf32, #tpu.memory_space<vmem>>, vector<1x16x16xf32>
    %216 = vector.shape_cast %215 : vector<1x16x16xf32> to vector<16x16xf32>
    %217 = vector.broadcast %214 : f32 to vector<16x16xf32>
    %218 = arith.mulf %216, %217 : vector<16x16xf32>
    %219 = arith.addf %195, %218 : vector<16x16xf32>
    %c13_142 = arith.constant 13 : index
    %220 = memref.load %arg1[%c13_142] : memref<98xf32, #tpu.memory_space<smem>>
    %c0_143 = arith.constant 0 : index
    %c1_144 = arith.constant 1 : index
    %c6_145 = arith.constant 6 : index
    %221 = vector.load %arg4[%c0_143, %c1_144, %c6_145] : memref<2x22x22xf32, #tpu.memory_space<vmem>>, vector<1x16x16xf32>
    %222 = vector.shape_cast %221 : vector<1x16x16xf32> to vector<16x16xf32>
    %223 = vector.broadcast %220 : f32 to vector<16x16xf32>
    %224 = arith.mulf %222, %223 : vector<16x16xf32>
    %225 = arith.addf %201, %224 : vector<16x16xf32>
    %c14_146 = arith.constant 14 : index
    %226 = memref.load %arg1[%c14_146] : memref<98xf32, #tpu.memory_space<smem>>
    %c0_147 = arith.constant 0 : index
    %c2_148 = arith.constant 2 : index
    %c0_149 = arith.constant 0 : index
    %227 = vector.load %arg4[%c0_147, %c2_148, %c0_149] : memref<2x22x22xf32, #tpu.memory_space<vmem>>, vector<1x16x16xf32>
    %228 = vector.shape_cast %227 : vector<1x16x16xf32> to vector<16x16xf32>
    %229 = vector.broadcast %226 : f32 to vector<16x16xf32>
    %230 = arith.mulf %228, %229 : vector<16x16xf32>
    %231 = arith.addf %207, %230 : vector<16x16xf32>
    %c15_150 = arith.constant 15 : index
    %232 = memref.load %arg1[%c15_150] : memref<98xf32, #tpu.memory_space<smem>>
    %c0_151 = arith.constant 0 : index
    %c2_152 = arith.constant 2 : index
    %c1_153 = arith.constant 1 : index
    %233 = vector.load %arg4[%c0_151, %c2_152, %c1_153] : memref<2x22x22xf32, #tpu.memory_space<vmem>>, vector<1x16x16xf32>
    %234 = vector.shape_cast %233 : vector<1x16x16xf32> to vector<16x16xf32>
    %235 = vector.broadcast %232 : f32 to vector<16x16xf32>
    %236 = arith.mulf %234, %235 : vector<16x16xf32>
    %237 = arith.addf %213, %236 : vector<16x16xf32>
    %c16_154 = arith.constant 16 : index
    %238 = memref.load %arg1[%c16_154] : memref<98xf32, #tpu.memory_space<smem>>
    %c0_155 = arith.constant 0 : index
    %c2_156 = arith.constant 2 : index
    %c2_157 = arith.constant 2 : index
    %239 = vector.load %arg4[%c0_155, %c2_156, %c2_157] : memref<2x22x22xf32, #tpu.memory_space<vmem>>, vector<1x16x16xf32>
    %240 = vector.shape_cast %239 : vector<1x16x16xf32> to vector<16x16xf32>
    %241 = vector.broadcast %238 : f32 to vector<16x16xf32>
    %242 = arith.mulf %240, %241 : vector<16x16xf32>
    %243 = arith.addf %219, %242 : vector<16x16xf32>
    %c17_158 = arith.constant 17 : index
    %244 = memref.load %arg1[%c17_158] : memref<98xf32, #tpu.memory_space<smem>>
    %c0_159 = arith.constant 0 : index
    %c2_160 = arith.constant 2 : index
    %c3_161 = arith.constant 3 : index
    %245 = vector.load %arg4[%c0_159, %c2_160, %c3_161] : memref<2x22x22xf32, #tpu.memory_space<vmem>>, vector<1x16x16xf32>
    %246 = vector.shape_cast %245 : vector<1x16x16xf32> to vector<16x16xf32>
    %247 = vector.broadcast %244 : f32 to vector<16x16xf32>
    %248 = arith.mulf %246, %247 : vector<16x16xf32>
    %249 = arith.addf %225, %248 : vector<16x16xf32>
    %c18_162 = arith.constant 18 : index
    %250 = memref.load %arg1[%c18_162] : memref<98xf32, #tpu.memory_space<smem>>
    %c0_163 = arith.constant 0 : index
    %c2_164 = arith.constant 2 : index
    %c4_165 = arith.constant 4 : index
    %251 = vector.load %arg4[%c0_163, %c2_164, %c4_165] : memref<2x22x22xf32, #tpu.memory_space<vmem>>, vector<1x16x16xf32>
    %252 = vector.shape_cast %251 : vector<1x16x16xf32> to vector<16x16xf32>
    %253 = vector.broadcast %250 : f32 to vector<16x16xf32>
    %254 = arith.mulf %252, %253 : vector<16x16xf32>
    %255 = arith.addf %231, %254 : vector<16x16xf32>
    %c19 = arith.constant 19 : index
    %256 = memref.load %arg1[%c19] : memref<98xf32, #tpu.memory_space<smem>>
    %c0_166 = arith.constant 0 : index
    %c2_167 = arith.constant 2 : index
    %c5_168 = arith.constant 5 : index
    %257 = vector.load %arg4[%c0_166, %c2_167, %c5_168] : memref<2x22x22xf32, #tpu.memory_space<vmem>>, vector<1x16x16xf32>
    %258 = vector.shape_cast %257 : vector<1x16x16xf32> to vector<16x16xf32>
    %259 = vector.broadcast %256 : f32 to vector<16x16xf32>
    %260 = arith.mulf %258, %259 : vector<16x16xf32>
    %261 = arith.addf %237, %260 : vector<16x16xf32>
    %c20 = arith.constant 20 : index
    %262 = memref.load %arg1[%c20] : memref<98xf32, #tpu.memory_space<smem>>
    %c0_169 = arith.constant 0 : index
    %c2_170 = arith.constant 2 : index
    %c6_171 = arith.constant 6 : index
    %263 = vector.load %arg4[%c0_169, %c2_170, %c6_171] : memref<2x22x22xf32, #tpu.memory_space<vmem>>, vector<1x16x16xf32>
    %264 = vector.shape_cast %263 : vector<1x16x16xf32> to vector<16x16xf32>
    %265 = vector.broadcast %262 : f32 to vector<16x16xf32>
    %266 = arith.mulf %264, %265 : vector<16x16xf32>
    %267 = arith.addf %243, %266 : vector<16x16xf32>
    %c21 = arith.constant 21 : index
    %268 = memref.load %arg1[%c21] : memref<98xf32, #tpu.memory_space<smem>>
    %c0_172 = arith.constant 0 : index
    %c3_173 = arith.constant 3 : index
    %c0_174 = arith.constant 0 : index
    %269 = vector.load %arg4[%c0_172, %c3_173, %c0_174] : memref<2x22x22xf32, #tpu.memory_space<vmem>>, vector<1x16x16xf32>
    %270 = vector.shape_cast %269 : vector<1x16x16xf32> to vector<16x16xf32>
    %271 = vector.broadcast %268 : f32 to vector<16x16xf32>
    %272 = arith.mulf %270, %271 : vector<16x16xf32>
    %273 = arith.addf %249, %272 : vector<16x16xf32>
    %c22 = arith.constant 22 : index
    %274 = memref.load %arg1[%c22] : memref<98xf32, #tpu.memory_space<smem>>
    %c0_175 = arith.constant 0 : index
    %c3_176 = arith.constant 3 : index
    %c1_177 = arith.constant 1 : index
    %275 = vector.load %arg4[%c0_175, %c3_176, %c1_177] : memref<2x22x22xf32, #tpu.memory_space<vmem>>, vector<1x16x16xf32>
    %276 = vector.shape_cast %275 : vector<1x16x16xf32> to vector<16x16xf32>
    %277 = vector.broadcast %274 : f32 to vector<16x16xf32>
    %278 = arith.mulf %276, %277 : vector<16x16xf32>
    %279 = arith.addf %255, %278 : vector<16x16xf32>
    %c23 = arith.constant 23 : index
    %280 = memref.load %arg1[%c23] : memref<98xf32, #tpu.memory_space<smem>>
    %c0_178 = arith.constant 0 : index
    %c3_179 = arith.constant 3 : index
    %c2_180 = arith.constant 2 : index
    %281 = vector.load %arg4[%c0_178, %c3_179, %c2_180] : memref<2x22x22xf32, #tpu.memory_space<vmem>>, vector<1x16x16xf32>
    %282 = vector.shape_cast %281 : vector<1x16x16xf32> to vector<16x16xf32>
    %283 = vector.broadcast %280 : f32 to vector<16x16xf32>
    %284 = arith.mulf %282, %283 : vector<16x16xf32>
    %285 = arith.addf %261, %284 : vector<16x16xf32>
    %c24 = arith.constant 24 : index
    %286 = memref.load %arg1[%c24] : memref<98xf32, #tpu.memory_space<smem>>
    %c0_181 = arith.constant 0 : index
    %c3_182 = arith.constant 3 : index
    %c3_183 = arith.constant 3 : index
    %287 = vector.load %arg4[%c0_181, %c3_182, %c3_183] : memref<2x22x22xf32, #tpu.memory_space<vmem>>, vector<1x16x16xf32>
    %288 = vector.shape_cast %287 : vector<1x16x16xf32> to vector<16x16xf32>
    %289 = vector.broadcast %286 : f32 to vector<16x16xf32>
    %290 = arith.mulf %288, %289 : vector<16x16xf32>
    %291 = arith.addf %267, %290 : vector<16x16xf32>
    %c25 = arith.constant 25 : index
    %292 = memref.load %arg1[%c25] : memref<98xf32, #tpu.memory_space<smem>>
    %c0_184 = arith.constant 0 : index
    %c3_185 = arith.constant 3 : index
    %c4_186 = arith.constant 4 : index
    %293 = vector.load %arg4[%c0_184, %c3_185, %c4_186] : memref<2x22x22xf32, #tpu.memory_space<vmem>>, vector<1x16x16xf32>
    %294 = vector.shape_cast %293 : vector<1x16x16xf32> to vector<16x16xf32>
    %295 = vector.broadcast %292 : f32 to vector<16x16xf32>
    %296 = arith.mulf %294, %295 : vector<16x16xf32>
    %297 = arith.addf %273, %296 : vector<16x16xf32>
    %c26 = arith.constant 26 : index
    %298 = memref.load %arg1[%c26] : memref<98xf32, #tpu.memory_space<smem>>
    %c0_187 = arith.constant 0 : index
    %c3_188 = arith.constant 3 : index
    %c5_189 = arith.constant 5 : index
    %299 = vector.load %arg4[%c0_187, %c3_188, %c5_189] : memref<2x22x22xf32, #tpu.memory_space<vmem>>, vector<1x16x16xf32>
    %300 = vector.shape_cast %299 : vector<1x16x16xf32> to vector<16x16xf32>
    %301 = vector.broadcast %298 : f32 to vector<16x16xf32>
    %302 = arith.mulf %300, %301 : vector<16x16xf32>
    %303 = arith.addf %279, %302 : vector<16x16xf32>
    %c27 = arith.constant 27 : index
    %304 = memref.load %arg1[%c27] : memref<98xf32, #tpu.memory_space<smem>>
    %c0_190 = arith.constant 0 : index
    %c3_191 = arith.constant 3 : index
    %c6_192 = arith.constant 6 : index
    %305 = vector.load %arg4[%c0_190, %c3_191, %c6_192] : memref<2x22x22xf32, #tpu.memory_space<vmem>>, vector<1x16x16xf32>
    %306 = vector.shape_cast %305 : vector<1x16x16xf32> to vector<16x16xf32>
    %307 = vector.broadcast %304 : f32 to vector<16x16xf32>
    %308 = arith.mulf %306, %307 : vector<16x16xf32>
    %309 = arith.addf %285, %308 : vector<16x16xf32>
    %c28 = arith.constant 28 : index
    %310 = memref.load %arg1[%c28] : memref<98xf32, #tpu.memory_space<smem>>
    %c0_193 = arith.constant 0 : index
    %c4_194 = arith.constant 4 : index
    %c0_195 = arith.constant 0 : index
    %311 = vector.load %arg4[%c0_193, %c4_194, %c0_195] : memref<2x22x22xf32, #tpu.memory_space<vmem>>, vector<1x16x16xf32>
    %312 = vector.shape_cast %311 : vector<1x16x16xf32> to vector<16x16xf32>
    %313 = vector.broadcast %310 : f32 to vector<16x16xf32>
    %314 = arith.mulf %312, %313 : vector<16x16xf32>
    %315 = arith.addf %291, %314 : vector<16x16xf32>
    %c29 = arith.constant 29 : index
    %316 = memref.load %arg1[%c29] : memref<98xf32, #tpu.memory_space<smem>>
    %c0_196 = arith.constant 0 : index
    %c4_197 = arith.constant 4 : index
    %c1_198 = arith.constant 1 : index
    %317 = vector.load %arg4[%c0_196, %c4_197, %c1_198] : memref<2x22x22xf32, #tpu.memory_space<vmem>>, vector<1x16x16xf32>
    %318 = vector.shape_cast %317 : vector<1x16x16xf32> to vector<16x16xf32>
    %319 = vector.broadcast %316 : f32 to vector<16x16xf32>
    %320 = arith.mulf %318, %319 : vector<16x16xf32>
    %321 = arith.addf %297, %320 : vector<16x16xf32>
    %c30 = arith.constant 30 : index
    %322 = memref.load %arg1[%c30] : memref<98xf32, #tpu.memory_space<smem>>
    %c0_199 = arith.constant 0 : index
    %c4_200 = arith.constant 4 : index
    %c2_201 = arith.constant 2 : index
    %323 = vector.load %arg4[%c0_199, %c4_200, %c2_201] : memref<2x22x22xf32, #tpu.memory_space<vmem>>, vector<1x16x16xf32>
    %324 = vector.shape_cast %323 : vector<1x16x16xf32> to vector<16x16xf32>
    %325 = vector.broadcast %322 : f32 to vector<16x16xf32>
    %326 = arith.mulf %324, %325 : vector<16x16xf32>
    %327 = arith.addf %303, %326 : vector<16x16xf32>
    %c31 = arith.constant 31 : index
    %328 = memref.load %arg1[%c31] : memref<98xf32, #tpu.memory_space<smem>>
    %c0_202 = arith.constant 0 : index
    %c4_203 = arith.constant 4 : index
    %c3_204 = arith.constant 3 : index
    %329 = vector.load %arg4[%c0_202, %c4_203, %c3_204] : memref<2x22x22xf32, #tpu.memory_space<vmem>>, vector<1x16x16xf32>
    %330 = vector.shape_cast %329 : vector<1x16x16xf32> to vector<16x16xf32>
    %331 = vector.broadcast %328 : f32 to vector<16x16xf32>
    %332 = arith.mulf %330, %331 : vector<16x16xf32>
    %333 = arith.addf %309, %332 : vector<16x16xf32>
    %c32 = arith.constant 32 : index
    %334 = memref.load %arg1[%c32] : memref<98xf32, #tpu.memory_space<smem>>
    %c0_205 = arith.constant 0 : index
    %c4_206 = arith.constant 4 : index
    %c4_207 = arith.constant 4 : index
    %335 = vector.load %arg4[%c0_205, %c4_206, %c4_207] : memref<2x22x22xf32, #tpu.memory_space<vmem>>, vector<1x16x16xf32>
    %336 = vector.shape_cast %335 : vector<1x16x16xf32> to vector<16x16xf32>
    %337 = vector.broadcast %334 : f32 to vector<16x16xf32>
    %338 = arith.mulf %336, %337 : vector<16x16xf32>
    %339 = arith.addf %315, %338 : vector<16x16xf32>
    %c33 = arith.constant 33 : index
    %340 = memref.load %arg1[%c33] : memref<98xf32, #tpu.memory_space<smem>>
    %c0_208 = arith.constant 0 : index
    %c4_209 = arith.constant 4 : index
    %c5_210 = arith.constant 5 : index
    %341 = vector.load %arg4[%c0_208, %c4_209, %c5_210] : memref<2x22x22xf32, #tpu.memory_space<vmem>>, vector<1x16x16xf32>
    %342 = vector.shape_cast %341 : vector<1x16x16xf32> to vector<16x16xf32>
    %343 = vector.broadcast %340 : f32 to vector<16x16xf32>
    %344 = arith.mulf %342, %343 : vector<16x16xf32>
    %345 = arith.addf %321, %344 : vector<16x16xf32>
    %c34 = arith.constant 34 : index
    %346 = memref.load %arg1[%c34] : memref<98xf32, #tpu.memory_space<smem>>
    %c0_211 = arith.constant 0 : index
    %c4_212 = arith.constant 4 : index
    %c6_213 = arith.constant 6 : index
    %347 = vector.load %arg4[%c0_211, %c4_212, %c6_213] : memref<2x22x22xf32, #tpu.memory_space<vmem>>, vector<1x16x16xf32>
    %348 = vector.shape_cast %347 : vector<1x16x16xf32> to vector<16x16xf32>
    %349 = vector.broadcast %346 : f32 to vector<16x16xf32>
    %350 = arith.mulf %348, %349 : vector<16x16xf32>
    %351 = arith.addf %327, %350 : vector<16x16xf32>
    %c35 = arith.constant 35 : index
    %352 = memref.load %arg1[%c35] : memref<98xf32, #tpu.memory_space<smem>>
    %c0_214 = arith.constant 0 : index
    %c5_215 = arith.constant 5 : index
    %c0_216 = arith.constant 0 : index
    %353 = vector.load %arg4[%c0_214, %c5_215, %c0_216] : memref<2x22x22xf32, #tpu.memory_space<vmem>>, vector<1x16x16xf32>
    %354 = vector.shape_cast %353 : vector<1x16x16xf32> to vector<16x16xf32>
    %355 = vector.broadcast %352 : f32 to vector<16x16xf32>
    %356 = arith.mulf %354, %355 : vector<16x16xf32>
    %357 = arith.addf %333, %356 : vector<16x16xf32>
    %c36 = arith.constant 36 : index
    %358 = memref.load %arg1[%c36] : memref<98xf32, #tpu.memory_space<smem>>
    %c0_217 = arith.constant 0 : index
    %c5_218 = arith.constant 5 : index
    %c1_219 = arith.constant 1 : index
    %359 = vector.load %arg4[%c0_217, %c5_218, %c1_219] : memref<2x22x22xf32, #tpu.memory_space<vmem>>, vector<1x16x16xf32>
    %360 = vector.shape_cast %359 : vector<1x16x16xf32> to vector<16x16xf32>
    %361 = vector.broadcast %358 : f32 to vector<16x16xf32>
    %362 = arith.mulf %360, %361 : vector<16x16xf32>
    %363 = arith.addf %339, %362 : vector<16x16xf32>
    %c37 = arith.constant 37 : index
    %364 = memref.load %arg1[%c37] : memref<98xf32, #tpu.memory_space<smem>>
    %c0_220 = arith.constant 0 : index
    %c5_221 = arith.constant 5 : index
    %c2_222 = arith.constant 2 : index
    %365 = vector.load %arg4[%c0_220, %c5_221, %c2_222] : memref<2x22x22xf32, #tpu.memory_space<vmem>>, vector<1x16x16xf32>
    %366 = vector.shape_cast %365 : vector<1x16x16xf32> to vector<16x16xf32>
    %367 = vector.broadcast %364 : f32 to vector<16x16xf32>
    %368 = arith.mulf %366, %367 : vector<16x16xf32>
    %369 = arith.addf %345, %368 : vector<16x16xf32>
    %c38 = arith.constant 38 : index
    %370 = memref.load %arg1[%c38] : memref<98xf32, #tpu.memory_space<smem>>
    %c0_223 = arith.constant 0 : index
    %c5_224 = arith.constant 5 : index
    %c3_225 = arith.constant 3 : index
    %371 = vector.load %arg4[%c0_223, %c5_224, %c3_225] : memref<2x22x22xf32, #tpu.memory_space<vmem>>, vector<1x16x16xf32>
    %372 = vector.shape_cast %371 : vector<1x16x16xf32> to vector<16x16xf32>
    %373 = vector.broadcast %370 : f32 to vector<16x16xf32>
    %374 = arith.mulf %372, %373 : vector<16x16xf32>
    %375 = arith.addf %351, %374 : vector<16x16xf32>
    %c39 = arith.constant 39 : index
    %376 = memref.load %arg1[%c39] : memref<98xf32, #tpu.memory_space<smem>>
    %c0_226 = arith.constant 0 : index
    %c5_227 = arith.constant 5 : index
    %c4_228 = arith.constant 4 : index
    %377 = vector.load %arg4[%c0_226, %c5_227, %c4_228] : memref<2x22x22xf32, #tpu.memory_space<vmem>>, vector<1x16x16xf32>
    %378 = vector.shape_cast %377 : vector<1x16x16xf32> to vector<16x16xf32>
    %379 = vector.broadcast %376 : f32 to vector<16x16xf32>
    %380 = arith.mulf %378, %379 : vector<16x16xf32>
    %381 = arith.addf %357, %380 : vector<16x16xf32>
    %c40 = arith.constant 40 : index
    %382 = memref.load %arg1[%c40] : memref<98xf32, #tpu.memory_space<smem>>
    %c0_229 = arith.constant 0 : index
    %c5_230 = arith.constant 5 : index
    %c5_231 = arith.constant 5 : index
    %383 = vector.load %arg4[%c0_229, %c5_230, %c5_231] : memref<2x22x22xf32, #tpu.memory_space<vmem>>, vector<1x16x16xf32>
    %384 = vector.shape_cast %383 : vector<1x16x16xf32> to vector<16x16xf32>
    %385 = vector.broadcast %382 : f32 to vector<16x16xf32>
    %386 = arith.mulf %384, %385 : vector<16x16xf32>
    %387 = arith.addf %363, %386 : vector<16x16xf32>
    %c41 = arith.constant 41 : index
    %388 = memref.load %arg1[%c41] : memref<98xf32, #tpu.memory_space<smem>>
    %c0_232 = arith.constant 0 : index
    %c5_233 = arith.constant 5 : index
    %c6_234 = arith.constant 6 : index
    %389 = vector.load %arg4[%c0_232, %c5_233, %c6_234] : memref<2x22x22xf32, #tpu.memory_space<vmem>>, vector<1x16x16xf32>
    %390 = vector.shape_cast %389 : vector<1x16x16xf32> to vector<16x16xf32>
    %391 = vector.broadcast %388 : f32 to vector<16x16xf32>
    %392 = arith.mulf %390, %391 : vector<16x16xf32>
    %393 = arith.addf %369, %392 : vector<16x16xf32>
    %c42 = arith.constant 42 : index
    %394 = memref.load %arg1[%c42] : memref<98xf32, #tpu.memory_space<smem>>
    %c0_235 = arith.constant 0 : index
    %c6_236 = arith.constant 6 : index
    %c0_237 = arith.constant 0 : index
    %395 = vector.load %arg4[%c0_235, %c6_236, %c0_237] : memref<2x22x22xf32, #tpu.memory_space<vmem>>, vector<1x16x16xf32>
    %396 = vector.shape_cast %395 : vector<1x16x16xf32> to vector<16x16xf32>
    %397 = vector.broadcast %394 : f32 to vector<16x16xf32>
    %398 = arith.mulf %396, %397 : vector<16x16xf32>
    %399 = arith.addf %375, %398 : vector<16x16xf32>
    %c43 = arith.constant 43 : index
    %400 = memref.load %arg1[%c43] : memref<98xf32, #tpu.memory_space<smem>>
    %c0_238 = arith.constant 0 : index
    %c6_239 = arith.constant 6 : index
    %c1_240 = arith.constant 1 : index
    %401 = vector.load %arg4[%c0_238, %c6_239, %c1_240] : memref<2x22x22xf32, #tpu.memory_space<vmem>>, vector<1x16x16xf32>
    %402 = vector.shape_cast %401 : vector<1x16x16xf32> to vector<16x16xf32>
    %403 = vector.broadcast %400 : f32 to vector<16x16xf32>
    %404 = arith.mulf %402, %403 : vector<16x16xf32>
    %405 = arith.addf %381, %404 : vector<16x16xf32>
    %c44 = arith.constant 44 : index
    %406 = memref.load %arg1[%c44] : memref<98xf32, #tpu.memory_space<smem>>
    %c0_241 = arith.constant 0 : index
    %c6_242 = arith.constant 6 : index
    %c2_243 = arith.constant 2 : index
    %407 = vector.load %arg4[%c0_241, %c6_242, %c2_243] : memref<2x22x22xf32, #tpu.memory_space<vmem>>, vector<1x16x16xf32>
    %408 = vector.shape_cast %407 : vector<1x16x16xf32> to vector<16x16xf32>
    %409 = vector.broadcast %406 : f32 to vector<16x16xf32>
    %410 = arith.mulf %408, %409 : vector<16x16xf32>
    %411 = arith.addf %387, %410 : vector<16x16xf32>
    %c45 = arith.constant 45 : index
    %412 = memref.load %arg1[%c45] : memref<98xf32, #tpu.memory_space<smem>>
    %c0_244 = arith.constant 0 : index
    %c6_245 = arith.constant 6 : index
    %c3_246 = arith.constant 3 : index
    %413 = vector.load %arg4[%c0_244, %c6_245, %c3_246] : memref<2x22x22xf32, #tpu.memory_space<vmem>>, vector<1x16x16xf32>
    %414 = vector.shape_cast %413 : vector<1x16x16xf32> to vector<16x16xf32>
    %415 = vector.broadcast %412 : f32 to vector<16x16xf32>
    %416 = arith.mulf %414, %415 : vector<16x16xf32>
    %417 = arith.addf %393, %416 : vector<16x16xf32>
    %c46 = arith.constant 46 : index
    %418 = memref.load %arg1[%c46] : memref<98xf32, #tpu.memory_space<smem>>
    %c0_247 = arith.constant 0 : index
    %c6_248 = arith.constant 6 : index
    %c4_249 = arith.constant 4 : index
    %419 = vector.load %arg4[%c0_247, %c6_248, %c4_249] : memref<2x22x22xf32, #tpu.memory_space<vmem>>, vector<1x16x16xf32>
    %420 = vector.shape_cast %419 : vector<1x16x16xf32> to vector<16x16xf32>
    %421 = vector.broadcast %418 : f32 to vector<16x16xf32>
    %422 = arith.mulf %420, %421 : vector<16x16xf32>
    %423 = arith.addf %399, %422 : vector<16x16xf32>
    %c47 = arith.constant 47 : index
    %424 = memref.load %arg1[%c47] : memref<98xf32, #tpu.memory_space<smem>>
    %c0_250 = arith.constant 0 : index
    %c6_251 = arith.constant 6 : index
    %c5_252 = arith.constant 5 : index
    %425 = vector.load %arg4[%c0_250, %c6_251, %c5_252] : memref<2x22x22xf32, #tpu.memory_space<vmem>>, vector<1x16x16xf32>
    %426 = vector.shape_cast %425 : vector<1x16x16xf32> to vector<16x16xf32>
    %427 = vector.broadcast %424 : f32 to vector<16x16xf32>
    %428 = arith.mulf %426, %427 : vector<16x16xf32>
    %429 = arith.addf %405, %428 : vector<16x16xf32>
    %c48 = arith.constant 48 : index
    %430 = memref.load %arg1[%c48] : memref<98xf32, #tpu.memory_space<smem>>
    %c0_253 = arith.constant 0 : index
    %c6_254 = arith.constant 6 : index
    %c6_255 = arith.constant 6 : index
    %431 = vector.load %arg4[%c0_253, %c6_254, %c6_255] : memref<2x22x22xf32, #tpu.memory_space<vmem>>, vector<1x16x16xf32>
    %432 = vector.shape_cast %431 : vector<1x16x16xf32> to vector<16x16xf32>
    %433 = vector.broadcast %430 : f32 to vector<16x16xf32>
    %434 = arith.mulf %432, %433 : vector<16x16xf32>
    %435 = arith.addf %411, %434 : vector<16x16xf32>
    %c49 = arith.constant 49 : index
    %436 = memref.load %arg1[%c49] : memref<98xf32, #tpu.memory_space<smem>>
    %c1_256 = arith.constant 1 : index
    %c0_257 = arith.constant 0 : index
    %c0_258 = arith.constant 0 : index
    %437 = vector.load %arg4[%c1_256, %c0_257, %c0_258] : memref<2x22x22xf32, #tpu.memory_space<vmem>>, vector<1x16x16xf32>
    %438 = vector.shape_cast %437 : vector<1x16x16xf32> to vector<16x16xf32>
    %439 = vector.broadcast %436 : f32 to vector<16x16xf32>
    %440 = arith.mulf %438, %439 : vector<16x16xf32>
    %441 = arith.addf %417, %440 : vector<16x16xf32>
    %c50 = arith.constant 50 : index
    %442 = memref.load %arg1[%c50] : memref<98xf32, #tpu.memory_space<smem>>
    %c1_259 = arith.constant 1 : index
    %c0_260 = arith.constant 0 : index
    %c1_261 = arith.constant 1 : index
    %443 = vector.load %arg4[%c1_259, %c0_260, %c1_261] : memref<2x22x22xf32, #tpu.memory_space<vmem>>, vector<1x16x16xf32>
    %444 = vector.shape_cast %443 : vector<1x16x16xf32> to vector<16x16xf32>
    %445 = vector.broadcast %442 : f32 to vector<16x16xf32>
    %446 = arith.mulf %444, %445 : vector<16x16xf32>
    %447 = arith.addf %423, %446 : vector<16x16xf32>
    %c51 = arith.constant 51 : index
    %448 = memref.load %arg1[%c51] : memref<98xf32, #tpu.memory_space<smem>>
    %c1_262 = arith.constant 1 : index
    %c0_263 = arith.constant 0 : index
    %c2_264 = arith.constant 2 : index
    %449 = vector.load %arg4[%c1_262, %c0_263, %c2_264] : memref<2x22x22xf32, #tpu.memory_space<vmem>>, vector<1x16x16xf32>
    %450 = vector.shape_cast %449 : vector<1x16x16xf32> to vector<16x16xf32>
    %451 = vector.broadcast %448 : f32 to vector<16x16xf32>
    %452 = arith.mulf %450, %451 : vector<16x16xf32>
    %453 = arith.addf %429, %452 : vector<16x16xf32>
    %c52 = arith.constant 52 : index
    %454 = memref.load %arg1[%c52] : memref<98xf32, #tpu.memory_space<smem>>
    %c1_265 = arith.constant 1 : index
    %c0_266 = arith.constant 0 : index
    %c3_267 = arith.constant 3 : index
    %455 = vector.load %arg4[%c1_265, %c0_266, %c3_267] : memref<2x22x22xf32, #tpu.memory_space<vmem>>, vector<1x16x16xf32>
    %456 = vector.shape_cast %455 : vector<1x16x16xf32> to vector<16x16xf32>
    %457 = vector.broadcast %454 : f32 to vector<16x16xf32>
    %458 = arith.mulf %456, %457 : vector<16x16xf32>
    %459 = arith.addf %435, %458 : vector<16x16xf32>
    %c53 = arith.constant 53 : index
    %460 = memref.load %arg1[%c53] : memref<98xf32, #tpu.memory_space<smem>>
    %c1_268 = arith.constant 1 : index
    %c0_269 = arith.constant 0 : index
    %c4_270 = arith.constant 4 : index
    %461 = vector.load %arg4[%c1_268, %c0_269, %c4_270] : memref<2x22x22xf32, #tpu.memory_space<vmem>>, vector<1x16x16xf32>
    %462 = vector.shape_cast %461 : vector<1x16x16xf32> to vector<16x16xf32>
    %463 = vector.broadcast %460 : f32 to vector<16x16xf32>
    %464 = arith.mulf %462, %463 : vector<16x16xf32>
    %465 = arith.addf %441, %464 : vector<16x16xf32>
    %c54 = arith.constant 54 : index
    %466 = memref.load %arg1[%c54] : memref<98xf32, #tpu.memory_space<smem>>
    %c1_271 = arith.constant 1 : index
    %c0_272 = arith.constant 0 : index
    %c5_273 = arith.constant 5 : index
    %467 = vector.load %arg4[%c1_271, %c0_272, %c5_273] : memref<2x22x22xf32, #tpu.memory_space<vmem>>, vector<1x16x16xf32>
    %468 = vector.shape_cast %467 : vector<1x16x16xf32> to vector<16x16xf32>
    %469 = vector.broadcast %466 : f32 to vector<16x16xf32>
    %470 = arith.mulf %468, %469 : vector<16x16xf32>
    %471 = arith.addf %447, %470 : vector<16x16xf32>
    %c55 = arith.constant 55 : index
    %472 = memref.load %arg1[%c55] : memref<98xf32, #tpu.memory_space<smem>>
    %c1_274 = arith.constant 1 : index
    %c0_275 = arith.constant 0 : index
    %c6_276 = arith.constant 6 : index
    %473 = vector.load %arg4[%c1_274, %c0_275, %c6_276] : memref<2x22x22xf32, #tpu.memory_space<vmem>>, vector<1x16x16xf32>
    %474 = vector.shape_cast %473 : vector<1x16x16xf32> to vector<16x16xf32>
    %475 = vector.broadcast %472 : f32 to vector<16x16xf32>
    %476 = arith.mulf %474, %475 : vector<16x16xf32>
    %477 = arith.addf %453, %476 : vector<16x16xf32>
    %c56 = arith.constant 56 : index
    %478 = memref.load %arg1[%c56] : memref<98xf32, #tpu.memory_space<smem>>
    %c1_277 = arith.constant 1 : index
    %c1_278 = arith.constant 1 : index
    %c0_279 = arith.constant 0 : index
    %479 = vector.load %arg4[%c1_277, %c1_278, %c0_279] : memref<2x22x22xf32, #tpu.memory_space<vmem>>, vector<1x16x16xf32>
    %480 = vector.shape_cast %479 : vector<1x16x16xf32> to vector<16x16xf32>
    %481 = vector.broadcast %478 : f32 to vector<16x16xf32>
    %482 = arith.mulf %480, %481 : vector<16x16xf32>
    %483 = arith.addf %459, %482 : vector<16x16xf32>
    %c57 = arith.constant 57 : index
    %484 = memref.load %arg1[%c57] : memref<98xf32, #tpu.memory_space<smem>>
    %c1_280 = arith.constant 1 : index
    %c1_281 = arith.constant 1 : index
    %c1_282 = arith.constant 1 : index
    %485 = vector.load %arg4[%c1_280, %c1_281, %c1_282] : memref<2x22x22xf32, #tpu.memory_space<vmem>>, vector<1x16x16xf32>
    %486 = vector.shape_cast %485 : vector<1x16x16xf32> to vector<16x16xf32>
    %487 = vector.broadcast %484 : f32 to vector<16x16xf32>
    %488 = arith.mulf %486, %487 : vector<16x16xf32>
    %489 = arith.addf %465, %488 : vector<16x16xf32>
    %c58 = arith.constant 58 : index
    %490 = memref.load %arg1[%c58] : memref<98xf32, #tpu.memory_space<smem>>
    %c1_283 = arith.constant 1 : index
    %c1_284 = arith.constant 1 : index
    %c2_285 = arith.constant 2 : index
    %491 = vector.load %arg4[%c1_283, %c1_284, %c2_285] : memref<2x22x22xf32, #tpu.memory_space<vmem>>, vector<1x16x16xf32>
    %492 = vector.shape_cast %491 : vector<1x16x16xf32> to vector<16x16xf32>
    %493 = vector.broadcast %490 : f32 to vector<16x16xf32>
    %494 = arith.mulf %492, %493 : vector<16x16xf32>
    %495 = arith.addf %471, %494 : vector<16x16xf32>
    %c59 = arith.constant 59 : index
    %496 = memref.load %arg1[%c59] : memref<98xf32, #tpu.memory_space<smem>>
    %c1_286 = arith.constant 1 : index
    %c1_287 = arith.constant 1 : index
    %c3_288 = arith.constant 3 : index
    %497 = vector.load %arg4[%c1_286, %c1_287, %c3_288] : memref<2x22x22xf32, #tpu.memory_space<vmem>>, vector<1x16x16xf32>
    %498 = vector.shape_cast %497 : vector<1x16x16xf32> to vector<16x16xf32>
    %499 = vector.broadcast %496 : f32 to vector<16x16xf32>
    %500 = arith.mulf %498, %499 : vector<16x16xf32>
    %501 = arith.addf %477, %500 : vector<16x16xf32>
    %c60 = arith.constant 60 : index
    %502 = memref.load %arg1[%c60] : memref<98xf32, #tpu.memory_space<smem>>
    %c1_289 = arith.constant 1 : index
    %c1_290 = arith.constant 1 : index
    %c4_291 = arith.constant 4 : index
    %503 = vector.load %arg4[%c1_289, %c1_290, %c4_291] : memref<2x22x22xf32, #tpu.memory_space<vmem>>, vector<1x16x16xf32>
    %504 = vector.shape_cast %503 : vector<1x16x16xf32> to vector<16x16xf32>
    %505 = vector.broadcast %502 : f32 to vector<16x16xf32>
    %506 = arith.mulf %504, %505 : vector<16x16xf32>
    %507 = arith.addf %483, %506 : vector<16x16xf32>
    %c61 = arith.constant 61 : index
    %508 = memref.load %arg1[%c61] : memref<98xf32, #tpu.memory_space<smem>>
    %c1_292 = arith.constant 1 : index
    %c1_293 = arith.constant 1 : index
    %c5_294 = arith.constant 5 : index
    %509 = vector.load %arg4[%c1_292, %c1_293, %c5_294] : memref<2x22x22xf32, #tpu.memory_space<vmem>>, vector<1x16x16xf32>
    %510 = vector.shape_cast %509 : vector<1x16x16xf32> to vector<16x16xf32>
    %511 = vector.broadcast %508 : f32 to vector<16x16xf32>
    %512 = arith.mulf %510, %511 : vector<16x16xf32>
    %513 = arith.addf %489, %512 : vector<16x16xf32>
    %c62 = arith.constant 62 : index
    %514 = memref.load %arg1[%c62] : memref<98xf32, #tpu.memory_space<smem>>
    %c1_295 = arith.constant 1 : index
    %c1_296 = arith.constant 1 : index
    %c6_297 = arith.constant 6 : index
    %515 = vector.load %arg4[%c1_295, %c1_296, %c6_297] : memref<2x22x22xf32, #tpu.memory_space<vmem>>, vector<1x16x16xf32>
    %516 = vector.shape_cast %515 : vector<1x16x16xf32> to vector<16x16xf32>
    %517 = vector.broadcast %514 : f32 to vector<16x16xf32>
    %518 = arith.mulf %516, %517 : vector<16x16xf32>
    %519 = arith.addf %495, %518 : vector<16x16xf32>
    %c63 = arith.constant 63 : index
    %520 = memref.load %arg1[%c63] : memref<98xf32, #tpu.memory_space<smem>>
    %c1_298 = arith.constant 1 : index
    %c2_299 = arith.constant 2 : index
    %c0_300 = arith.constant 0 : index
    %521 = vector.load %arg4[%c1_298, %c2_299, %c0_300] : memref<2x22x22xf32, #tpu.memory_space<vmem>>, vector<1x16x16xf32>
    %522 = vector.shape_cast %521 : vector<1x16x16xf32> to vector<16x16xf32>
    %523 = vector.broadcast %520 : f32 to vector<16x16xf32>
    %524 = arith.mulf %522, %523 : vector<16x16xf32>
    %525 = arith.addf %501, %524 : vector<16x16xf32>
    %c64 = arith.constant 64 : index
    %526 = memref.load %arg1[%c64] : memref<98xf32, #tpu.memory_space<smem>>
    %c1_301 = arith.constant 1 : index
    %c2_302 = arith.constant 2 : index
    %c1_303 = arith.constant 1 : index
    %527 = vector.load %arg4[%c1_301, %c2_302, %c1_303] : memref<2x22x22xf32, #tpu.memory_space<vmem>>, vector<1x16x16xf32>
    %528 = vector.shape_cast %527 : vector<1x16x16xf32> to vector<16x16xf32>
    %529 = vector.broadcast %526 : f32 to vector<16x16xf32>
    %530 = arith.mulf %528, %529 : vector<16x16xf32>
    %531 = arith.addf %507, %530 : vector<16x16xf32>
    %c65 = arith.constant 65 : index
    %532 = memref.load %arg1[%c65] : memref<98xf32, #tpu.memory_space<smem>>
    %c1_304 = arith.constant 1 : index
    %c2_305 = arith.constant 2 : index
    %c2_306 = arith.constant 2 : index
    %533 = vector.load %arg4[%c1_304, %c2_305, %c2_306] : memref<2x22x22xf32, #tpu.memory_space<vmem>>, vector<1x16x16xf32>
    %534 = vector.shape_cast %533 : vector<1x16x16xf32> to vector<16x16xf32>
    %535 = vector.broadcast %532 : f32 to vector<16x16xf32>
    %536 = arith.mulf %534, %535 : vector<16x16xf32>
    %537 = arith.addf %513, %536 : vector<16x16xf32>
    %c66 = arith.constant 66 : index
    %538 = memref.load %arg1[%c66] : memref<98xf32, #tpu.memory_space<smem>>
    %c1_307 = arith.constant 1 : index
    %c2_308 = arith.constant 2 : index
    %c3_309 = arith.constant 3 : index
    %539 = vector.load %arg4[%c1_307, %c2_308, %c3_309] : memref<2x22x22xf32, #tpu.memory_space<vmem>>, vector<1x16x16xf32>
    %540 = vector.shape_cast %539 : vector<1x16x16xf32> to vector<16x16xf32>
    %541 = vector.broadcast %538 : f32 to vector<16x16xf32>
    %542 = arith.mulf %540, %541 : vector<16x16xf32>
    %543 = arith.addf %519, %542 : vector<16x16xf32>
    %c67 = arith.constant 67 : index
    %544 = memref.load %arg1[%c67] : memref<98xf32, #tpu.memory_space<smem>>
    %c1_310 = arith.constant 1 : index
    %c2_311 = arith.constant 2 : index
    %c4_312 = arith.constant 4 : index
    %545 = vector.load %arg4[%c1_310, %c2_311, %c4_312] : memref<2x22x22xf32, #tpu.memory_space<vmem>>, vector<1x16x16xf32>
    %546 = vector.shape_cast %545 : vector<1x16x16xf32> to vector<16x16xf32>
    %547 = vector.broadcast %544 : f32 to vector<16x16xf32>
    %548 = arith.mulf %546, %547 : vector<16x16xf32>
    %549 = arith.addf %525, %548 : vector<16x16xf32>
    %c68 = arith.constant 68 : index
    %550 = memref.load %arg1[%c68] : memref<98xf32, #tpu.memory_space<smem>>
    %c1_313 = arith.constant 1 : index
    %c2_314 = arith.constant 2 : index
    %c5_315 = arith.constant 5 : index
    %551 = vector.load %arg4[%c1_313, %c2_314, %c5_315] : memref<2x22x22xf32, #tpu.memory_space<vmem>>, vector<1x16x16xf32>
    %552 = vector.shape_cast %551 : vector<1x16x16xf32> to vector<16x16xf32>
    %553 = vector.broadcast %550 : f32 to vector<16x16xf32>
    %554 = arith.mulf %552, %553 : vector<16x16xf32>
    %555 = arith.addf %531, %554 : vector<16x16xf32>
    %c69 = arith.constant 69 : index
    %556 = memref.load %arg1[%c69] : memref<98xf32, #tpu.memory_space<smem>>
    %c1_316 = arith.constant 1 : index
    %c2_317 = arith.constant 2 : index
    %c6_318 = arith.constant 6 : index
    %557 = vector.load %arg4[%c1_316, %c2_317, %c6_318] : memref<2x22x22xf32, #tpu.memory_space<vmem>>, vector<1x16x16xf32>
    %558 = vector.shape_cast %557 : vector<1x16x16xf32> to vector<16x16xf32>
    %559 = vector.broadcast %556 : f32 to vector<16x16xf32>
    %560 = arith.mulf %558, %559 : vector<16x16xf32>
    %561 = arith.addf %537, %560 : vector<16x16xf32>
    %c70 = arith.constant 70 : index
    %562 = memref.load %arg1[%c70] : memref<98xf32, #tpu.memory_space<smem>>
    %c1_319 = arith.constant 1 : index
    %c3_320 = arith.constant 3 : index
    %c0_321 = arith.constant 0 : index
    %563 = vector.load %arg4[%c1_319, %c3_320, %c0_321] : memref<2x22x22xf32, #tpu.memory_space<vmem>>, vector<1x16x16xf32>
    %564 = vector.shape_cast %563 : vector<1x16x16xf32> to vector<16x16xf32>
    %565 = vector.broadcast %562 : f32 to vector<16x16xf32>
    %566 = arith.mulf %564, %565 : vector<16x16xf32>
    %567 = arith.addf %543, %566 : vector<16x16xf32>
    %c71 = arith.constant 71 : index
    %568 = memref.load %arg1[%c71] : memref<98xf32, #tpu.memory_space<smem>>
    %c1_322 = arith.constant 1 : index
    %c3_323 = arith.constant 3 : index
    %c1_324 = arith.constant 1 : index
    %569 = vector.load %arg4[%c1_322, %c3_323, %c1_324] : memref<2x22x22xf32, #tpu.memory_space<vmem>>, vector<1x16x16xf32>
    %570 = vector.shape_cast %569 : vector<1x16x16xf32> to vector<16x16xf32>
    %571 = vector.broadcast %568 : f32 to vector<16x16xf32>
    %572 = arith.mulf %570, %571 : vector<16x16xf32>
    %573 = arith.addf %549, %572 : vector<16x16xf32>
    %c72 = arith.constant 72 : index
    %574 = memref.load %arg1[%c72] : memref<98xf32, #tpu.memory_space<smem>>
    %c1_325 = arith.constant 1 : index
    %c3_326 = arith.constant 3 : index
    %c2_327 = arith.constant 2 : index
    %575 = vector.load %arg4[%c1_325, %c3_326, %c2_327] : memref<2x22x22xf32, #tpu.memory_space<vmem>>, vector<1x16x16xf32>
    %576 = vector.shape_cast %575 : vector<1x16x16xf32> to vector<16x16xf32>
    %577 = vector.broadcast %574 : f32 to vector<16x16xf32>
    %578 = arith.mulf %576, %577 : vector<16x16xf32>
    %579 = arith.addf %555, %578 : vector<16x16xf32>
    %c73 = arith.constant 73 : index
    %580 = memref.load %arg1[%c73] : memref<98xf32, #tpu.memory_space<smem>>
    %c1_328 = arith.constant 1 : index
    %c3_329 = arith.constant 3 : index
    %c3_330 = arith.constant 3 : index
    %581 = vector.load %arg4[%c1_328, %c3_329, %c3_330] : memref<2x22x22xf32, #tpu.memory_space<vmem>>, vector<1x16x16xf32>
    %582 = vector.shape_cast %581 : vector<1x16x16xf32> to vector<16x16xf32>
    %583 = vector.broadcast %580 : f32 to vector<16x16xf32>
    %584 = arith.mulf %582, %583 : vector<16x16xf32>
    %585 = arith.addf %561, %584 : vector<16x16xf32>
    %c74 = arith.constant 74 : index
    %586 = memref.load %arg1[%c74] : memref<98xf32, #tpu.memory_space<smem>>
    %c1_331 = arith.constant 1 : index
    %c3_332 = arith.constant 3 : index
    %c4_333 = arith.constant 4 : index
    %587 = vector.load %arg4[%c1_331, %c3_332, %c4_333] : memref<2x22x22xf32, #tpu.memory_space<vmem>>, vector<1x16x16xf32>
    %588 = vector.shape_cast %587 : vector<1x16x16xf32> to vector<16x16xf32>
    %589 = vector.broadcast %586 : f32 to vector<16x16xf32>
    %590 = arith.mulf %588, %589 : vector<16x16xf32>
    %591 = arith.addf %567, %590 : vector<16x16xf32>
    %c75 = arith.constant 75 : index
    %592 = memref.load %arg1[%c75] : memref<98xf32, #tpu.memory_space<smem>>
    %c1_334 = arith.constant 1 : index
    %c3_335 = arith.constant 3 : index
    %c5_336 = arith.constant 5 : index
    %593 = vector.load %arg4[%c1_334, %c3_335, %c5_336] : memref<2x22x22xf32, #tpu.memory_space<vmem>>, vector<1x16x16xf32>
    %594 = vector.shape_cast %593 : vector<1x16x16xf32> to vector<16x16xf32>
    %595 = vector.broadcast %592 : f32 to vector<16x16xf32>
    %596 = arith.mulf %594, %595 : vector<16x16xf32>
    %597 = arith.addf %573, %596 : vector<16x16xf32>
    %c76 = arith.constant 76 : index
    %598 = memref.load %arg1[%c76] : memref<98xf32, #tpu.memory_space<smem>>
    %c1_337 = arith.constant 1 : index
    %c3_338 = arith.constant 3 : index
    %c6_339 = arith.constant 6 : index
    %599 = vector.load %arg4[%c1_337, %c3_338, %c6_339] : memref<2x22x22xf32, #tpu.memory_space<vmem>>, vector<1x16x16xf32>
    %600 = vector.shape_cast %599 : vector<1x16x16xf32> to vector<16x16xf32>
    %601 = vector.broadcast %598 : f32 to vector<16x16xf32>
    %602 = arith.mulf %600, %601 : vector<16x16xf32>
    %603 = arith.addf %579, %602 : vector<16x16xf32>
    %c77 = arith.constant 77 : index
    %604 = memref.load %arg1[%c77] : memref<98xf32, #tpu.memory_space<smem>>
    %c1_340 = arith.constant 1 : index
    %c4_341 = arith.constant 4 : index
    %c0_342 = arith.constant 0 : index
    %605 = vector.load %arg4[%c1_340, %c4_341, %c0_342] : memref<2x22x22xf32, #tpu.memory_space<vmem>>, vector<1x16x16xf32>
    %606 = vector.shape_cast %605 : vector<1x16x16xf32> to vector<16x16xf32>
    %607 = vector.broadcast %604 : f32 to vector<16x16xf32>
    %608 = arith.mulf %606, %607 : vector<16x16xf32>
    %609 = arith.addf %585, %608 : vector<16x16xf32>
    %c78 = arith.constant 78 : index
    %610 = memref.load %arg1[%c78] : memref<98xf32, #tpu.memory_space<smem>>
    %c1_343 = arith.constant 1 : index
    %c4_344 = arith.constant 4 : index
    %c1_345 = arith.constant 1 : index
    %611 = vector.load %arg4[%c1_343, %c4_344, %c1_345] : memref<2x22x22xf32, #tpu.memory_space<vmem>>, vector<1x16x16xf32>
    %612 = vector.shape_cast %611 : vector<1x16x16xf32> to vector<16x16xf32>
    %613 = vector.broadcast %610 : f32 to vector<16x16xf32>
    %614 = arith.mulf %612, %613 : vector<16x16xf32>
    %615 = arith.addf %591, %614 : vector<16x16xf32>
    %c79 = arith.constant 79 : index
    %616 = memref.load %arg1[%c79] : memref<98xf32, #tpu.memory_space<smem>>
    %c1_346 = arith.constant 1 : index
    %c4_347 = arith.constant 4 : index
    %c2_348 = arith.constant 2 : index
    %617 = vector.load %arg4[%c1_346, %c4_347, %c2_348] : memref<2x22x22xf32, #tpu.memory_space<vmem>>, vector<1x16x16xf32>
    %618 = vector.shape_cast %617 : vector<1x16x16xf32> to vector<16x16xf32>
    %619 = vector.broadcast %616 : f32 to vector<16x16xf32>
    %620 = arith.mulf %618, %619 : vector<16x16xf32>
    %621 = arith.addf %597, %620 : vector<16x16xf32>
    %c80 = arith.constant 80 : index
    %622 = memref.load %arg1[%c80] : memref<98xf32, #tpu.memory_space<smem>>
    %c1_349 = arith.constant 1 : index
    %c4_350 = arith.constant 4 : index
    %c3_351 = arith.constant 3 : index
    %623 = vector.load %arg4[%c1_349, %c4_350, %c3_351] : memref<2x22x22xf32, #tpu.memory_space<vmem>>, vector<1x16x16xf32>
    %624 = vector.shape_cast %623 : vector<1x16x16xf32> to vector<16x16xf32>
    %625 = vector.broadcast %622 : f32 to vector<16x16xf32>
    %626 = arith.mulf %624, %625 : vector<16x16xf32>
    %627 = arith.addf %603, %626 : vector<16x16xf32>
    %c81 = arith.constant 81 : index
    %628 = memref.load %arg1[%c81] : memref<98xf32, #tpu.memory_space<smem>>
    %c1_352 = arith.constant 1 : index
    %c4_353 = arith.constant 4 : index
    %c4_354 = arith.constant 4 : index
    %629 = vector.load %arg4[%c1_352, %c4_353, %c4_354] : memref<2x22x22xf32, #tpu.memory_space<vmem>>, vector<1x16x16xf32>
    %630 = vector.shape_cast %629 : vector<1x16x16xf32> to vector<16x16xf32>
    %631 = vector.broadcast %628 : f32 to vector<16x16xf32>
    %632 = arith.mulf %630, %631 : vector<16x16xf32>
    %633 = arith.addf %609, %632 : vector<16x16xf32>
    %c82 = arith.constant 82 : index
    %634 = memref.load %arg1[%c82] : memref<98xf32, #tpu.memory_space<smem>>
    %c1_355 = arith.constant 1 : index
    %c4_356 = arith.constant 4 : index
    %c5_357 = arith.constant 5 : index
    %635 = vector.load %arg4[%c1_355, %c4_356, %c5_357] : memref<2x22x22xf32, #tpu.memory_space<vmem>>, vector<1x16x16xf32>
    %636 = vector.shape_cast %635 : vector<1x16x16xf32> to vector<16x16xf32>
    %637 = vector.broadcast %634 : f32 to vector<16x16xf32>
    %638 = arith.mulf %636, %637 : vector<16x16xf32>
    %639 = arith.addf %615, %638 : vector<16x16xf32>
    %c83 = arith.constant 83 : index
    %640 = memref.load %arg1[%c83] : memref<98xf32, #tpu.memory_space<smem>>
    %c1_358 = arith.constant 1 : index
    %c4_359 = arith.constant 4 : index
    %c6_360 = arith.constant 6 : index
    %641 = vector.load %arg4[%c1_358, %c4_359, %c6_360] : memref<2x22x22xf32, #tpu.memory_space<vmem>>, vector<1x16x16xf32>
    %642 = vector.shape_cast %641 : vector<1x16x16xf32> to vector<16x16xf32>
    %643 = vector.broadcast %640 : f32 to vector<16x16xf32>
    %644 = arith.mulf %642, %643 : vector<16x16xf32>
    %645 = arith.addf %621, %644 : vector<16x16xf32>
    %c84 = arith.constant 84 : index
    %646 = memref.load %arg1[%c84] : memref<98xf32, #tpu.memory_space<smem>>
    %c1_361 = arith.constant 1 : index
    %c5_362 = arith.constant 5 : index
    %c0_363 = arith.constant 0 : index
    %647 = vector.load %arg4[%c1_361, %c5_362, %c0_363] : memref<2x22x22xf32, #tpu.memory_space<vmem>>, vector<1x16x16xf32>
    %648 = vector.shape_cast %647 : vector<1x16x16xf32> to vector<16x16xf32>
    %649 = vector.broadcast %646 : f32 to vector<16x16xf32>
    %650 = arith.mulf %648, %649 : vector<16x16xf32>
    %651 = arith.addf %627, %650 : vector<16x16xf32>
    %c85 = arith.constant 85 : index
    %652 = memref.load %arg1[%c85] : memref<98xf32, #tpu.memory_space<smem>>
    %c1_364 = arith.constant 1 : index
    %c5_365 = arith.constant 5 : index
    %c1_366 = arith.constant 1 : index
    %653 = vector.load %arg4[%c1_364, %c5_365, %c1_366] : memref<2x22x22xf32, #tpu.memory_space<vmem>>, vector<1x16x16xf32>
    %654 = vector.shape_cast %653 : vector<1x16x16xf32> to vector<16x16xf32>
    %655 = vector.broadcast %652 : f32 to vector<16x16xf32>
    %656 = arith.mulf %654, %655 : vector<16x16xf32>
    %657 = arith.addf %633, %656 : vector<16x16xf32>
    %c86 = arith.constant 86 : index
    %658 = memref.load %arg1[%c86] : memref<98xf32, #tpu.memory_space<smem>>
    %c1_367 = arith.constant 1 : index
    %c5_368 = arith.constant 5 : index
    %c2_369 = arith.constant 2 : index
    %659 = vector.load %arg4[%c1_367, %c5_368, %c2_369] : memref<2x22x22xf32, #tpu.memory_space<vmem>>, vector<1x16x16xf32>
    %660 = vector.shape_cast %659 : vector<1x16x16xf32> to vector<16x16xf32>
    %661 = vector.broadcast %658 : f32 to vector<16x16xf32>
    %662 = arith.mulf %660, %661 : vector<16x16xf32>
    %663 = arith.addf %639, %662 : vector<16x16xf32>
    %c87 = arith.constant 87 : index
    %664 = memref.load %arg1[%c87] : memref<98xf32, #tpu.memory_space<smem>>
    %c1_370 = arith.constant 1 : index
    %c5_371 = arith.constant 5 : index
    %c3_372 = arith.constant 3 : index
    %665 = vector.load %arg4[%c1_370, %c5_371, %c3_372] : memref<2x22x22xf32, #tpu.memory_space<vmem>>, vector<1x16x16xf32>
    %666 = vector.shape_cast %665 : vector<1x16x16xf32> to vector<16x16xf32>
    %667 = vector.broadcast %664 : f32 to vector<16x16xf32>
    %668 = arith.mulf %666, %667 : vector<16x16xf32>
    %669 = arith.addf %645, %668 : vector<16x16xf32>
    %c88 = arith.constant 88 : index
    %670 = memref.load %arg1[%c88] : memref<98xf32, #tpu.memory_space<smem>>
    %c1_373 = arith.constant 1 : index
    %c5_374 = arith.constant 5 : index
    %c4_375 = arith.constant 4 : index
    %671 = vector.load %arg4[%c1_373, %c5_374, %c4_375] : memref<2x22x22xf32, #tpu.memory_space<vmem>>, vector<1x16x16xf32>
    %672 = vector.shape_cast %671 : vector<1x16x16xf32> to vector<16x16xf32>
    %673 = vector.broadcast %670 : f32 to vector<16x16xf32>
    %674 = arith.mulf %672, %673 : vector<16x16xf32>
    %675 = arith.addf %651, %674 : vector<16x16xf32>
    %c89 = arith.constant 89 : index
    %676 = memref.load %arg1[%c89] : memref<98xf32, #tpu.memory_space<smem>>
    %c1_376 = arith.constant 1 : index
    %c5_377 = arith.constant 5 : index
    %c5_378 = arith.constant 5 : index
    %677 = vector.load %arg4[%c1_376, %c5_377, %c5_378] : memref<2x22x22xf32, #tpu.memory_space<vmem>>, vector<1x16x16xf32>
    %678 = vector.shape_cast %677 : vector<1x16x16xf32> to vector<16x16xf32>
    %679 = vector.broadcast %676 : f32 to vector<16x16xf32>
    %680 = arith.mulf %678, %679 : vector<16x16xf32>
    %681 = arith.addf %657, %680 : vector<16x16xf32>
    %c90 = arith.constant 90 : index
    %682 = memref.load %arg1[%c90] : memref<98xf32, #tpu.memory_space<smem>>
    %c1_379 = arith.constant 1 : index
    %c5_380 = arith.constant 5 : index
    %c6_381 = arith.constant 6 : index
    %683 = vector.load %arg4[%c1_379, %c5_380, %c6_381] : memref<2x22x22xf32, #tpu.memory_space<vmem>>, vector<1x16x16xf32>
    %684 = vector.shape_cast %683 : vector<1x16x16xf32> to vector<16x16xf32>
    %685 = vector.broadcast %682 : f32 to vector<16x16xf32>
    %686 = arith.mulf %684, %685 : vector<16x16xf32>
    %687 = arith.addf %663, %686 : vector<16x16xf32>
    %c91 = arith.constant 91 : index
    %688 = memref.load %arg1[%c91] : memref<98xf32, #tpu.memory_space<smem>>
    %c1_382 = arith.constant 1 : index
    %c6_383 = arith.constant 6 : index
    %c0_384 = arith.constant 0 : index
    %689 = vector.load %arg4[%c1_382, %c6_383, %c0_384] : memref<2x22x22xf32, #tpu.memory_space<vmem>>, vector<1x16x16xf32>
    %690 = vector.shape_cast %689 : vector<1x16x16xf32> to vector<16x16xf32>
    %691 = vector.broadcast %688 : f32 to vector<16x16xf32>
    %692 = arith.mulf %690, %691 : vector<16x16xf32>
    %693 = arith.addf %669, %692 : vector<16x16xf32>
    %c92 = arith.constant 92 : index
    %694 = memref.load %arg1[%c92] : memref<98xf32, #tpu.memory_space<smem>>
    %c1_385 = arith.constant 1 : index
    %c6_386 = arith.constant 6 : index
    %c1_387 = arith.constant 1 : index
    %695 = vector.load %arg4[%c1_385, %c6_386, %c1_387] : memref<2x22x22xf32, #tpu.memory_space<vmem>>, vector<1x16x16xf32>
    %696 = vector.shape_cast %695 : vector<1x16x16xf32> to vector<16x16xf32>
    %697 = vector.broadcast %694 : f32 to vector<16x16xf32>
    %698 = arith.mulf %696, %697 : vector<16x16xf32>
    %699 = arith.addf %675, %698 : vector<16x16xf32>
    %c93 = arith.constant 93 : index
    %700 = memref.load %arg1[%c93] : memref<98xf32, #tpu.memory_space<smem>>
    %c1_388 = arith.constant 1 : index
    %c6_389 = arith.constant 6 : index
    %c2_390 = arith.constant 2 : index
    %701 = vector.load %arg4[%c1_388, %c6_389, %c2_390] : memref<2x22x22xf32, #tpu.memory_space<vmem>>, vector<1x16x16xf32>
    %702 = vector.shape_cast %701 : vector<1x16x16xf32> to vector<16x16xf32>
    %703 = vector.broadcast %700 : f32 to vector<16x16xf32>
    %704 = arith.mulf %702, %703 : vector<16x16xf32>
    %705 = arith.addf %681, %704 : vector<16x16xf32>
    %c94 = arith.constant 94 : index
    %706 = memref.load %arg1[%c94] : memref<98xf32, #tpu.memory_space<smem>>
    %c1_391 = arith.constant 1 : index
    %c6_392 = arith.constant 6 : index
    %c3_393 = arith.constant 3 : index
    %707 = vector.load %arg4[%c1_391, %c6_392, %c3_393] : memref<2x22x22xf32, #tpu.memory_space<vmem>>, vector<1x16x16xf32>
    %708 = vector.shape_cast %707 : vector<1x16x16xf32> to vector<16x16xf32>
    %709 = vector.broadcast %706 : f32 to vector<16x16xf32>
    %710 = arith.mulf %708, %709 : vector<16x16xf32>
    %711 = arith.addf %687, %710 : vector<16x16xf32>
    %c95 = arith.constant 95 : index
    %712 = memref.load %arg1[%c95] : memref<98xf32, #tpu.memory_space<smem>>
    %c1_394 = arith.constant 1 : index
    %c6_395 = arith.constant 6 : index
    %c4_396 = arith.constant 4 : index
    %713 = vector.load %arg4[%c1_394, %c6_395, %c4_396] : memref<2x22x22xf32, #tpu.memory_space<vmem>>, vector<1x16x16xf32>
    %714 = vector.shape_cast %713 : vector<1x16x16xf32> to vector<16x16xf32>
    %715 = vector.broadcast %712 : f32 to vector<16x16xf32>
    %716 = arith.mulf %714, %715 : vector<16x16xf32>
    %717 = arith.addf %693, %716 : vector<16x16xf32>
    %c96 = arith.constant 96 : index
    %718 = memref.load %arg1[%c96] : memref<98xf32, #tpu.memory_space<smem>>
    %c1_397 = arith.constant 1 : index
    %c6_398 = arith.constant 6 : index
    %c5_399 = arith.constant 5 : index
    %719 = vector.load %arg4[%c1_397, %c6_398, %c5_399] : memref<2x22x22xf32, #tpu.memory_space<vmem>>, vector<1x16x16xf32>
    %720 = vector.shape_cast %719 : vector<1x16x16xf32> to vector<16x16xf32>
    %721 = vector.broadcast %718 : f32 to vector<16x16xf32>
    %722 = arith.mulf %720, %721 : vector<16x16xf32>
    %723 = arith.addf %699, %722 : vector<16x16xf32>
    %c97 = arith.constant 97 : index
    %724 = memref.load %arg1[%c97] : memref<98xf32, #tpu.memory_space<smem>>
    %c1_400 = arith.constant 1 : index
    %c6_401 = arith.constant 6 : index
    %c6_402 = arith.constant 6 : index
    %725 = vector.load %arg4[%c1_400, %c6_401, %c6_402] : memref<2x22x22xf32, #tpu.memory_space<vmem>>, vector<1x16x16xf32>
    %726 = vector.shape_cast %725 : vector<1x16x16xf32> to vector<16x16xf32>
    %727 = vector.broadcast %724 : f32 to vector<16x16xf32>
    %728 = arith.mulf %726, %727 : vector<16x16xf32>
    %729 = arith.addf %705, %728 : vector<16x16xf32>
    %730 = arith.addf %723, %729 : vector<16x16xf32>
    %731 = arith.addf %711, %717 : vector<16x16xf32>
    %732 = arith.addf %730, %731 : vector<16x16xf32>
    %733 = arith.negf %732 : vector<16x16xf32>
    %734 = math.exp %733 : vector<16x16xf32>
    %cst_403 = arith.constant 1.000000e+00 : f32
    %735 = vector.broadcast %cst_403 : f32 to vector<16x16xf32>
    %736 = arith.addf %735, %734 : vector<16x16xf32>
    %737 = arith.divf %735, %736 : vector<16x16xf32>
    %738 = vector.extract_strided_slice %737 {offsets = [0, 0], sizes = [1, 16], strides = [1, 1]} : vector<16x16xf32> to vector<1x16xf32>
    %c0_404 = arith.constant 0 : index
    %c0_405 = arith.constant 0 : index
    %739 = vector.load %arg5[%c0_404, %c0_405] : memref<1x256xf32, #tpu.memory_space<vmem>>, vector<1x16xf32>
    tpu.vector_store %arg5[%c0_404, %c0_405], %738 {strides = array<i32>} : memref<1x256xf32, #tpu.memory_space<vmem>>, vector<1x16xf32>,
    %740 = vector.extract_strided_slice %737 {offsets = [1, 0], sizes = [1, 16], strides = [1, 1]} : vector<16x16xf32> to vector<1x16xf32>
    %c0_406 = arith.constant 0 : index
    %c16_407 = arith.constant 16 : index
    %741 = vector.load %arg5[%c0_406, %c16_407] : memref<1x256xf32, #tpu.memory_space<vmem>>, vector<1x16xf32>
    tpu.vector_store %arg5[%c0_406, %c16_407], %740 {strides = array<i32>} : memref<1x256xf32, #tpu.memory_space<vmem>>, vector<1x16xf32>,
    %742 = vector.extract_strided_slice %737 {offsets = [2, 0], sizes = [1, 16], strides = [1, 1]} : vector<16x16xf32> to vector<1x16xf32>
    %c0_408 = arith.constant 0 : index
    %c32_409 = arith.constant 32 : index
    %743 = vector.load %arg5[%c0_408, %c32_409] : memref<1x256xf32, #tpu.memory_space<vmem>>, vector<1x16xf32>
    tpu.vector_store %arg5[%c0_408, %c32_409], %742 {strides = array<i32>} : memref<1x256xf32, #tpu.memory_space<vmem>>, vector<1x16xf32>,
    %744 = vector.extract_strided_slice %737 {offsets = [3, 0], sizes = [1, 16], strides = [1, 1]} : vector<16x16xf32> to vector<1x16xf32>
    %c0_410 = arith.constant 0 : index
    %c48_411 = arith.constant 48 : index
    %745 = vector.load %arg5[%c0_410, %c48_411] : memref<1x256xf32, #tpu.memory_space<vmem>>, vector<1x16xf32>
    tpu.vector_store %arg5[%c0_410, %c48_411], %744 {strides = array<i32>} : memref<1x256xf32, #tpu.memory_space<vmem>>, vector<1x16xf32>,
    %746 = vector.extract_strided_slice %737 {offsets = [4, 0], sizes = [1, 16], strides = [1, 1]} : vector<16x16xf32> to vector<1x16xf32>
    %c0_412 = arith.constant 0 : index
    %c64_413 = arith.constant 64 : index
    %747 = vector.load %arg5[%c0_412, %c64_413] : memref<1x256xf32, #tpu.memory_space<vmem>>, vector<1x16xf32>
    tpu.vector_store %arg5[%c0_412, %c64_413], %746 {strides = array<i32>} : memref<1x256xf32, #tpu.memory_space<vmem>>, vector<1x16xf32>,
    %748 = vector.extract_strided_slice %737 {offsets = [5, 0], sizes = [1, 16], strides = [1, 1]} : vector<16x16xf32> to vector<1x16xf32>
    %c0_414 = arith.constant 0 : index
    %c80_415 = arith.constant 80 : index
    %749 = vector.load %arg5[%c0_414, %c80_415] : memref<1x256xf32, #tpu.memory_space<vmem>>, vector<1x16xf32>
    tpu.vector_store %arg5[%c0_414, %c80_415], %748 {strides = array<i32>} : memref<1x256xf32, #tpu.memory_space<vmem>>, vector<1x16xf32>,
    %750 = vector.extract_strided_slice %737 {offsets = [6, 0], sizes = [1, 16], strides = [1, 1]} : vector<16x16xf32> to vector<1x16xf32>
    %c0_416 = arith.constant 0 : index
    %c96_417 = arith.constant 96 : index
    %751 = vector.load %arg5[%c0_416, %c96_417] : memref<1x256xf32, #tpu.memory_space<vmem>>, vector<1x16xf32>
    tpu.vector_store %arg5[%c0_416, %c96_417], %750 {strides = array<i32>} : memref<1x256xf32, #tpu.memory_space<vmem>>, vector<1x16xf32>,
    %752 = vector.extract_strided_slice %737 {offsets = [7, 0], sizes = [1, 16], strides = [1, 1]} : vector<16x16xf32> to vector<1x16xf32>
    %c0_418 = arith.constant 0 : index
    %c112 = arith.constant 112 : index
    %753 = vector.load %arg5[%c0_418, %c112] : memref<1x256xf32, #tpu.memory_space<vmem>>, vector<1x16xf32>
    tpu.vector_store %arg5[%c0_418, %c112], %752 {strides = array<i32>} : memref<1x256xf32, #tpu.memory_space<vmem>>, vector<1x16xf32>,
    %754 = vector.extract_strided_slice %737 {offsets = [8, 0], sizes = [1, 16], strides = [1, 1]} : vector<16x16xf32> to vector<1x16xf32>
    %c0_419 = arith.constant 0 : index
    %c128 = arith.constant 128 : index
    %755 = vector.load %arg5[%c0_419, %c128] : memref<1x256xf32, #tpu.memory_space<vmem>>, vector<1x16xf32>
    tpu.vector_store %arg5[%c0_419, %c128], %754 {strides = array<i32>} : memref<1x256xf32, #tpu.memory_space<vmem>>, vector<1x16xf32>,
    %756 = vector.extract_strided_slice %737 {offsets = [9, 0], sizes = [1, 16], strides = [1, 1]} : vector<16x16xf32> to vector<1x16xf32>
    %c0_420 = arith.constant 0 : index
    %c144 = arith.constant 144 : index
    %757 = vector.load %arg5[%c0_420, %c144] : memref<1x256xf32, #tpu.memory_space<vmem>>, vector<1x16xf32>
    tpu.vector_store %arg5[%c0_420, %c144], %756 {strides = array<i32>} : memref<1x256xf32, #tpu.memory_space<vmem>>, vector<1x16xf32>,
    %758 = vector.extract_strided_slice %737 {offsets = [10, 0], sizes = [1, 16], strides = [1, 1]} : vector<16x16xf32> to vector<1x16xf32>
    %c0_421 = arith.constant 0 : index
    %c160 = arith.constant 160 : index
    %759 = vector.load %arg5[%c0_421, %c160] : memref<1x256xf32, #tpu.memory_space<vmem>>, vector<1x16xf32>
    tpu.vector_store %arg5[%c0_421, %c160], %758 {strides = array<i32>} : memref<1x256xf32, #tpu.memory_space<vmem>>, vector<1x16xf32>,
    %760 = vector.extract_strided_slice %737 {offsets = [11, 0], sizes = [1, 16], strides = [1, 1]} : vector<16x16xf32> to vector<1x16xf32>
    %c0_422 = arith.constant 0 : index
    %c176 = arith.constant 176 : index
    %761 = vector.load %arg5[%c0_422, %c176] : memref<1x256xf32, #tpu.memory_space<vmem>>, vector<1x16xf32>
    tpu.vector_store %arg5[%c0_422, %c176], %760 {strides = array<i32>} : memref<1x256xf32, #tpu.memory_space<vmem>>, vector<1x16xf32>,
    %762 = vector.extract_strided_slice %737 {offsets = [12, 0], sizes = [1, 16], strides = [1, 1]} : vector<16x16xf32> to vector<1x16xf32>
    %c0_423 = arith.constant 0 : index
    %c192 = arith.constant 192 : index
    %763 = vector.load %arg5[%c0_423, %c192] : memref<1x256xf32, #tpu.memory_space<vmem>>, vector<1x16xf32>
    tpu.vector_store %arg5[%c0_423, %c192], %762 {strides = array<i32>} : memref<1x256xf32, #tpu.memory_space<vmem>>, vector<1x16xf32>,
    %764 = vector.extract_strided_slice %737 {offsets = [13, 0], sizes = [1, 16], strides = [1, 1]} : vector<16x16xf32> to vector<1x16xf32>
    %c0_424 = arith.constant 0 : index
    %c208 = arith.constant 208 : index
    %765 = vector.load %arg5[%c0_424, %c208] : memref<1x256xf32, #tpu.memory_space<vmem>>, vector<1x16xf32>
    tpu.vector_store %arg5[%c0_424, %c208], %764 {strides = array<i32>} : memref<1x256xf32, #tpu.memory_space<vmem>>, vector<1x16xf32>,
    %766 = vector.extract_strided_slice %737 {offsets = [14, 0], sizes = [1, 16], strides = [1, 1]} : vector<16x16xf32> to vector<1x16xf32>
    %c0_425 = arith.constant 0 : index
    %c224 = arith.constant 224 : index
    %767 = vector.load %arg5[%c0_425, %c224] : memref<1x256xf32, #tpu.memory_space<vmem>>, vector<1x16xf32>
    tpu.vector_store %arg5[%c0_425, %c224], %766 {strides = array<i32>} : memref<1x256xf32, #tpu.memory_space<vmem>>, vector<1x16xf32>,
    %768 = vector.extract_strided_slice %737 {offsets = [15, 0], sizes = [1, 16], strides = [1, 1]} : vector<16x16xf32> to vector<1x16xf32>
    %c0_426 = arith.constant 0 : index
    %c240 = arith.constant 240 : index
    %769 = vector.load %arg5[%c0_426, %c240] : memref<1x256xf32, #tpu.memory_space<vmem>>, vector<1x16xf32>
    tpu.vector_store %arg5[%c0_426, %c240], %768 {strides = array<i32>} : memref<1x256xf32, #tpu.memory_space<vmem>>, vector<1x16xf32>,
    %c0_427 = arith.constant 0 : index
    %c0_428 = arith.constant 0 : index
    %770 = vector.load %arg5[%c0_427, %c0_428] : memref<1x256xf32, #tpu.memory_space<vmem>>, vector<1x256xf32>
    %c0_429 = arith.constant 0 : index
    %c0_430 = arith.constant 0 : index
    %c0_431 = arith.constant 0 : index
    %771 = vector.load %arg2[%c0_429, %c0_430, %c0_431] : memref<1x4x256xf32, #tpu.memory_space<vmem>>, vector<1x4x256xf32>
    %772 = vector.shape_cast %771 : vector<1x4x256xf32> to vector<4x256xf32>
    %773 = vector.broadcast %770 : vector<1x256xf32> to vector<4x256xf32>
    %774 = arith.mulf %772, %773 : vector<4x256xf32>
    %c0_432 = arith.constant 0 : index
    %c0_433 = arith.constant 0 : index
    %c0_434 = arith.constant 0 : index
    %775 = vector.load %arg3[%c0_432, %c0_433, %c0_434] : memref<1x4x256xf32, #tpu.memory_space<vmem>>, vector<1x4x256xf32>
    %776 = vector.shape_cast %775 : vector<1x4x256xf32> to vector<4x256xf32>
    %777 = vector.shape_cast %774 : vector<4x256xf32> to vector<1x4x256xf32>
    tpu.vector_store %arg3[%c0_432, %c0_433, %c0_434], %777 {strides = array<i32>} : memref<1x4x256xf32, #tpu.memory_space<vmem>>, vector<1x4x256xf32>,
    return
  }
  func.func @transform_0(%arg0: i32) -> i32 {
    %c0_i32 = arith.constant 0 : i32
    %c0_i32_0 = arith.constant 0 : i32
    return %c0_i32 : i32
  }
  func.func @transform_1(%arg0: i32) -> (i32, i32, i32) {
    %c0_i32 = arith.constant 0 : i32
    %c0_i32_0 = arith.constant 0 : i32
    %c0_i32_1 = arith.constant 0 : i32
    return %arg0, %c0_i32, %c0_i32_0 : i32, i32, i32
  }
  func.func @transform_2(%arg0: i32) -> (i32, i32, i32) {
    %c0_i32 = arith.constant 0 : i32
    %c0_i32_0 = arith.constant 0 : i32
    %c0_i32_1 = arith.constant 0 : i32
    return %arg0, %c0_i32, %c0_i32_0 : i32, i32, i32
  }
}

</mosaic_0001>

<llo_original>
// kernel: spatial_attention.1
$region0: #{spatial_attention.1}
  #allocation0 [shape = 'u32[]', space=smem, size = 0x4, offset = 0x4, fixed_abs, tag = 'smem constant byte address 0x4 - core index']
  #allocation1 [shape = 'u32[144,128]{1,0:T(1,128)}', space=vmem, size = 0x12000, scoped, tag = 'internal scratch']
  #allocation2 [shape = 'f32[2,22,22]{2,1,0:T(8,128)}', space=vmem, size = 0x6000, scoped, tag = 'scratch operand']
  #allocation3 [shape = 'f32[1,256]{1,0:T(1,128)}', space=vmem, size = 0x400, scoped, tag = 'scratch operand']
  %s0 = inlined_call_operand.vmem [shape: f32[98], index: 0, kind: input, shape index: {}]
  %s1 = inlined_call_operand.vmem [shape: f32[2,4,256], index: 1, kind: input, shape index: {}]
  %s2 = inlined_call_operand.vmem [shape: f32[2,4,256], index: 2, kind: output, shape index: {}]
  %s3 = sld [smem:[#allocation0]]
  $region45: #{spatial_attention.1} parent=0
    _
  %s5 = ssub.s32 1, %s3
  %s6 = scalar_select 0, %s5, %s3
  $region1: #{spatial_attention.1} parent=0
    #allocation4 [shape = 'u8[512]{0}', space=smem, size = 0x200, scoped, tag = 'input window, operand 0, single buffered']
    #allocation5 [shape = 's32[2]{0}', space=sflag, size = 0x8, scoped, tag = 'scoped memory for spatial_attention.1']
    %7 = vsyncpa [#allocation5], 0
    loop: start=0, step=1, limit=4
    $region2: #{spatial_attention.1} parent=1 // loop_pre_header
      _
    $region3: #{spatial_attention.1} parent=1 // loop_header
      %s9 = sphi 0, %s13
      %p10 = scmp.ge.s32.totalorder %s9, 4
      %s17 = sphi 0, %s17
      %s19 = sphi 0, %s17
      %s20 = sphi 0, %s19
      %s34 = sphi 0, %s20
      %s40 = sphi 0, %s42
      %s43 = sphi 0, %s40
      %s44 = sphi 0, %s43
      %s60 = sphi 0, %s44
      %s66 = sphi 0, %s68
      %s69 = sphi 0, %s66
      %s70 = sphi 0, %s69
      %s86 = sphi 0, %s70
    $region4: #{spatial_attention.1} parent=1 // loop_header_branch
      %12 = sbr.rel (%p10) target = $region8
    $region5: #{spatial_attention.1} parent=1 // loop_body
      %s14 = ssub.s32 %s9, 1
      %s15 = ssub.s32 %s9, 2
      %s16 = sadd.s32 %s9, 1
      %s18 = sadd.s32 %s17, 1
      %p21 = scmp.eq.s32.totalorder %s9, 1
      %p22 = scmp.ne.s32.totalorder %s17, %s19
      %p23 = scmp.eq.s32.totalorder %s9, 0
      %p24 = por %p22, %p23
      %p25 = scmp.ne.s32.totalorder %s17, %s19
      %p26 = scmp.eq.s32.totalorder %s14, 1
      %p27 = por %p25, %p26
      %p28 = scmp.ne.s32.totalorder %s19, %s20
      %p29 = scmp.eq.s32.totalorder %s14, 0
      %p30 = por %p28, %p29
      %p31 = scmp.ne.s32.totalorder %s19, %s20
      %p32 = scmp.eq.s32.totalorder %s15, 1
      %p33 = por %p31, %p32
      %p35 = scmp.ne.s32.totalorder %s20, %s34
      %p36 = scmp.eq.s32.totalorder %s15, 0
      %p37 = por %p35, %p36
      %s38 = ssub.s32 %s9, %s16
      %p39 = scmp.eq.s32.totalorder %s38, 0
      %s41 = sadd.s32 %s40, 1
      %s42 = scalar_select %p39, %s40, %s41
      %p45 = pneg %p39
      %p46 = scmp.eq.s32.totalorder %s9, 1
      %p47 = por %p45, %p46
      %p48 = scmp.ne.s32.totalorder %s40, %s43
      %p49 = scmp.eq.s32.totalorder %s9, 0
      %p50 = por %p48, %p49
      %p51 = scmp.ne.s32.totalorder %s40, %s43
      %p52 = scmp.eq.s32.totalorder %s14, 1
      %p53 = por %p51, %p52
      %p54 = scmp.ne.s32.totalorder %s43, %s44
      %p55 = scmp.eq.s32.totalorder %s14, 0
      %p56 = por %p54, %p55
      %p57 = scmp.ne.s32.totalorder %s43, %s44
      %p58 = scmp.eq.s32.totalorder %s15, 1
      %p59 = por %p57, %p58
      %p61 = scmp.ne.s32.totalorder %s44, %s60
      %p62 = scmp.eq.s32.totalorder %s15, 0
      %p63 = por %p61, %p62
      %s64 = ssub.s32 %s9, %s16
      %p65 = scmp.eq.s32.totalorder %s64, 0
      %s67 = sadd.s32 %s66, 1
      %s68 = scalar_select %p65, %s66, %s67
      %p71 = pneg %p65
      %p72 = scmp.eq.s32.totalorder %s9, 1
      %p73 = por %p71, %p72
      %p74 = scmp.ne.s32.totalorder %s66, %s69
      %p75 = scmp.eq.s32.totalorder %s9, 0
      %p76 = por %p74, %p75
      %p77 = scmp.ne.s32.totalorder %s66, %s69
      %p78 = scmp.eq.s32.totalorder %s14, 1
      %p79 = por %p77, %p78
      %p80 = scmp.ne.s32.totalorder %s69, %s70
      %p81 = scmp.eq.s32.totalorder %s14, 0
      %p82 = por %p80, %p81
      %p83 = scmp.ne.s32.totalorder %s69, %s70
      %p84 = scmp.eq.s32.totalorder %s15, 1
      %p85 = por %p83, %p84
      %p87 = scmp.ne.s32.totalorder %s70, %s86
      %p88 = scmp.eq.s32.totalorder %s15, 0
      %p89 = por %p87, %p88
      %p90 = scmp.le.s32.totalorder 1, %s9
      %p91 = scmp.lt.s32.totalorder %s9, 3
      %p92 = pnand %p90, %p91
      %p93 = pneg %p92
      // Predicated region
      $region9: #{spatial_attention.1} parent=5 // pred_check
        _
      $region10: #{spatial_attention.1} parent=5 // pred_check_branch
        %95 = sbr.rel (%p92) target = $region12
      $region11: #{spatial_attention.1} parent=5 // pred_region
        %s96 = ssub.s32 %s9, 1
        // Predicated region
        $region13: #{spatial_attention.1} parent=11 // pred_check
          %p97 = pneg %p30
        $region14: #{spatial_attention.1} parent=11 // pred_check_branch
          %99 = sbr.rel (%p97) target = $region16
        $region15: #{spatial_attention.1} parent=11 // pred_region
          %s101 = ssub.s32 16, 16
          %102 = vsyncadd [#allocation5], %s101
          %s104 = sshll.u32 %s0, 4
          %s105 = int_to_ptr.vmem [resolvable:$true] %s104
          %107 = dma.vmem_to_smem %s105, 16, [#allocation4], [#allocation5]
        $region16: #{spatial_attention.1} parent=11 // pred_fallthru
          _
      $region12: #{spatial_attention.1} parent=5 // pred_fallthru
        _
      %p108 = scmp.lt.s32.totalorder %s9, 2
      // Predicated region
      $region17: #{spatial_attention.1} parent=5 // pred_check
        %p109 = pneg %p108
      $region18: #{spatial_attention.1} parent=5 // pred_check_branch
        %111 = sbr.rel (%p109) target = $region20
      $region19: #{spatial_attention.1} parent=5 // pred_region
        // Predicated region
        $region21: #{spatial_attention.1} parent=19 // pred_check
          %p112 = pneg %p50
        $region22: #{spatial_attention.1} parent=19 // pred_check_branch
          %114 = sbr.rel (%p112) target = $region24
        $region23: #{spatial_attention.1} parent=19 // pred_region
          %p115 = scmp.lt.s32.totalorder %s9, 1
          %s116 = scalar_select %p115, %s9, 1
          %s117 = smul.addr %s116, 2
          %s118 = smul.addr %s117, 4
          %s119 = scalar_lea.vmem %s1, %s118
        $region24: #{spatial_attention.1} parent=19 // pred_fallthru
          _
      $region20: #{spatial_attention.1} parent=5 // pred_fallthru
        _
      %p120 = scmp.le.s32.totalorder 1, %s9
      %p121 = scmp.lt.s32.totalorder %s9, 3
      %p122 = pnand %p120, %p121
      %p123 = pneg %p122
      // Predicated region
      $region25: #{spatial_attention.1} parent=5 // pred_check
        _
      $region26: #{spatial_attention.1} parent=5 // pred_check_branch
        %125 = sbr.rel (%p122) target = $region28
      $region27: #{spatial_attention.1} parent=5 // pred_region
        %s126 = ssub.s32 %s9, 1
        // Predicated region
        $region29: #{spatial_attention.1} parent=27 // pred_check
          %p127 = pneg %p30
        $region30: #{spatial_attention.1} parent=27 // pred_check_branch
          %129 = sbr.rel (%p127) target = $region32
        $region31: #{spatial_attention.1} parent=27 // pred_region
          %130 = dma.done [#allocation5], 16
        $region32: #{spatial_attention.1} parent=27 // pred_fallthru
          _
        %131 = sfence
        %p132 = pneg %p30
        %p133 = pneg %p27
        %p134 = scmp.lt.s32.totalorder %s14, 1
        %s135 = scalar_select %p134, %s14, 1
        %s136 = smul.addr %s135, 2
        %s137 = smul.addr %s136, 4
        %s138 = scalar_lea.vmem %s1, %s137
        %p139 = pneg %p56
        %p140 = pneg %p53
        %p141 = pneg %p82
        %p142 = pneg %p79
        %p143 = scmp.lt.s32.totalorder %s14, 1
        %s144 = scalar_select %p143, %s14, 1
        %s145 = smul.addr %s144, 2
        %s146 = smul.addr %s145, 4
        %s147 = scalar_lea.vmem %s2, %s146
        %p148 = scmp.lt.s32.totalorder %s14, 1
        %s149 = scalar_select %p148, %s14, 1
        %s150 = smul.addr %s149, 2
        %s151 = smul.addr %s150, 4
        %s152 = scalar_lea.vmem %s1, %s151
        %p153 = scmp.lt.s32.totalorder %s14, 1
        %s154 = scalar_select %p153, %s14, 1
        %s155 = smul.addr %s154, 2
        %s156 = smul.addr %s155, 4
        %s157 = scalar_lea.vmem %s2, %s156
        %v158 = vld [vmem:[%s152] sm:$0xff]
        %v160 = vcombine.high %v158, %v158
        %vm162 = vcmask 1043456
        %v163 = vsel %vm162, %v158, 0.0
        %v164 = vrot.slane %v163, 4
        %v165 = vadd.f32 %v163, %v164
        %v166 = vrot.slane %v165, 2
        %v167 = vadd.f32 %v165, %v166
        %v168 = vrot.slane %v167, 1
        %v169 = vadd.f32 %v167, %v168
        %v170 = vsel %vm162, %v160, 0.0
        %v171 = vrot.slane %v170, 4
        %v172 = vadd.f32 %v170, %v171
        %v173 = vrot.slane %v172, 2
        %v174 = vadd.f32 %v172, %v173
        %v175 = vrot.slane %v174, 1
        %v176 = vadd.f32 %v174, %v175
        %v177 = vsel %vm162, %v158, -inf
        %v178 = vrot.slane %v177, 4
        %v179 = vmax.f32 %v177, %v178
        %v180 = vrot.slane %v179, 2
        %v181 = vmax.f32 %v179, %v180
        %v182 = vrot.slane %v181, 1
        %v183 = vmax.f32 %v181, %v182
        %v184 = vsel %vm162, %v160, -inf
        %v185 = vrot.slane %v184, 4
        %v186 = vmax.f32 %v184, %v185
        %v187 = vrot.slane %v186, 2
        %v188 = vmax.f32 %v186, %v187
        %v189 = vrot.slane %v188, 1
        %v190 = vmax.f32 %v188, %v189
        %v191 = vmul.f32 %v169, 0.25
        %v192 = vmul.f32 %v176, 0.25
        %vm193 = vcmask 179200
        %194 = vst.msk [vmem:[#allocation2] sm:$0xff] %vm193, 0.0
        %195 = vst.msk [vmem:[#allocation2 + $0x8] sm:$0xff] %vm193, 0.0
        %vm196 = vcmask 177152
        %197 = vst.msk [vmem:[#allocation2 + $0x10] sm:$0x3f] %vm196, 0.0
        %198 = vst.msk [vmem:[#allocation2 + $0x18] sm:$0xff] %vm193, 0.0
        %199 = vst.msk [vmem:[#allocation2 + $0x20] sm:$0xff] %vm193, 0.0
        %200 = vst.msk [vmem:[#allocation2 + $0x28] sm:$0x3f] %vm196, 0.0
        %202 = vrot.lane.b32.xlu0 %v191, 3
        %v203 = vpop.permute.xlu0 %202
        %vm205 = vcmask 147480
        %206 = vst.msk [vmem:[#allocation2 + $0x3] sm:$0x1] %vm205, %v203
        %208 = vrot.lane.b32.xlu0 %v183, 3
        %v209 = vpop.permute.xlu0 %208
        %s211 = scalar_lea.vmem [#allocation2], 24
        %212 = vst.msk [vmem:[%s211 + $0x3] sm:$0x1] %vm205, %v209
        %213 = vrot.lane.b32.xlu0 %v191, 115
        %v214 = vpop.permute.xlu0 %213
        %216 = vst.msk [vmem:[#allocation2 + $0x4] sm:$0x1] %vm205, %v214
        %217 = vrot.lane.b32.xlu0 %v183, 115
        %v218 = vpop.permute.xlu0 %217
        %220 = vst.msk [vmem:[%s211 + $0x4] sm:$0x1] %vm205, %v218
        %221 = vrot.lane.b32.xlu0 %v191, 99
        %v222 = vpop.permute.xlu0 %221
        %224 = vst.msk [vmem:[#allocation2 + $0x5] sm:$0x1] %vm205, %v222
        %225 = vrot.lane.b32.xlu0 %v183, 99
        %v226 = vpop.permute.xlu0 %225
        %228 = vst.msk [vmem:[%s211 + $0x5] sm:$0x1] %vm205, %v226
        %229 = vrot.lane.b32.xlu0 %v191, 83
        %v230 = vpop.permute.xlu0 %229
        %232 = vst.msk [vmem:[#allocation2 + $0x6] sm:$0x1] %vm205, %v230
        %233 = vrot.lane.b32.xlu0 %v183, 83
        %v234 = vpop.permute.xlu0 %233
        %236 = vst.msk [vmem:[%s211 + $0x6] sm:$0x1] %vm205, %v234
        %237 = vrot.lane.b32.xlu0 %v191, 67
        %v238 = vpop.permute.xlu0 %237
        %240 = vst.msk [vmem:[#allocation2 + $0x7] sm:$0x1] %vm205, %v238
        %241 = vrot.lane.b32.xlu0 %v183, 67
        %v242 = vpop.permute.xlu0 %241
        %244 = vst.msk [vmem:[%s211 + $0x7] sm:$0x1] %vm205, %v242
        %245 = vrot.lane.b32.xlu0 %v191, 51
        %v246 = vpop.permute.xlu0 %245
        %248 = vst.msk [vmem:[#allocation2 + $0x8] sm:$0x1] %vm205, %v246
        %249 = vrot.lane.b32.xlu0 %v183, 51
        %v250 = vpop.permute.xlu0 %249
        %252 = vst.msk [vmem:[%s211 + $0x8] sm:$0x1] %vm205, %v250
        %253 = vrot.lane.b32.xlu0 %v191, 35
        %v254 = vpop.permute.xlu0 %253
        %256 = vst.msk [vmem:[#allocation2 + $0x9] sm:$0x1] %vm205, %v254
        %257 = vrot.lane.b32.xlu0 %v183, 35
        %v258 = vpop.permute.xlu0 %257
        %260 = vst.msk [vmem:[%s211 + $0x9] sm:$0x1] %vm205, %v258
        %261 = vrot.lane.b32.xlu0 %v191, 19
        %v262 = vpop.permute.xlu0 %261
        %264 = vst.msk [vmem:[#allocation2 + $0xa] sm:$0x1] %vm205, %v262
        %265 = vrot.lane.b32.xlu0 %v183, 19
        %v266 = vpop.permute.xlu0 %265
        %268 = vst.msk [vmem:[%s211 + $0xa] sm:$0x1] %vm205, %v266
        %270 = vrot.lane.b32.xlu0 %v192, 3
        %v271 = vpop.permute.xlu0 %270
        %273 = vst.msk [vmem:[#allocation2 + $0xb] sm:$0x1] %vm205, %v271
        %275 = vrot.lane.b32.xlu0 %v190, 3
        %v276 = vpop.permute.xlu0 %275
        %278 = vst.msk [vmem:[%s211 + $0xb] sm:$0x1] %vm205, %v276
        %279 = vrot.lane.b32.xlu0 %v192, 115
        %v280 = vpop.permute.xlu0 %279
        %282 = vst.msk [vmem:[#allocation2 + $0xc] sm:$0x1] %vm205, %v280
        %283 = vrot.lane.b32.xlu0 %v190, 115
        %v284 = vpop.permute.xlu0 %283
        %286 = vst.msk [vmem:[%s211 + $0xc] sm:$0x1] %vm205, %v284
        %287 = vrot.lane.b32.xlu0 %v192, 99
        %v288 = vpop.permute.xlu0 %287
        %290 = vst.msk [vmem:[#allocation2 + $0xd] sm:$0x1] %vm205, %v288
        %291 = vrot.lane.b32.xlu0 %v190, 99
        %v292 = vpop.permute.xlu0 %291
        %294 = vst.msk [vmem:[%s211 + $0xd] sm:$0x1] %vm205, %v292
        %295 = vrot.lane.b32.xlu0 %v192, 83
        %v296 = vpop.permute.xlu0 %295
        %298 = vst.msk [vmem:[#allocation2 + $0xe] sm:$0x1] %vm205, %v296
        %299 = vrot.lane.b32.xlu0 %v190, 83
        %v300 = vpop.permute.xlu0 %299
        %302 = vst.msk [vmem:[%s211 + $0xe] sm:$0x1] %vm205, %v300
        %303 = vrot.lane.b32.xlu0 %v192, 67
        %v304 = vpop.permute.xlu0 %303
        %306 = vst.msk [vmem:[#allocation2 + $0xf] sm:$0x1] %vm205, %v304
        %307 = vrot.lane.b32.xlu0 %v190, 67
        %v308 = vpop.permute.xlu0 %307
        %310 = vst.msk [vmem:[%s211 + $0xf] sm:$0x1] %vm205, %v308
        %311 = vrot.lane.b32.xlu0 %v192, 51
        %v312 = vpop.permute.xlu0 %311
        %314 = vst.msk [vmem:[#allocation2 + $0x10] sm:$0x1] %vm205, %v312
        %315 = vrot.lane.b32.xlu0 %v190, 51
        %v316 = vpop.permute.xlu0 %315
        %318 = vst.msk [vmem:[%s211 + $0x10] sm:$0x1] %vm205, %v316
        %319 = vrot.lane.b32.xlu0 %v192, 35
        %v320 = vpop.permute.xlu0 %319
        %322 = vst.msk [vmem:[#allocation2 + $0x11] sm:$0x1] %vm205, %v320
        %323 = vrot.lane.b32.xlu0 %v190, 35
        %v324 = vpop.permute.xlu0 %323
        %326 = vst.msk [vmem:[%s211 + $0x11] sm:$0x1] %vm205, %v324
        %327 = vrot.lane.b32.xlu0 %v192, 19
        %v328 = vpop.permute.xlu0 %327
        %330 = vst.msk [vmem:[#allocation2 + $0x12] sm:$0x1] %vm205, %v328
        %331 = vrot.lane.b32.xlu0 %v190, 19
        %v332 = vpop.permute.xlu0 %331
        %334 = vst.msk [vmem:[%s211 + $0x12] sm:$0x1] %vm205, %v332
        %s335 = sld [smem:[#allocation4]]
        %v336 = vld [vmem:[#allocation2] sm:$0xff]
        %v337 = vld [vmem:[#allocation2 + $0x8] sm:$0xff]
        %v338 = vstv %s335
        %v339 = vmul.f32 %v336, %v338
        %v340 = vmul.f32 %v337, %v338
        %v341 = vadd.f32 %v339, 0.0
        %v342 = vadd.f32 %v340, 0.0
        %s343 = sld [smem:[#allocation4 + $0x1]]
        %v344 = vstv %s343
        %v345 = vmul.f32 %v336, %v344
        %v346 = vmul.f32 %v337, %v344
        %v347 = vadd.f32 %v345, 0.0
        %v348 = vadd.f32 %v346, 0.0
        %s349 = sld [smem:[#allocation4 + $0x2]]
        %v350 = vstv %s349
        %v351 = vmul.f32 %v336, %v350
        %v352 = vmul.f32 %v337, %v350
        %v353 = vadd.f32 %v351, 0.0
        %v354 = vadd.f32 %v352, 0.0
        %s355 = sld [smem:[#allocation4 + $0x3]]
        %v356 = vstv %s355
        %v357 = vmul.f32 %v336, %v356
        %v358 = vmul.f32 %v337, %v356
        %v359 = vadd.f32 %v357, 0.0
        %v360 = vadd.f32 %v358, 0.0
        %s361 = sld [smem:[#allocation4 + $0x4]]
        %v362 = vstv %s361
        %v363 = vmul.f32 %v336, %v362
        %v364 = vmul.f32 %v337, %v362
        %367 = vrot.lane.b32.xlu0 %v363, 124
        %v368 = vpop.permute.xlu0 %367
        %369 = vrot.lane.b32.xlu0 %v364, 124
        %v370 = vpop.permute.xlu0 %369
        %v373 = vadd.f32 %v341, %v368
        %v374 = vadd.f32 %v342, %v370
        %s375 = sld [smem:[#allocation4 + $0x5]]
        %v376 = vstv %s375
        %v377 = vmul.f32 %v336, %v376
        %v378 = vmul.f32 %v337, %v376
        %381 = vrot.lane.b32.xlu0 %v377, 124
        %v382 = vpop.permute.xlu0 %381
        %383 = vrot.lane.b32.xlu0 %v378, 124
        %v384 = vpop.permute.xlu0 %383
        %v387 = vadd.f32 %v347, %v382
        %v388 = vadd.f32 %v348, %v384
        %s389 = sld [smem:[#allocation4 + $0x6]]
        %v390 = vstv %s389
        %v391 = vmul.f32 %v336, %v390
        %v392 = vmul.f32 %v337, %v390
        %395 = vrot.lane.b32.xlu0 %v391, 124
        %v396 = vpop.permute.xlu0 %395
        %397 = vrot.lane.b32.xlu0 %v392, 124
        %v398 = vpop.permute.xlu0 %397
        %v401 = vadd.f32 %v353, %v396
        %v402 = vadd.f32 %v354, %v398
        %s403 = sld [smem:[#allocation4 + $0x7]]
        %v404 = vld [vmem:[#allocation2 + $0x1] sm:$0xff]
        %v405 = vld [vmem:[#allocation2 + $0x9] sm:$0xff]
        %v406 = vstv %s403
        %v407 = vmul.f32 %v404, %v406
        %v408 = vmul.f32 %v405, %v406
        %411 = vrot.lane.b32.xlu0 %v407, 3
        %v412 = vpop.permute.xlu0 %411
        %413 = vrot.lane.b32.xlu0 %v408, 3
        %v414 = vpop.permute.xlu0 %413
        %v417 = vadd.f32 %v359, %v412
        %v418 = vadd.f32 %v360, %v414
        %s419 = sld [smem:[#allocation4 + $0x8]]
        %v420 = vstv %s419
        %v421 = vmul.f32 %v404, %v420
        %v422 = vmul.f32 %v405, %v420
        %425 = vrot.lane.b32.xlu0 %v421, 127
        %v426 = vpop.permute.xlu0 %425
        %427 = vrot.lane.b32.xlu0 %v422, 127
        %v428 = vpop.permute.xlu0 %427
        %v431 = vadd.f32 %v373, %v426
        %v432 = vadd.f32 %v374, %v428
        %s433 = sld [smem:[#allocation4 + $0x9]]
        %v434 = vstv %s433
        %v435 = vmul.f32 %v404, %v434
        %v436 = vmul.f32 %v405, %v434
        %439 = vrot.lane.b32.xlu0 %v435, 127
        %v440 = vpop.permute.xlu0 %439
        %441 = vrot.lane.b32.xlu0 %v436, 127
        %v442 = vpop.permute.xlu0 %441
        %v445 = vadd.f32 %v387, %v440
        %v446 = vadd.f32 %v388, %v442
        %s447 = sld [smem:[#allocation4 + $0xa]]
        %v448 = vstv %s447
        %v449 = vmul.f32 %v404, %v448
        %v450 = vmul.f32 %v405, %v448
        %453 = vrot.lane.b32.xlu0 %v449, 127
        %v454 = vpop.permute.xlu0 %453
        %455 = vrot.lane.b32.xlu0 %v450, 127
        %v456 = vpop.permute.xlu0 %455
        %v459 = vadd.f32 %v401, %v454
        %v460 = vadd.f32 %v402, %v456
        %s461 = sld [smem:[#allocation4 + $0xb]]
        %v462 = vstv %s461
        %v463 = vmul.f32 %v404, %v462
        %v464 = vmul.f32 %v405, %v462
        %467 = vrot.lane.b32.xlu0 %v463, 127
        %v468 = vpop.permute.xlu0 %467
        %469 = vrot.lane.b32.xlu0 %v464, 127
        %v470 = vpop.permute.xlu0 %469
        %v473 = vadd.f32 %v417, %v468
        %v474 = vadd.f32 %v418, %v470
        %s475 = sld [smem:[#allocation4 + $0xc]]
        %v476 = vstv %s475
        %v477 = vmul.f32 %v404, %v476
        %v478 = vmul.f32 %v405, %v476
        %481 = vrot.lane.b32.xlu0 %v477, 123
        %v482 = vpop.permute.xlu0 %481
        %483 = vrot.lane.b32.xlu0 %v478, 123
        %v484 = vpop.permute.xlu0 %483
        %v487 = vadd.f32 %v431, %v482
        %v488 = vadd.f32 %v432, %v484
        %s489 = sld [smem:[#allocation4 + $0xd]]
        %v490 = vstv %s489
        %v491 = vmul.f32 %v404, %v490
        %v492 = vmul.f32 %v405, %v490
        %495 = vrot.lane.b32.xlu0 %v491, 123
        %v496 = vpop.permute.xlu0 %495
        %497 = vrot.lane.b32.xlu0 %v492, 123
        %v498 = vpop.permute.xlu0 %497
        %v501 = vadd.f32 %v445, %v496
        %v502 = vadd.f32 %v446, %v498
        %s503 = sld [smem:[#allocation4 + $0xe]]
        %v504 = vld [vmem:[#allocation2 + $0x2] sm:$0xff]
        %v505 = vld [vmem:[#allocation2 + $0xa] sm:$0xff]
        %v506 = vstv %s503
        %v507 = vmul.f32 %v504, %v506
        %v508 = vmul.f32 %v505, %v506
        %511 = vrot.lane.b32.xlu0 %v507, 2
        %v512 = vpop.permute.xlu0 %511
        %513 = vrot.lane.b32.xlu0 %v508, 2
        %v514 = vpop.permute.xlu0 %513
        %v517 = vadd.f32 %v459, %v512
        %v518 = vadd.f32 %v460, %v514
        %s519 = sld [smem:[#allocation4 + $0xf]]
        %v520 = vstv %s519
        %v521 = vmul.f32 %v504, %v520
        %v522 = vmul.f32 %v505, %v520
        %525 = vrot.lane.b32.xlu0 %v521, 2
        %v526 = vpop.permute.xlu0 %525
        %527 = vrot.lane.b32.xlu0 %v522, 2
        %v528 = vpop.permute.xlu0 %527
        %v531 = vadd.f32 %v473, %v526
        %v532 = vadd.f32 %v474, %v528
        %s533 = sld [smem:[#allocation4 + $0x10]]
        %v534 = vstv %s533
        %v535 = vmul.f32 %v504, %v534
        %v536 = vmul.f32 %v505, %v534
        %539 = vrot.lane.b32.xlu0 %v535, 126
        %v540 = vpop.permute.xlu0 %539
        %541 = vrot.lane.b32.xlu0 %v536, 126
        %v542 = vpop.permute.xlu0 %541
        %v545 = vadd.f32 %v487, %v540
        %v546 = vadd.f32 %v488, %v542
        %s547 = sld [smem:[#allocation4 + $0x11]]
        %v548 = vstv %s547
        %v549 = vmul.f32 %v504, %v548
        %v550 = vmul.f32 %v505, %v548
        %553 = vrot.lane.b32.xlu0 %v549, 126
        %v554 = vpop.permute.xlu0 %553
        %555 = vrot.lane.b32.xlu0 %v550, 126
        %v556 = vpop.permute.xlu0 %555
        %v559 = vadd.f32 %v501, %v554
        %v560 = vadd.f32 %v502, %v556
        %s561 = sld [smem:[#allocation4 + $0x12]]
        %v562 = vstv %s561
        %v563 = vmul.f32 %v504, %v562
        %v564 = vmul.f32 %v505, %v562
        %567 = vrot.lane.b32.xlu0 %v563, 126
        %v568 = vpop.permute.xlu0 %567
        %569 = vrot.lane.b32.xlu0 %v564, 126
        %v570 = vpop.permute.xlu0 %569
        %v573 = vadd.f32 %v517, %v568
        %v574 = vadd.f32 %v518, %v570
        %s575 = sld [smem:[#allocation4 + $0x13]]
        %v576 = vstv %s575
        %v577 = vmul.f32 %v504, %v576
        %v578 = vmul.f32 %v505, %v576
        %581 = vrot.lane.b32.xlu0 %v577, 126
        %v582 = vpop.permute.xlu0 %581
        %583 = vrot.lane.b32.xlu0 %v578, 126
        %v584 = vpop.permute.xlu0 %583
        %v587 = vadd.f32 %v531, %v582
        %v588 = vadd.f32 %v532, %v584
        %s589 = sld [smem:[#allocation4 + $0x14]]
        %v590 = vstv %s589
        %v591 = vmul.f32 %v504, %v590
        %v592 = vmul.f32 %v505, %v590
        %595 = vrot.lane.b32.xlu0 %v591, 122
        %v596 = vpop.permute.xlu0 %595
        %597 = vrot.lane.b32.xlu0 %v592, 122
        %v598 = vpop.permute.xlu0 %597
        %v601 = vadd.f32 %v545, %v596
        %v602 = vadd.f32 %v546, %v598
        %s603 = sld [smem:[#allocation4 + $0x15]]
        %v604 = vld [vmem:[#allocation2 + $0x3] sm:$0xff]
        %v605 = vld [vmem:[#allocation2 + $0xb] sm:$0xff]
        %v606 = vstv %s603
        %v607 = vmul.f32 %v604, %v606
        %v608 = vmul.f32 %v605, %v606
        %611 = vrot.lane.b32.xlu0 %v607, 1
        %v612 = vpop.permute.xlu0 %611
        %613 = vrot.lane.b32.xlu0 %v608, 1
        %v614 = vpop.permute.xlu0 %613
        %v617 = vadd.f32 %v559, %v612
        %v618 = vadd.f32 %v560, %v614
        %s619 = sld [smem:[#allocation4 + $0x16]]
        %v620 = vstv %s619
        %v621 = vmul.f32 %v604, %v620
        %v622 = vmul.f32 %v605, %v620
        %625 = vrot.lane.b32.xlu0 %v621, 1
        %v626 = vpop.permute.xlu0 %625
        %627 = vrot.lane.b32.xlu0 %v622, 1
        %v628 = vpop.permute.xlu0 %627
        %v631 = vadd.f32 %v573, %v626
        %v632 = vadd.f32 %v574, %v628
        %s633 = sld [smem:[#allocation4 + $0x17]]
        %v634 = vstv %s633
        %v635 = vmul.f32 %v604, %v634
        %v636 = vmul.f32 %v605, %v634
        %639 = vrot.lane.b32.xlu0 %v635, 1
        %v640 = vpop.permute.xlu0 %639
        %641 = vrot.lane.b32.xlu0 %v636, 1
        %v642 = vpop.permute.xlu0 %641
        %v645 = vadd.f32 %v587, %v640
        %v646 = vadd.f32 %v588, %v642
        %s647 = sld [smem:[#allocation4 + $0x18]]
        %v648 = vstv %s647
        %v649 = vmul.f32 %v604, %v648
        %v650 = vmul.f32 %v605, %v648
        %653 = vrot.lane.b32.xlu0 %v649, 125
        %v654 = vpop.permute.xlu0 %653
        %655 = vrot.lane.b32.xlu0 %v650, 125
        %v656 = vpop.permute.xlu0 %655
        %v659 = vadd.f32 %v601, %v654
        %v660 = vadd.f32 %v602, %v656
        %s661 = sld [smem:[#allocation4 + $0x19]]
        %v662 = vstv %s661
        %v663 = vmul.f32 %v604, %v662
        %v664 = vmul.f32 %v605, %v662
        %667 = vrot.lane.b32.xlu0 %v663, 125
        %v668 = vpop.permute.xlu0 %667
        %669 = vrot.lane.b32.xlu0 %v664, 125
        %v670 = vpop.permute.xlu0 %669
        %v673 = vadd.f32 %v617, %v668
        %v674 = vadd.f32 %v618, %v670
        %s675 = sld [smem:[#allocation4 + $0x1a]]
        %v676 = vstv %s675
        %v677 = vmul.f32 %v604, %v676
        %v678 = vmul.f32 %v605, %v676
        %681 = vrot.lane.b32.xlu0 %v677, 125
        %v682 = vpop.permute.xlu0 %681
        %683 = vrot.lane.b32.xlu0 %v678, 125
        %v684 = vpop.permute.xlu0 %683
        %v687 = vadd.f32 %v631, %v682
        %v688 = vadd.f32 %v632, %v684
        %s689 = sld [smem:[#allocation4 + $0x1b]]
        %v690 = vstv %s689
        %v691 = vmul.f32 %v604, %v690
        %v692 = vmul.f32 %v605, %v690
        %695 = vrot.lane.b32.xlu0 %v691, 125
        %v696 = vpop.permute.xlu0 %695
        %697 = vrot.lane.b32.xlu0 %v692, 125
        %v698 = vpop.permute.xlu0 %697
        %v701 = vadd.f32 %v645, %v696
        %v702 = vadd.f32 %v646, %v698
        %s703 = sld [smem:[#allocation4 + $0x1c]]
        %v704 = vld [vmem:[#allocation2 + $0x4] sm:$0xff]
        %v705 = vld [vmem:[#allocation2 + $0xc] sm:$0xff]
        %v706 = vstv %s703
        %v707 = vmul.f32 %v704, %v706
        %v708 = vmul.f32 %v705, %v706
        %v709 = vadd.f32 %v659, %v707
        %v710 = vadd.f32 %v660, %v708
        %s711 = sld [smem:[#allocation4 + $0x1d]]
        %v712 = vstv %s711
        %v713 = vmul.f32 %v704, %v712
        %v714 = vmul.f32 %v705, %v712
        %v715 = vadd.f32 %v673, %v713
        %v716 = vadd.f32 %v674, %v714
        %s717 = sld [smem:[#allocation4 + $0x1e]]
        %v718 = vstv %s717
        %v719 = vmul.f32 %v704, %v718
        %v720 = vmul.f32 %v705, %v718
        %v721 = vadd.f32 %v687, %v719
        %v722 = vadd.f32 %v688, %v720
        %s723 = sld [smem:[#allocation4 + $0x1f]]
        %v724 = vstv %s723
        %v725 = vmul.f32 %v704, %v724
        %v726 = vmul.f32 %v705, %v724
        %v727 = vadd.f32 %v701, %v725
        %v728 = vadd.f32 %v702, %v726
        %s729 = sld [smem:[#allocation4 + $0x20]]
        %v730 = vstv %s729
        %v731 = vmul.f32 %v704, %v730
        %v732 = vmul.f32 %v705, %v730
        %735 = vrot.lane.b32.xlu0 %v731, 124
        %v736 = vpop.permute.xlu0 %735
        %737 = vrot.lane.b32.xlu0 %v732, 124
        %v738 = vpop.permute.xlu0 %737
        %v741 = vadd.f32 %v709, %v736
        %v742 = vadd.f32 %v710, %v738
        %s743 = sld [smem:[#allocation4 + $0x21]]
        %v744 = vstv %s743
        %v745 = vmul.f32 %v704, %v744
        %v746 = vmul.f32 %v705, %v744
        %749 = vrot.lane.b32.xlu0 %v745, 124
        %v750 = vpop.permute.xlu0 %749
        %751 = vrot.lane.b32.xlu0 %v746, 124
        %v752 = vpop.permute.xlu0 %751
        %v755 = vadd.f32 %v715, %v750
        %v756 = vadd.f32 %v716, %v752
        %s757 = sld [smem:[#allocation4 + $0x22]]
        %v758 = vstv %s757
        %v759 = vmul.f32 %v704, %v758
        %v760 = vmul.f32 %v705, %v758
        %763 = vrot.lane.b32.xlu0 %v759, 124
        %v764 = vpop.permute.xlu0 %763
        %765 = vrot.lane.b32.xlu0 %v760, 124
        %v766 = vpop.permute.xlu0 %765
        %v769 = vadd.f32 %v721, %v764
        %v770 = vadd.f32 %v722, %v766
        %s771 = sld [smem:[#allocation4 + $0x23]]
        %v772 = vld [vmem:[#allocation2 + $0x5] sm:$0xff]
        %v773 = vld [vmem:[#allocation2 + $0xd] sm:$0xff]
        %v774 = vstv %s771
        %v775 = vmul.f32 %v772, %v774
        %v776 = vmul.f32 %v773, %v774
        %779 = vrot.lane.b32.xlu0 %v775, 3
        %v780 = vpop.permute.xlu0 %779
        %781 = vrot.lane.b32.xlu0 %v776, 3
        %v782 = vpop.permute.xlu0 %781
        %v785 = vadd.f32 %v727, %v780
        %v786 = vadd.f32 %v728, %v782
        %s787 = sld [smem:[#allocation4 + $0x24]]
        %v788 = vstv %s787
        %v789 = vmul.f32 %v772, %v788
        %v790 = vmul.f32 %v773, %v788
        %793 = vrot.lane.b32.xlu0 %v789, 127
        %v794 = vpop.permute.xlu0 %793
        %795 = vrot.lane.b32.xlu0 %v790, 127
        %v796 = vpop.permute.xlu0 %795
        %v799 = vadd.f32 %v741, %v794
        %v800 = vadd.f32 %v742, %v796
        %s801 = sld [smem:[#allocation4 + $0x25]]
        %v802 = vstv %s801
        %v803 = vmul.f32 %v772, %v802
        %v804 = vmul.f32 %v773, %v802
        %807 = vrot.lane.b32.xlu0 %v803, 127
        %v808 = vpop.permute.xlu0 %807
        %809 = vrot.lane.b32.xlu0 %v804, 127
        %v810 = vpop.permute.xlu0 %809
        %v813 = vadd.f32 %v755, %v808
        %v814 = vadd.f32 %v756, %v810
        %s815 = sld [smem:[#allocation4 + $0x26]]
        %v816 = vstv %s815
        %v817 = vmul.f32 %v772, %v816
        %v818 = vmul.f32 %v773, %v816
        %821 = vrot.lane.b32.xlu0 %v817, 127
        %v822 = vpop.permute.xlu0 %821
        %823 = vrot.lane.b32.xlu0 %v818, 127
        %v824 = vpop.permute.xlu0 %823
        %v827 = vadd.f32 %v769, %v822
        %v828 = vadd.f32 %v770, %v824
        %s829 = sld [smem:[#allocation4 + $0x27]]
        %v830 = vstv %s829
        %v831 = vmul.f32 %v772, %v830
        %v832 = vmul.f32 %v773, %v830
        %835 = vrot.lane.b32.xlu0 %v831, 127
        %v836 = vpop.permute.xlu0 %835
        %837 = vrot.lane.b32.xlu0 %v832, 127
        %v838 = vpop.permute.xlu0 %837
        %v841 = vadd.f32 %v785, %v836
        %v842 = vadd.f32 %v786, %v838
        %s843 = sld [smem:[#allocation4 + $0x28]]
        %v844 = vstv %s843
        %v845 = vmul.f32 %v772, %v844
        %v846 = vmul.f32 %v773, %v844
        %849 = vrot.lane.b32.xlu0 %v845, 123
        %v850 = vpop.permute.xlu0 %849
        %851 = vrot.lane.b32.xlu0 %v846, 123
        %v852 = vpop.permute.xlu0 %851
        %v855 = vadd.f32 %v799, %v850
        %v856 = vadd.f32 %v800, %v852
        %s857 = sld [smem:[#allocation4 + $0x29]]
        %v858 = vstv %s857
        %v859 = vmul.f32 %v772, %v858
        %v860 = vmul.f32 %v773, %v858
        %863 = vrot.lane.b32.xlu0 %v859, 123
        %v864 = vpop.permute.xlu0 %863
        %865 = vrot.lane.b32.xlu0 %v860, 123
        %v866 = vpop.permute.xlu0 %865
        %v869 = vadd.f32 %v813, %v864
        %v870 = vadd.f32 %v814, %v866
        %s871 = sld [smem:[#allocation4 + $0x2a]]
        %v872 = vld [vmem:[#allocation2 + $0x6] sm:$0xff]
        %v873 = vld [vmem:[#allocation2 + $0xe] sm:$0xff]
        %v874 = vstv %s871
        %v875 = vmul.f32 %v872, %v874
        %v876 = vmul.f32 %v873, %v874
        %879 = vrot.lane.b32.xlu0 %v875, 2
        %v880 = vpop.permute.xlu0 %879
        %881 = vrot.lane.b32.xlu0 %v876, 2
        %v882 = vpop.permute.xlu0 %881
        %v885 = vadd.f32 %v827, %v880
        %v886 = vadd.f32 %v828, %v882
        %s887 = sld [smem:[#allocation4 + $0x2b]]
        %v888 = vstv %s887
        %v889 = vmul.f32 %v872, %v888
        %v890 = vmul.f32 %v873, %v888
        %893 = vrot.lane.b32.xlu0 %v889, 2
        %v894 = vpop.permute.xlu0 %893
        %895 = vrot.lane.b32.xlu0 %v890, 2
        %v896 = vpop.permute.xlu0 %895
        %v899 = vadd.f32 %v841, %v894
        %v900 = vadd.f32 %v842, %v896
        %s901 = sld [smem:[#allocation4 + $0x2c]]
        %v902 = vstv %s901
        %v903 = vmul.f32 %v872, %v902
        %v904 = vmul.f32 %v873, %v902
        %907 = vrot.lane.b32.xlu0 %v903, 126
        %v908 = vpop.permute.xlu0 %907
        %909 = vrot.lane.b32.xlu0 %v904, 126
        %v910 = vpop.permute.xlu0 %909
        %v913 = vadd.f32 %v855, %v908
        %v914 = vadd.f32 %v856, %v910
        %s915 = sld [smem:[#allocation4 + $0x2d]]
        %v916 = vstv %s915
        %v917 = vmul.f32 %v872, %v916
        %v918 = vmul.f32 %v873, %v916
        %921 = vrot.lane.b32.xlu0 %v917, 126
        %v922 = vpop.permute.xlu0 %921
        %923 = vrot.lane.b32.xlu0 %v918, 126
        %v924 = vpop.permute.xlu0 %923
        %v927 = vadd.f32 %v869, %v922
        %v928 = vadd.f32 %v870, %v924
        %s929 = sld [smem:[#allocation4 + $0x2e]]
        %v930 = vstv %s929
        %v931 = vmul.f32 %v872, %v930
        %v932 = vmul.f32 %v873, %v930
        %935 = vrot.lane.b32.xlu0 %v931, 126
        %v936 = vpop.permute.xlu0 %935
        %937 = vrot.lane.b32.xlu0 %v932, 126
        %v938 = vpop.permute.xlu0 %937
        %v941 = vadd.f32 %v885, %v936
        %v942 = vadd.f32 %v886, %v938
        %s943 = sld [smem:[#allocation4 + $0x2f]]
        %v944 = vstv %s943
        %v945 = vmul.f32 %v872, %v944
        %v946 = vmul.f32 %v873, %v944
        %949 = vrot.lane.b32.xlu0 %v945, 126
        %v950 = vpop.permute.xlu0 %949
        %951 = vrot.lane.b32.xlu0 %v946, 126
        %v952 = vpop.permute.xlu0 %951
        %v955 = vadd.f32 %v899, %v950
        %v956 = vadd.f32 %v900, %v952
        %s957 = sld [smem:[#allocation4 + $0x30]]
        %v958 = vstv %s957
        %v959 = vmul.f32 %v872, %v958
        %v960 = vmul.f32 %v873, %v958
        %963 = vrot.lane.b32.xlu0 %v959, 122
        %v964 = vpop.permute.xlu0 %963
        %965 = vrot.lane.b32.xlu0 %v960, 122
        %v966 = vpop.permute.xlu0 %965
        %v969 = vadd.f32 %v913, %v964
        %v970 = vadd.f32 %v914, %v966
        %s971 = sld [smem:[#allocation4 + $0x31]]
        %v972 = vld [vmem:[%s211] sm:$0xff]
        %v973 = vld [vmem:[%s211 + $0x8] sm:$0xff]
        %v974 = vstv %s971
        %v975 = vmul.f32 %v972, %v974
        %v976 = vmul.f32 %v973, %v974
        %979 = vrot.lane.b32.xlu0 %v975, 1
        %v980 = vpop.permute.xlu0 %979
        %981 = vrot.lane.b32.xlu0 %v976, 1
        %v982 = vpop.permute.xlu0 %981
        %v985 = vadd.f32 %v927, %v980
        %v986 = vadd.f32 %v928, %v982
        %s987 = sld [smem:[#allocation4 + $0x32]]
        %v988 = vstv %s987
        %v989 = vmul.f32 %v972, %v988
        %v990 = vmul.f32 %v973, %v988
        %993 = vrot.lane.b32.xlu0 %v989, 1
        %v994 = vpop.permute.xlu0 %993
        %995 = vrot.lane.b32.xlu0 %v990, 1
        %v996 = vpop.permute.xlu0 %995
        %v999 = vadd.f32 %v941, %v994
        %v1000 = vadd.f32 %v942, %v996
        %s1001 = sld [smem:[#allocation4 + $0x33]]
        %v1002 = vstv %s1001
        %v1003 = vmul.f32 %v972, %v1002
        %v1004 = vmul.f32 %v973, %v1002
        %1007 = vrot.lane.b32.xlu0 %v1003, 1
        %v1008 = vpop.permute.xlu0 %1007
        %1009 = vrot.lane.b32.xlu0 %v1004, 1
        %v1010 = vpop.permute.xlu0 %1009
        %v1013 = vadd.f32 %v955, %v1008
        %v1014 = vadd.f32 %v956, %v1010
        %s1015 = sld [smem:[#allocation4 + $0x34]]
        %v1016 = vstv %s1015
        %v1017 = vmul.f32 %v972, %v1016
        %v1018 = vmul.f32 %v973, %v1016
        %1021 = vrot.lane.b32.xlu0 %v1017, 125
        %v1022 = vpop.permute.xlu0 %1021
        %1023 = vrot.lane.b32.xlu0 %v1018, 125
        %v1024 = vpop.permute.xlu0 %1023
        %v1027 = vadd.f32 %v969, %v1022
        %v1028 = vadd.f32 %v970, %v1024
        %s1029 = sld [smem:[#allocation4 + $0x35]]
        %v1030 = vstv %s1029
        %v1031 = vmul.f32 %v972, %v1030
        %v1032 = vmul.f32 %v973, %v1030
        %1035 = vrot.lane.b32.xlu0 %v1031, 125
        %v1036 = vpop.permute.xlu0 %1035
        %1037 = vrot.lane.b32.xlu0 %v1032, 125
        %v1038 = vpop.permute.xlu0 %1037
        %v1041 = vadd.f32 %v985, %v1036
        %v1042 = vadd.f32 %v986, %v1038
        %s1043 = sld [smem:[#allocation4 + $0x36]]
        %v1044 = vstv %s1043
        %v1045 = vmul.f32 %v972, %v1044
        %v1046 = vmul.f32 %v973, %v1044
        %1049 = vrot.lane.b32.xlu0 %v1045, 125
        %v1050 = vpop.permute.xlu0 %1049
        %1051 = vrot.lane.b32.xlu0 %v1046, 125
        %v1052 = vpop.permute.xlu0 %1051
        %v1055 = vadd.f32 %v999, %v1050
        %v1056 = vadd.f32 %v1000, %v1052
        %s1057 = sld [smem:[#allocation4 + $0x37]]
        %v1058 = vstv %s1057
        %v1059 = vmul.f32 %v972, %v1058
        %v1060 = vmul.f32 %v973, %v1058
        %1063 = vrot.lane.b32.xlu0 %v1059, 125
        %v1064 = vpop.permute.xlu0 %1063
        %1065 = vrot.lane.b32.xlu0 %v1060, 125
        %v1066 = vpop.permute.xlu0 %1065
        %v1069 = vadd.f32 %v1013, %v1064
        %v1070 = vadd.f32 %v1014, %v1066
        %s1071 = sld [smem:[#allocation4 + $0x38]]
        %v1072 = vld [vmem:[%s211 + $0x1] sm:$0xff]
        %v1073 = vld [vmem:[%s211 + $0x9] sm:$0xff]
        %v1074 = vstv %s1071
        %v1075 = vmul.f32 %v1072, %v1074
        %v1076 = vmul.f32 %v1073, %v1074
        %v1077 = vadd.f32 %v1027, %v1075
        %v1078 = vadd.f32 %v1028, %v1076
        %s1079 = sld [smem:[#allocation4 + $0x39]]
        %v1080 = vstv %s1079
        %v1081 = vmul.f32 %v1072, %v1080
        %v1082 = vmul.f32 %v1073, %v1080
        %v1083 = vadd.f32 %v1041, %v1081
        %v1084 = vadd.f32 %v1042, %v1082
        %s1085 = sld [smem:[#allocation4 + $0x3a]]
        %v1086 = vstv %s1085
        %v1087 = vmul.f32 %v1072, %v1086
        %v1088 = vmul.f32 %v1073, %v1086
        %v1089 = vadd.f32 %v1055, %v1087
        %v1090 = vadd.f32 %v1056, %v1088
        %s1091 = sld [smem:[#allocation4 + $0x3b]]
        %v1092 = vstv %s1091
        %v1093 = vmul.f32 %v1072, %v1092
        %v1094 = vmul.f32 %v1073, %v1092
        %v1095 = vadd.f32 %v1069, %v1093
        %v1096 = vadd.f32 %v1070, %v1094
        %s1097 = sld [smem:[#allocation4 + $0x3c]]
        %v1098 = vstv %s1097
        %v1099 = vmul.f32 %v1072, %v1098
        %v1100 = vmul.f32 %v1073, %v1098
        %1103 = vrot.lane.b32.xlu0 %v1099, 124
        %v1104 = vpop.permute.xlu0 %1103
        %1105 = vrot.lane.b32.xlu0 %v1100, 124
        %v1106 = vpop.permute.xlu0 %1105
        %v1109 = vadd.f32 %v1077, %v1104
        %v1110 = vadd.f32 %v1078, %v1106
        %s1111 = sld [smem:[#allocation4 + $0x3d]]
        %v1112 = vstv %s1111
        %v1113 = vmul.f32 %v1072, %v1112
        %v1114 = vmul.f32 %v1073, %v1112
        %1117 = vrot.lane.b32.xlu0 %v1113, 124
        %v1118 = vpop.permute.xlu0 %1117
        %1119 = vrot.lane.b32.xlu0 %v1114, 124
        %v1120 = vpop.permute.xlu0 %1119
        %v1123 = vadd.f32 %v1083, %v1118
        %v1124 = vadd.f32 %v1084, %v1120
        %s1125 = sld [smem:[#allocation4 + $0x3e]]
        %v1126 = vstv %s1125
        %v1127 = vmul.f32 %v1072, %v1126
        %v1128 = vmul.f32 %v1073, %v1126
        %1131 = vrot.lane.b32.xlu0 %v1127, 124
        %v1132 = vpop.permute.xlu0 %1131
        %1133 = vrot.lane.b32.xlu0 %v1128, 124
        %v1134 = vpop.permute.xlu0 %1133
        %v1137 = vadd.f32 %v1089, %v1132
        %v1138 = vadd.f32 %v1090, %v1134
        %s1139 = sld [smem:[#allocation4 + $0x3f]]
        %v1140 = vld [vmem:[%s211 + $0x2] sm:$0xff]
        %v1141 = vld [vmem:[%s211 + $0xa] sm:$0xff]
        %v1142 = vstv %s1139
        %v1143 = vmul.f32 %v1140, %v1142
        %v1144 = vmul.f32 %v1141, %v1142
        %1147 = vrot.lane.b32.xlu0 %v1143, 3
        %v1148 = vpop.permute.xlu0 %1147
        %1149 = vrot.lane.b32.xlu0 %v1144, 3
        %v1150 = vpop.permute.xlu0 %1149
        %v1153 = vadd.f32 %v1095, %v1148
        %v1154 = vadd.f32 %v1096, %v1150
        %s1155 = sld [smem:[#allocation4 + $0x40]]
        %v1156 = vstv %s1155
        %v1157 = vmul.f32 %v1140, %v1156
        %v1158 = vmul.f32 %v1141, %v1156
        %1161 = vrot.lane.b32.xlu0 %v1157, 127
        %v1162 = vpop.permute.xlu0 %1161
        %1163 = vrot.lane.b32.xlu0 %v1158, 127
        %v1164 = vpop.permute.xlu0 %1163
        %v1167 = vadd.f32 %v1109, %v1162
        %v1168 = vadd.f32 %v1110, %v1164
        %s1169 = sld [smem:[#allocation4 + $0x41]]
        %v1170 = vstv %s1169
        %v1171 = vmul.f32 %v1140, %v1170
        %v1172 = vmul.f32 %v1141, %v1170
        %1175 = vrot.lane.b32.xlu0 %v1171, 127
        %v1176 = vpop.permute.xlu0 %1175
        %1177 = vrot.lane.b32.xlu0 %v1172, 127
        %v1178 = vpop.permute.xlu0 %1177
        %v1181 = vadd.f32 %v1123, %v1176
        %v1182 = vadd.f32 %v1124, %v1178
        %s1183 = sld [smem:[#allocation4 + $0x42]]
        %v1184 = vstv %s1183
        %v1185 = vmul.f32 %v1140, %v1184
        %v1186 = vmul.f32 %v1141, %v1184
        %1189 = vrot.lane.b32.xlu0 %v1185, 127
        %v1190 = vpop.permute.xlu0 %1189
        %1191 = vrot.lane.b32.xlu0 %v1186, 127
        %v1192 = vpop.permute.xlu0 %1191
        %v1195 = vadd.f32 %v1137, %v1190
        %v1196 = vadd.f32 %v1138, %v1192
        %s1197 = sld [smem:[#allocation4 + $0x43]]
        %v1198 = vstv %s1197
        %v1199 = vmul.f32 %v1140, %v1198
        %v1200 = vmul.f32 %v1141, %v1198
        %1203 = vrot.lane.b32.xlu0 %v1199, 127
        %v1204 = vpop.permute.xlu0 %1203
        %1205 = vrot.lane.b32.xlu0 %v1200, 127
        %v1206 = vpop.permute.xlu0 %1205
        %v1209 = vadd.f32 %v1153, %v1204
        %v1210 = vadd.f32 %v1154, %v1206
        %s1211 = sld [smem:[#allocation4 + $0x44]]
        %v1212 = vstv %s1211
        %v1213 = vmul.f32 %v1140, %v1212
        %v1214 = vmul.f32 %v1141, %v1212
        %1217 = vrot.lane.b32.xlu0 %v1213, 123
        %v1218 = vpop.permute.xlu0 %1217
        %1219 = vrot.lane.b32.xlu0 %v1214, 123
        %v1220 = vpop.permute.xlu0 %1219
        %v1223 = vadd.f32 %v1167, %v1218
        %v1224 = vadd.f32 %v1168, %v1220
        %s1225 = sld [smem:[#allocation4 + $0x45]]
        %v1226 = vstv %s1225
        %v1227 = vmul.f32 %v1140, %v1226
        %v1228 = vmul.f32 %v1141, %v1226
        %1231 = vrot.lane.b32.xlu0 %v1227, 123
        %v1232 = vpop.permute.xlu0 %1231
        %1233 = vrot.lane.b32.xlu0 %v1228, 123
        %v1234 = vpop.permute.xlu0 %1233
        %v1237 = vadd.f32 %v1181, %v1232
        %v1238 = vadd.f32 %v1182, %v1234
        %s1239 = sld [smem:[#allocation4 + $0x46]]
        %v1240 = vld [vmem:[%s211 + $0x3] sm:$0xff]
        %v1241 = vld [vmem:[%s211 + $0xb] sm:$0xff]
        %v1242 = vstv %s1239
        %v1243 = vmul.f32 %v1240, %v1242
        %v1244 = vmul.f32 %v1241, %v1242
        %1247 = vrot.lane.b32.xlu0 %v1243, 2
        %v1248 = vpop.permute.xlu0 %1247
        %1249 = vrot.lane.b32.xlu0 %v1244, 2
        %v1250 = vpop.permute.xlu0 %1249
        %v1253 = vadd.f32 %v1195, %v1248
        %v1254 = vadd.f32 %v1196, %v1250
        %s1255 = sld [smem:[#allocation4 + $0x47]]
        %v1256 = vstv %s1255
        %v1257 = vmul.f32 %v1240, %v1256
        %v1258 = vmul.f32 %v1241, %v1256
        %1261 = vrot.lane.b32.xlu0 %v1257, 2
        %v1262 = vpop.permute.xlu0 %1261
        %1263 = vrot.lane.b32.xlu0 %v1258, 2
        %v1264 = vpop.permute.xlu0 %1263
        %v1267 = vadd.f32 %v1209, %v1262
        %v1268 = vadd.f32 %v1210, %v1264
        %s1269 = sld [smem:[#allocation4 + $0x48]]
        %v1270 = vstv %s1269
        %v1271 = vmul.f32 %v1240, %v1270
        %v1272 = vmul.f32 %v1241, %v1270
        %1275 = vrot.lane.b32.xlu0 %v1271, 126
        %v1276 = vpop.permute.xlu0 %1275
        %1277 = vrot.lane.b32.xlu0 %v1272, 126
        %v1278 = vpop.permute.xlu0 %1277
        %v1281 = vadd.f32 %v1223, %v1276
        %v1282 = vadd.f32 %v1224, %v1278
        %s1283 = sld [smem:[#allocation4 + $0x49]]
        %v1284 = vstv %s1283
        %v1285 = vmul.f32 %v1240, %v1284
        %v1286 = vmul.f32 %v1241, %v1284
        %1289 = vrot.lane.b32.xlu0 %v1285, 126
        %v1290 = vpop.permute.xlu0 %1289
        %1291 = vrot.lane.b32.xlu0 %v1286, 126
        %v1292 = vpop.permute.xlu0 %1291
        %v1295 = vadd.f32 %v1237, %v1290
        %v1296 = vadd.f32 %v1238, %v1292
        %s1297 = sld [smem:[#allocation4 + $0x4a]]
        %v1298 = vstv %s1297
        %v1299 = vmul.f32 %v1240, %v1298
        %v1300 = vmul.f32 %v1241, %v1298
        %1303 = vrot.lane.b32.xlu0 %v1299, 126
        %v1304 = vpop.permute.xlu0 %1303
        %1305 = vrot.lane.b32.xlu0 %v1300, 126
        %v1306 = vpop.permute.xlu0 %1305
        %v1309 = vadd.f32 %v1253, %v1304
        %v1310 = vadd.f32 %v1254, %v1306
        %s1311 = sld [smem:[#allocation4 + $0x4b]]
        %v1312 = vstv %s1311
        %v1313 = vmul.f32 %v1240, %v1312
        %v1314 = vmul.f32 %v1241, %v1312
        %1317 = vrot.lane.b32.xlu0 %v1313, 126
        %v1318 = vpop.permute.xlu0 %1317
        %1319 = vrot.lane.b32.xlu0 %v1314, 126
        %v1320 = vpop.permute.xlu0 %1319
        %v1323 = vadd.f32 %v1267, %v1318
        %v1324 = vadd.f32 %v1268, %v1320
        %s1325 = sld [smem:[#allocation4 + $0x4c]]
        %v1326 = vstv %s1325
        %v1327 = vmul.f32 %v1240, %v1326
        %v1328 = vmul.f32 %v1241, %v1326
        %1331 = vrot.lane.b32.xlu0 %v1327, 122
        %v1332 = vpop.permute.xlu0 %1331
        %1333 = vrot.lane.b32.xlu0 %v1328, 122
        %v1334 = vpop.permute.xlu0 %1333
        %v1337 = vadd.f32 %v1281, %v1332
        %v1338 = vadd.f32 %v1282, %v1334
        %s1339 = sld [smem:[#allocation4 + $0x4d]]
        %v1340 = vld [vmem:[%s211 + $0x4] sm:$0xff]
        %v1341 = vld [vmem:[%s211 + $0xc] sm:$0xff]
        %v1342 = vstv %s1339
        %v1343 = vmul.f32 %v1340, %v1342
        %v1344 = vmul.f32 %v1341, %v1342
        %1347 = vrot.lane.b32.xlu0 %v1343, 1
        %v1348 = vpop.permute.xlu0 %1347
        %1349 = vrot.lane.b32.xlu0 %v1344, 1
        %v1350 = vpop.permute.xlu0 %1349
        %v1353 = vadd.f32 %v1295, %v1348
        %v1354 = vadd.f32 %v1296, %v1350
        %s1355 = sld [smem:[#allocation4 + $0x4e]]
        %v1356 = vstv %s1355
        %v1357 = vmul.f32 %v1340, %v1356
        %v1358 = vmul.f32 %v1341, %v1356
        %1361 = vrot.lane.b32.xlu0 %v1357, 1
        %v1362 = vpop.permute.xlu0 %1361
        %1363 = vrot.lane.b32.xlu0 %v1358, 1
        %v1364 = vpop.permute.xlu0 %1363
        %v1367 = vadd.f32 %v1309, %v1362
        %v1368 = vadd.f32 %v1310, %v1364
        %s1369 = sld [smem:[#allocation4 + $0x4f]]
        %v1370 = vstv %s1369
        %v1371 = vmul.f32 %v1340, %v1370
        %v1372 = vmul.f32 %v1341, %v1370
        %1375 = vrot.lane.b32.xlu0 %v1371, 1
        %v1376 = vpop.permute.xlu0 %1375
        %1377 = vrot.lane.b32.xlu0 %v1372, 1
        %v1378 = vpop.permute.xlu0 %1377
        %v1381 = vadd.f32 %v1323, %v1376
        %v1382 = vadd.f32 %v1324, %v1378
        %s1383 = sld [smem:[#allocation4 + $0x50]]
        %v1384 = vstv %s1383
        %v1385 = vmul.f32 %v1340, %v1384
        %v1386 = vmul.f32 %v1341, %v1384
        %1389 = vrot.lane.b32.xlu0 %v1385, 125
        %v1390 = vpop.permute.xlu0 %1389
        %1391 = vrot.lane.b32.xlu0 %v1386, 125
        %v1392 = vpop.permute.xlu0 %1391
        %v1395 = vadd.f32 %v1337, %v1390
        %v1396 = vadd.f32 %v1338, %v1392
        %s1397 = sld [smem:[#allocation4 + $0x51]]
        %v1398 = vstv %s1397
        %v1399 = vmul.f32 %v1340, %v1398
        %v1400 = vmul.f32 %v1341, %v1398
        %1403 = vrot.lane.b32.xlu0 %v1399, 125
        %v1404 = vpop.permute.xlu0 %1403
        %1405 = vrot.lane.b32.xlu0 %v1400, 125
        %v1406 = vpop.permute.xlu0 %1405
        %v1409 = vadd.f32 %v1353, %v1404
        %v1410 = vadd.f32 %v1354, %v1406
        %s1411 = sld [smem:[#allocation4 + $0x52]]
        %v1412 = vstv %s1411
        %v1413 = vmul.f32 %v1340, %v1412
        %v1414 = vmul.f32 %v1341, %v1412
        %1417 = vrot.lane.b32.xlu0 %v1413, 125
        %v1418 = vpop.permute.xlu0 %1417
        %1419 = vrot.lane.b32.xlu0 %v1414, 125
        %v1420 = vpop.permute.xlu0 %1419
        %v1423 = vadd.f32 %v1367, %v1418
        %v1424 = vadd.f32 %v1368, %v1420
        %s1425 = sld [smem:[#allocation4 + $0x53]]
        %v1426 = vstv %s1425
        %v1427 = vmul.f32 %v1340, %v1426
        %v1428 = vmul.f32 %v1341, %v1426
        %1431 = vrot.lane.b32.xlu0 %v1427, 125
        %v1432 = vpop.permute.xlu0 %1431
        %1433 = vrot.lane.b32.xlu0 %v1428, 125
        %v1434 = vpop.permute.xlu0 %1433
        %v1437 = vadd.f32 %v1381, %v1432
        %v1438 = vadd.f32 %v1382, %v1434
        %s1439 = sld [smem:[#allocation4 + $0x54]]
        %v1440 = vld [vmem:[%s211 + $0x5] sm:$0xff]
        %v1441 = vld [vmem:[%s211 + $0xd] sm:$0xff]
        %v1442 = vstv %s1439
        %v1443 = vmul.f32 %v1440, %v1442
        %v1444 = vmul.f32 %v1441, %v1442
        %v1445 = vadd.f32 %v1395, %v1443
        %v1446 = vadd.f32 %v1396, %v1444
        %s1447 = sld [smem:[#allocation4 + $0x55]]
        %v1448 = vstv %s1447
        %v1449 = vmul.f32 %v1440, %v1448
        %v1450 = vmul.f32 %v1441, %v1448
        %v1451 = vadd.f32 %v1409, %v1449
        %v1452 = vadd.f32 %v1410, %v1450
        %s1453 = sld [smem:[#allocation4 + $0x56]]
        %v1454 = vstv %s1453
        %v1455 = vmul.f32 %v1440, %v1454
        %v1456 = vmul.f32 %v1441, %v1454
        %v1457 = vadd.f32 %v1423, %v1455
        %v1458 = vadd.f32 %v1424, %v1456
        %s1459 = sld [smem:[#allocation4 + $0x57]]
        %v1460 = vstv %s1459
        %v1461 = vmul.f32 %v1440, %v1460
        %v1462 = vmul.f32 %v1441, %v1460
        %v1463 = vadd.f32 %v1437, %v1461
        %v1464 = vadd.f32 %v1438, %v1462
        %s1465 = sld [smem:[#allocation4 + $0x58]]
        %v1466 = vstv %s1465
        %v1467 = vmul.f32 %v1440, %v1466
        %v1468 = vmul.f32 %v1441, %v1466
        %1471 = vrot.lane.b32.xlu0 %v1467, 124
        %v1472 = vpop.permute.xlu0 %1471
        %1473 = vrot.lane.b32.xlu0 %v1468, 124
        %v1474 = vpop.permute.xlu0 %1473
        %v1477 = vadd.f32 %v1445, %v1472
        %v1478 = vadd.f32 %v1446, %v1474
        %s1479 = sld [smem:[#allocation4 + $0x59]]
        %v1480 = vstv %s1479
        %v1481 = vmul.f32 %v1440, %v1480
        %v1482 = vmul.f32 %v1441, %v1480
        %1485 = vrot.lane.b32.xlu0 %v1481, 124
        %v1486 = vpop.permute.xlu0 %1485
        %1487 = vrot.lane.b32.xlu0 %v1482, 124
        %v1488 = vpop.permute.xlu0 %1487
        %v1491 = vadd.f32 %v1451, %v1486
        %v1492 = vadd.f32 %v1452, %v1488
        %s1493 = sld [smem:[#allocation4 + $0x5a]]
        %v1494 = vstv %s1493
        %v1495 = vmul.f32 %v1440, %v1494
        %v1496 = vmul.f32 %v1441, %v1494
        %1499 = vrot.lane.b32.xlu0 %v1495, 124
        %v1500 = vpop.permute.xlu0 %1499
        %1501 = vrot.lane.b32.xlu0 %v1496, 124
        %v1502 = vpop.permute.xlu0 %1501
        %v1505 = vadd.f32 %v1457, %v1500
        %v1506 = vadd.f32 %v1458, %v1502
        %s1507 = sld [smem:[#allocation4 + $0x5b]]
        %v1508 = vld [vmem:[%s211 + $0x6] sm:$0xff]
        %v1509 = vld [vmem:[%s211 + $0xe] sm:$0xff]
        %v1510 = vstv %s1507
        %v1511 = vmul.f32 %v1508, %v1510
        %v1512 = vmul.f32 %v1509, %v1510
        %1515 = vrot.lane.b32.xlu0 %v1511, 3
        %v1516 = vpop.permute.xlu0 %1515
        %1517 = vrot.lane.b32.xlu0 %v1512, 3
        %v1518 = vpop.permute.xlu0 %1517
        %v1521 = vadd.f32 %v1463, %v1516
        %v1522 = vadd.f32 %v1464, %v1518
        %s1523 = sld [smem:[#allocation4 + $0x5c]]
        %v1524 = vstv %s1523
        %v1525 = vmul.f32 %v1508, %v1524
        %v1526 = vmul.f32 %v1509, %v1524
        %1529 = vrot.lane.b32.xlu0 %v1525, 127
        %v1530 = vpop.permute.xlu0 %1529
        %1531 = vrot.lane.b32.xlu0 %v1526, 127
        %v1532 = vpop.permute.xlu0 %1531
        %v1535 = vadd.f32 %v1477, %v1530
        %v1536 = vadd.f32 %v1478, %v1532
        %s1537 = sld [smem:[#allocation4 + $0x5d]]
        %v1538 = vstv %s1537
        %v1539 = vmul.f32 %v1508, %v1538
        %v1540 = vmul.f32 %v1509, %v1538
        %1543 = vrot.lane.b32.xlu0 %v1539, 127
        %v1544 = vpop.permute.xlu0 %1543
        %1545 = vrot.lane.b32.xlu0 %v1540, 127
        %v1546 = vpop.permute.xlu0 %1545
        %v1549 = vadd.f32 %v1491, %v1544
        %v1550 = vadd.f32 %v1492, %v1546
        %s1551 = sld [smem:[#allocation4 + $0x5e]]
        %v1552 = vstv %s1551
        %v1553 = vmul.f32 %v1508, %v1552
        %v1554 = vmul.f32 %v1509, %v1552
        %1557 = vrot.lane.b32.xlu0 %v1553, 127
        %v1558 = vpop.permute.xlu0 %1557
        %1559 = vrot.lane.b32.xlu0 %v1554, 127
        %v1560 = vpop.permute.xlu0 %1559
        %v1563 = vadd.f32 %v1505, %v1558
        %v1564 = vadd.f32 %v1506, %v1560
        %s1565 = sld [smem:[#allocation4 + $0x5f]]
        %v1566 = vstv %s1565
        %v1567 = vmul.f32 %v1508, %v1566
        %v1568 = vmul.f32 %v1509, %v1566
        %1571 = vrot.lane.b32.xlu0 %v1567, 127
        %v1572 = vpop.permute.xlu0 %1571
        %1573 = vrot.lane.b32.xlu0 %v1568, 127
        %v1574 = vpop.permute.xlu0 %1573
        %v1577 = vadd.f32 %v1521, %v1572
        %v1578 = vadd.f32 %v1522, %v1574
        %s1579 = sld [smem:[#allocation4 + $0x60]]
        %v1580 = vstv %s1579
        %v1581 = vmul.f32 %v1508, %v1580
        %v1582 = vmul.f32 %v1509, %v1580
        %1585 = vrot.lane.b32.xlu0 %v1581, 123
        %v1586 = vpop.permute.xlu0 %1585
        %1587 = vrot.lane.b32.xlu0 %v1582, 123
        %v1588 = vpop.permute.xlu0 %1587
        %v1591 = vadd.f32 %v1535, %v1586
        %v1592 = vadd.f32 %v1536, %v1588
        %s1593 = sld [smem:[#allocation4 + $0x61]]
        %v1594 = vstv %s1593
        %v1595 = vmul.f32 %v1508, %v1594
        %v1596 = vmul.f32 %v1509, %v1594
        %1599 = vrot.lane.b32.xlu0 %v1595, 123
        %v1600 = vpop.permute.xlu0 %1599
        %1601 = vrot.lane.b32.xlu0 %v1596, 123
        %v1602 = vpop.permute.xlu0 %1601
        %v1605 = vadd.f32 %v1549, %v1600
        %v1606 = vadd.f32 %v1550, %v1602
        %1609 = vrot.lane.b32.xlu0 %v1605, 127
        %v1610 = vpop.permute.xlu0 %1609
        %1611 = vrot.lane.b32.xlu0 %v1606, 127
        %v1612 = vpop.permute.xlu0 %1611
        %v1615 = vadd.f32 %v1591, %v1610
        %v1616 = vadd.f32 %v1592, %v1612
        %1619 = vrot.lane.b32.xlu0 %v1577, 127
        %v1620 = vpop.permute.xlu0 %1619
        %1621 = vrot.lane.b32.xlu0 %v1578, 127
        %v1622 = vpop.permute.xlu0 %1621
        %v1625 = vadd.f32 %v1563, %v1620
        %v1626 = vadd.f32 %v1564, %v1622
        %1629 = vrot.lane.b32.xlu0 %v1625, 126
        %v1630 = vpop.permute.xlu0 %1629
        %1631 = vrot.lane.b32.xlu0 %v1626, 126
        %v1632 = vpop.permute.xlu0 %1631
        %v1635 = vadd.f32 %v1615, %v1630
        %v1636 = vadd.f32 %v1616, %v1632
        %v1637 = vxor.u32 %v1635, 2147483648
        %v1638 = vxor.u32 %v1636, 2147483648
        %v1639 = vmul.f32 %v1637, 1.442695
        %v1640 = vpow.pop %v1639
        %v1641 = vmul.f32 %v1638, 1.442695
        %v1642 = vpow.pop %v1641
        %v1643 = vadd.f32 %v1640, 1.0
        %v1644 = vadd.f32 %v1642, 1.0
        %v1645 = vrcp.pop %v1643
        %v1646 = vmul.f32 1.0, %v1645
        %v1647 = vrcp.pop %v1644
        %v1648 = vmul.f32 1.0, %v1647
        %v1649 = vlaneseq
        %vm1650 = vcmp.ge.s32.totalorder %v1649, 0
        %vm1651 = vcmp.lt.s32.totalorder %v1649, 16
        %vm1652 = vmand %vm1650, %vm1651
        %1653 = vst.msk [vmem:[#allocation3] sm:$0x1] %vm1652, %v1646
        %v1656 = vunpack.c.l.s4 1966171168
        %v1657 = vunpack.c.0.s8 %v1656
        %v1658 = vlaneseq
        %v1659 = vshrl.u32 %v1658, 7
        %v1660 = vsub.s32 %v1657, %v1659
        %v1661 = vrot.slane %v1646, %v1660
        %v1662 = vcombine.high %v1661, %v1661
        %v1664 = vunpack.c.l.s4 1966171168
        %v1665 = vunpack.c.0.s8 %v1664
        %v1666 = vlaneseq
        %v1667 = vshrl.u32 %v1666, 7
        %v1668 = vsub.s32 %v1665, %v1667
        %v1669 = vrot.slane %v1661, %v1668
        %v1671 = vunpack.c.l.s4 1966171168
        %v1672 = vunpack.c.0.s8 %v1671
        %v1673 = vlaneseq
        %v1674 = vshrl.u32 %v1673, 7
        %v1675 = vsub.s32 %v1672, %v1674
        %v1676 = vrot.slane %v1662, %v1675
        %1677 = vrot.lane.b32.xlu0 %v1676, 16
        %v1678 = vpop.permute.xlu0 %1677
        %vm1680 = vcmp.ge.s32.totalorder %v1649, 16
        %vm1681 = vcmp.lt.s32.totalorder %v1649, 32
        %vm1682 = vmand %vm1680, %vm1681
        %1683 = vst.msk [vmem:[#allocation3] sm:$0x1] %vm1682, %v1678
        %v1684 = vcombine.high %v1669, %v1669
        %1685 = vrot.lane.b32.xlu0 %v1684, 32
        %v1686 = vpop.permute.xlu0 %1685
        %vm1688 = vcmp.ge.s32.totalorder %v1649, 32
        %vm1689 = vcmp.lt.s32.totalorder %v1649, 48
        %vm1690 = vmand %vm1688, %vm1689
        %1691 = vst.msk [vmem:[#allocation3] sm:$0x1] %vm1690, %v1686
        %v1692 = vcombine.high %v1676, %v1676
        %1693 = vrot.lane.b32.xlu0 %v1692, 48
        %v1694 = vpop.permute.xlu0 %1693
        %vm1696 = vcmp.ge.s32.totalorder %v1649, 48
        %vm1697 = vcmp.lt.s32.totalorder %v1649, 64
        %vm1698 = vmand %vm1696, %vm1697
        %1699 = vst.msk [vmem:[#allocation3] sm:$0x1] %vm1698, %v1694
        %v1700 = vcombine.high %v1646, %v1646
        %v1702 = vunpack.c.l.s4 1966171168
        %v1703 = vunpack.c.0.s8 %v1702
        %v1704 = vlaneseq
        %v1705 = vshrl.u32 %v1704, 7
        %v1706 = vsub.s32 %v1703, %v1705
        %v1707 = vrot.slane %v1700, %v1706
        %v1709 = vunpack.c.l.s4 1966171168
        %v1710 = vunpack.c.0.s8 %v1709
        %v1711 = vlaneseq
        %v1712 = vshrl.u32 %v1711, 7
        %v1713 = vsub.s32 %v1710, %v1712
        %v1714 = vrot.slane %v1707, %v1713
        %1715 = vrot.lane.b32.xlu0 %v1714, 64
        %v1716 = vpop.permute.xlu0 %1715
        %vm1718 = vcmp.ge.s32.totalorder %v1649, 64
        %vm1719 = vcmp.lt.s32.totalorder %v1649, 80
        %vm1720 = vmand %vm1718, %vm1719
        %1721 = vst.msk [vmem:[#allocation3] sm:$0x1] %vm1720, %v1716
        %v1722 = vcombine.high %v1707, %v1707
        %v1724 = vunpack.c.l.s4 1966171168
        %v1725 = vunpack.c.0.s8 %v1724
        %v1726 = vlaneseq
        %v1727 = vshrl.u32 %v1726, 7
        %v1728 = vsub.s32 %v1725, %v1727
        %v1729 = vrot.slane %v1722, %v1728
        %1730 = vrot.lane.b32.xlu0 %v1729, 80
        %v1731 = vpop.permute.xlu0 %1730
        %vm1733 = vcmp.ge.s32.totalorder %v1649, 80
        %vm1734 = vcmp.lt.s32.totalorder %v1649, 96
        %vm1735 = vmand %vm1733, %vm1734
        %1736 = vst.msk [vmem:[#allocation3] sm:$0x1] %vm1735, %v1731
        %v1737 = vcombine.high %v1714, %v1714
        %1738 = vrot.lane.b32.xlu0 %v1737, 96
        %v1739 = vpop.permute.xlu0 %1738
        %vm1741 = vcmp.ge.s32.totalorder %v1649, 96
        %vm1742 = vcmp.lt.s32.totalorder %v1649, 112
        %vm1743 = vmand %vm1741, %vm1742
        %1744 = vst.msk [vmem:[#allocation3] sm:$0x1] %vm1743, %v1739
        %v1745 = vcombine.high %v1729, %v1729
        %1746 = vrot.lane.b32.xlu0 %v1745, 112
        %v1747 = vpop.permute.xlu0 %1746
        %vm1749 = vcmp.ge.s32.totalorder %v1649, 112
        %vm1750 = vcmp.lt.s32.totalorder %v1649, 128
        %vm1751 = vmand %vm1749, %vm1750
        %1752 = vst.msk [vmem:[#allocation3] sm:$0x1] %vm1751, %v1747
        %1753 = vst.msk [vmem:[#allocation3 + $0x1] sm:$0x1] %vm1652, %v1648
        %v1756 = vunpack.c.l.s4 1966171168
        %v1757 = vunpack.c.0.s8 %v1756
        %v1758 = vlaneseq
        %v1759 = vshrl.u32 %v1758, 7
        %v1760 = vsub.s32 %v1757, %v1759
        %v1761 = vrot.slane %v1648, %v1760
        %v1762 = vcombine.high %v1761, %v1761
        %v1764 = vunpack.c.l.s4 1966171168
        %v1765 = vunpack.c.0.s8 %v1764
        %v1766 = vlaneseq
        %v1767 = vshrl.u32 %v1766, 7
        %v1768 = vsub.s32 %v1765, %v1767
        %v1769 = vrot.slane %v1761, %v1768
        %v1771 = vunpack.c.l.s4 1966171168
        %v1772 = vunpack.c.0.s8 %v1771
        %v1773 = vlaneseq
        %v1774 = vshrl.u32 %v1773, 7
        %v1775 = vsub.s32 %v1772, %v1774
        %v1776 = vrot.slane %v1762, %v1775
        %1777 = vrot.lane.b32.xlu0 %v1776, 16
        %v1778 = vpop.permute.xlu0 %1777
        %1780 = vst.msk [vmem:[#allocation3 + $0x1] sm:$0x1] %vm1682, %v1778
        %v1781 = vcombine.high %v1769, %v1769
        %1782 = vrot.lane.b32.xlu0 %v1781, 32
        %v1783 = vpop.permute.xlu0 %1782
        %1785 = vst.msk [vmem:[#allocation3 + $0x1] sm:$0x1] %vm1690, %v1783
        %v1786 = vcombine.high %v1776, %v1776
        %1787 = vrot.lane.b32.xlu0 %v1786, 48
        %v1788 = vpop.permute.xlu0 %1787
        %1790 = vst.msk [vmem:[#allocation3 + $0x1] sm:$0x1] %vm1698, %v1788
        %v1791 = vcombine.high %v1648, %v1648
        %v1793 = vunpack.c.l.s4 1966171168
        %v1794 = vunpack.c.0.s8 %v1793
        %v1795 = vlaneseq
        %v1796 = vshrl.u32 %v1795, 7
        %v1797 = vsub.s32 %v1794, %v1796
        %v1798 = vrot.slane %v1791, %v1797
        %v1800 = vunpack.c.l.s4 1966171168
        %v1801 = vunpack.c.0.s8 %v1800
        %v1802 = vlaneseq
        %v1803 = vshrl.u32 %v1802, 7
        %v1804 = vsub.s32 %v1801, %v1803
        %v1805 = vrot.slane %v1798, %v1804
        %1806 = vrot.lane.b32.xlu0 %v1805, 64
        %v1807 = vpop.permute.xlu0 %1806
        %1809 = vst.msk [vmem:[#allocation3 + $0x1] sm:$0x1] %vm1720, %v1807
        %v1810 = vcombine.high %v1798, %v1798
        %v1812 = vunpack.c.l.s4 1966171168
        %v1813 = vunpack.c.0.s8 %v1812
        %v1814 = vlaneseq
        %v1815 = vshrl.u32 %v1814, 7
        %v1816 = vsub.s32 %v1813, %v1815
        %v1817 = vrot.slane %v1810, %v1816
        %1818 = vrot.lane.b32.xlu0 %v1817, 80
        %v1819 = vpop.permute.xlu0 %1818
        %1821 = vst.msk [vmem:[#allocation3 + $0x1] sm:$0x1] %vm1735, %v1819
        %v1822 = vcombine.high %v1805, %v1805
        %1823 = vrot.lane.b32.xlu0 %v1822, 96
        %v1824 = vpop.permute.xlu0 %1823
        %1826 = vst.msk [vmem:[#allocation3 + $0x1] sm:$0x1] %vm1743, %v1824
        %v1827 = vcombine.high %v1817, %v1817
        %1828 = vrot.lane.b32.xlu0 %v1827, 112
        %v1829 = vpop.permute.xlu0 %1828
        %1831 = vst.msk [vmem:[#allocation3 + $0x1] sm:$0x1] %vm1751, %v1829
        %v1832 = vld [vmem:[#allocation3] sm:$0x3]
        %v1833 = vld [vmem:[%s152] sm:$0xff]
        %v1835 = vlaneseq
        %v1836 = vshrl.u32 %v1835, 7
        %v1837 = vsub.s32 0, %v1836
        %v1838 = vrot.slane %v1832, %v1837
        %v1839 = vlaneseq
        %v1840 = vshrl.u32 %v1839, 7
        %v1841 = vsub.s32 1, %v1840
        %v1842 = vrot.slane %v1832, %v1841
        %v1843 = vcombine.low %v1838, %v1842
        %v1845 = vmul.f32 %v1833, %v1843
        %1846 = vst [vmem:[%s157] sm:$0xff] %v1845
        %p1847 = scmp.lt.s32.totalorder %s14, 1
        %s1848 = scalar_select %p1847, %s14, 1
        %s1849 = smul.addr %s1848, 2
        %s1850 = smul.addr %s1849, 4
        %s1851 = scalar_lea.vmem %s2, %s1850
        // Predicated region
        $region33: #{spatial_attention.1} parent=27 // pred_check
          %p1852 = pneg %p79
        $region34: #{spatial_attention.1} parent=27 // pred_check_branch
          %1854 = sbr.rel (%p1852) target = $region36
        $region35: #{spatial_attention.1} parent=27 // pred_region
          _
        $region36: #{spatial_attention.1} parent=27 // pred_fallthru
          _
      $region28: #{spatial_attention.1} parent=5 // pred_fallthru
        _
      %p1855 = scmp.le.s32.totalorder 2, %s9
      // Predicated region
      $region37: #{spatial_attention.1} parent=5 // pred_check
        %p1856 = pneg %p1855
      $region38: #{spatial_attention.1} parent=5 // pred_check_branch
        %1858 = sbr.rel (%p1856) target = $region40
      $region39: #{spatial_attention.1} parent=5 // pred_region
        %s1859 = ssub.s32 %s9, 2
        // Predicated region
        $region41: #{spatial_attention.1} parent=39 // pred_check
          %p1860 = pneg %p85
        $region42: #{spatial_attention.1} parent=39 // pred_check_branch
          %1862 = sbr.rel (%p1860) target = $region44
        $region43: #{spatial_attention.1} parent=39 // pred_region
          %p1863 = scmp.lt.s32.totalorder %s15, 1
          %s1864 = scalar_select %p1863, %s15, 1
          %s1865 = smul.addr %s1864, 2
          %s1866 = smul.addr %s1865, 4
          %s1867 = scalar_lea.vmem %s2, %s1866
        $region44: #{spatial_attention.1} parent=39 // pred_fallthru
          _
      $region40: #{spatial_attention.1} parent=5 // pred_fallthru
        _
    $region6: #{spatial_attention.1} parent=1 // loop_footer
      %s13 = sadd.s32 1, %s9
    $region7: #{spatial_attention.1} parent=1 // loop_footer_branch
      %8 = sbr.rel target = $region3
    $region8: #{spatial_attention.1} parent=1 // loop_exit
      _
    %1868 = vsyncpa [#allocation5], 1
    %s1869 = scalar_lea.sflag [#allocation5], 1
    %1870 = vsyncpa %s1869, 1

</llo_original>
